<compile_context>
chip_gen: v6e
topology: v6e:2x2x1
jax: 0.10.0
libtpu: 0.0.40
codegen_flags: <defaults>
</compile_context>

<pallas_src>
import functools

import jax
import jax.numpy as jnp
from jax.experimental import pallas as pl
from jax.experimental.pallas import tpu as pltpu


def _round_up(x, m):
    return (x + m - 1) // m * m


def _block_kernel(h, w, cpg, groups, has_ss, *refs):
    """One grid step == one batch element.

    refs (has_ss=True):  x, w_taps, bias, gamma, beta, scale, shift, out
    refs (has_ss=False): x, w_taps, bias, gamma, beta, out

    x_ref:  (H+2, W+2, Cin)    halo-padded NHWC input tile (matmul dtype)
    w_ref:  (9, Cin, Cout_pad) standardized conv weight per tap (matmul dtype)
    b/g/be: (1, Cout_pad)      conv bias / GN weight / GN bias (f32)
    sc/sh:  (1, Cout_pad)      optional FiLM scale / shift (f32)
    o_ref:  (H*W, Cout_pad)    output (lane-dense: Cout_pad % 128 == 0)
    """
    if has_ss:
        x_ref, w_ref, b_ref, g_ref, be_ref, sc_ref, sh_ref, o_ref = refs
    else:
        x_ref, w_ref, b_ref, g_ref, be_ref, o_ref = refs
        sc_ref = sh_ref = None

    hw = h * w
    cin = x_ref.shape[-1]
    cout_pad = o_ref.shape[-1]
    mm_dtype = w_ref.dtype

    # ---- 3x3 conv: 9 shifted-tap matmuls, f32 accumulation (im2col in VMEM) --
    acc = jnp.zeros((hw, cout_pad), jnp.float32)
    for t in range(9):
        kh, kw = t // 3, t % 3
        # Static window load + flatten; H*W is a multiple of 8 so the
        # (h, w, cin) -> (h*w, cin) collapse is tile-aligned.
        xt = x_ref[kh:kh + h, kw:kw + w, :].reshape(hw, cin)
        acc = acc + jnp.dot(xt.astype(mm_dtype), w_ref[t],
                            preferred_element_type=jnp.float32)
    y = acc + b_ref[...]

    # ---- GroupNorm: centered two-pass (biased variance, eps=1e-5) ----------
    # Padded channels are all-zero and not covered by any real group's mask,
    # so their mean/var stay zero and they remain exactly zero at the output.
    denom = jnp.float32(hw * cpg)
    ch_idx = jax.lax.broadcasted_iota(jnp.int32, (1, cout_pad), 1)

    ch_sum = jnp.sum(y, axis=0, keepdims=True)                     # (1, C)
    g_mean = jnp.zeros((1, cout_pad), jnp.float32)
    for g in range(groups):
        m = (ch_idx >= g * cpg) & (ch_idx < (g + 1) * cpg)
        s = jnp.sum(jnp.where(m, ch_sum, 0.0))
        g_mean = g_mean + jnp.where(m, s / denom, 0.0)

    y = y - g_mean
    ch_ss = jnp.sum(y * y, axis=0, keepdims=True)                  # (1, C)
    g_var = jnp.zeros((1, cout_pad), jnp.float32)
    for g in range(groups):
        m = (ch_idx >= g * cpg) & (ch_idx < (g + 1) * cpg)
        s = jnp.sum(jnp.where(m, ch_ss, 0.0))
        g_var = g_var + jnp.where(m, s / denom, 0.0)

    # ---- fold GN affine + optional FiLM into one per-channel (mul, add) ----
    mul = jax.lax.rsqrt(g_var + 1e-5) * g_ref[...]                 # (1, C)
    add = be_ref[...]                                              # (1, C)
    if has_ss:
        s1 = sc_ref[...] + 1.0
        mul = mul * s1
        add = add * s1 + sh_ref[...]

    y = y * mul + add          # single fused pass over the (HW, C) tensor
    y = y * jax.nn.sigmoid(y)  # SiLU (EUP)
    o_ref[...] = y.astype(o_ref.dtype)


def block_forward(x, params, scale_shift=None, groups=4,
                  matmul_dtype=jnp.bfloat16):
    """x: (N, Cin, H, W) NCHW float32.  Returns (N, Cout, H, W) NCHW."""
    w, b, gamma, beta = params                     # w: (Cout, Cin, 3, 3)
    N, Cin, H, W = x.shape
    Cout = w.shape[0]
    assert Cout % groups == 0
    cpg = Cout // groups
    HW = H * W
    assert HW % 8 == 0, "H*W must be a multiple of 8 (sublane tiling)"
    Cout_pad = _round_up(Cout, 128)                # lane-dense output / MXU N
    has_ss = scale_shift is not None

    # --- weight standardization, once per call (tiny op, plain XLA) ---------
    wm = jnp.mean(w, axis=(1, 2, 3), keepdims=True)
    wv = jnp.var(w, axis=(1, 2, 3), keepdims=True, ddof=1)   # torch.var: unbiased
    wn = (w - wm) * jax.lax.rsqrt(wv + 1e-5)                 # eps for f32 inputs
    # (Cout, Cin, 3, 3) -> (9, Cin, Cout_pad), tap index = kh*3 + kw
    w_taps = jnp.transpose(wn, (2, 3, 1, 0)).reshape(9, Cin, Cout)
    w_taps = jnp.pad(w_taps, ((0, 0), (0, 0), (0, Cout_pad - Cout)))
    w_taps = w_taps.astype(matmul_dtype)

    # --- raw NHWC input with a 1-pixel spatial halo (no im2col in HBM) ------
    x_pad = jnp.pad(jnp.transpose(x, (0, 2, 3, 1)).astype(matmul_dtype),
                    ((0, 0), (1, 1), (1, 1), (0, 0)))

    def pad_c(v):
        return jnp.pad(v.reshape(1, Cout).astype(jnp.float32),
                       ((0, 0), (0, Cout_pad - Cout)))

    args = [x_pad, w_taps, pad_c(b), pad_c(gamma), pad_c(beta)]
    in_specs = [
        # padded input tile, leading batch dim squeezed
        pl.BlockSpec((pl.Squeezed(), H + 2, W + 2, Cin),
                     lambda n: (n, 0, 0, 0)),
        # standardized weight taps (resident, constant index map)
        pl.BlockSpec((9, Cin, Cout_pad), lambda n: (0, 0, 0)),
        pl.BlockSpec((1, Cout_pad), lambda n: (0, 0)),        # conv bias
        pl.BlockSpec((1, Cout_pad), lambda n: (0, 0)),        # GN gamma
        pl.BlockSpec((1, Cout_pad), lambda n: (0, 0)),        # GN beta
    ]
    if has_ss:
        s, t = scale_shift                         # (N, Cout, 1, 1) PyTorch-style
        sc = jnp.pad(s.reshape(N, 1, Cout).astype(jnp.float32),
                     ((0, 0), (0, 0), (0, Cout_pad - Cout)))
        sh = jnp.pad(t.reshape(N, 1, Cout).astype(jnp.float32),
                     ((0, 0), (0, 0), (0, Cout_pad - Cout)))
        args += [sc, sh]
        in_specs += [
            pl.BlockSpec((pl.Squeezed(), 1, Cout_pad), lambda n: (n, 0, 0)),
            pl.BlockSpec((pl.Squeezed(), 1, Cout_pad), lambda n: (n, 0, 0)),
        ]

    kernel = functools.partial(_block_kernel, H, W, cpg, groups, has_ss)

    out = pl.pallas_call(
        kernel,
        out_shape=jax.ShapeDtypeStruct((N, HW, Cout_pad), jnp.float32),
        grid_spec=pltpu.PrefetchScalarGridSpec(
            num_scalar_prefetch=0,
            grid=(N,),
            in_specs=in_specs,
            out_specs=pl.BlockSpec((pl.Squeezed(), HW, Cout_pad),
                                   lambda n: (n, 0, 0)),
        ),
        compiler_params=pltpu.CompilerParams(
            dimension_semantics=("parallel",),
            vmem_limit_bytes=32 * 1024 * 1024),      # safe on v5e/v6e/v7x
    )(*args)

    # glue: strip channel padding, back to NCHW
    out = jnp.transpose(out.reshape(N, H, W, Cout_pad), (0, 3, 1, 2))
    return out[:, :Cout].astype(x.dtype)


def block_reference(x, params, scale_shift=None, groups=4):
    """Pure-JAX reference (matches the PyTorch module semantics, all f32)."""
    w, b, gamma, beta = params
    N, Cin, H, W = x.shape
    Cout = w.shape[0]
    wm = jnp.mean(w, axis=(1, 2, 3), keepdims=True)
    wv = jnp.var(w, axis=(1, 2, 3), keepdims=True, ddof=1)
    wn = (w - wm) * jax.lax.rsqrt(wv + 1e-5)
    y = jax.lax.conv_general_dilated(
        x, wn, window_strides=(1, 1), padding=((1, 1), (1, 1)),
        dimension_numbers=("NCHW", "OIHW", "NCHW"))
    y = y + b[None, :, None, None]
    yg = y.reshape(N, groups, Cout // groups, H, W)
    m = jnp.mean(yg, axis=(2, 3, 4), keepdims=True)
    v = jnp.var(yg, axis=(2, 3, 4), keepdims=True)
    y = ((yg - m) * jax.lax.rsqrt(v + 1e-5)).reshape(N, Cout, H, W)
    y = y * gamma[None, :, None, None] + beta[None, :, None, None]
    if scale_shift is not None:
        s, t = scale_shift
        y = y * (s + 1.0) + t
    return y * jax.nn.sigmoid(y)


if __name__ == "__main__":
    N, Cin, Cout, H, W, groups = 2, 4, 8, 16, 16, 4
    key = jax.random.PRNGKey(0)
    k1, k2, k3, k4, k5, k6, k7 = jax.random.split(key, 7)

    x = jax.random.normal(k1, (N, Cin, H, W), jnp.float32)
    w = 0.1 * jax.random.normal(k2, (Cout, Cin, 3, 3), jnp.float32)
    b = 0.1 * jax.random.normal(k3, (Cout,), jnp.float32)
    gamma = 1.0 + 0.1 * jax.random.normal(k4, (Cout,), jnp.float32)
    beta = 0.1 * jax.random.normal(k5, (Cout,), jnp.float32)
    params = (w, b, gamma, beta)

    scale = 0.2 * jax.random.normal(k6, (N, Cout, 1, 1), jnp.float32)
    shift = 0.2 * jax.random.normal(k7, (N, Cout, 1, 1), jnp.float32)

    # case 1: scale_shift=None, f32 matmul path (tight numerical check)
    out0 = block_forward(x, params, None, groups, matmul_dtype=jnp.float32)
    jax.block_until_ready(out0)
    ref0 = block_reference(x, params, None, groups)
    assert out0.shape == (N, Cout, H, W)
    err0 = float(jnp.max(jnp.abs(out0 - ref0)))
    assert err0 < 1e-3, f"scale_shift=None (f32) max abs err {err0}"

    # case 2: with scale_shift, f32 matmul path (tight numerical check)
    out1 = block_forward(x, params, (scale, shift), groups,
                         matmul_dtype=jnp.float32)
    jax.block_until_ready(out1)
    ref1 = block_reference(x, params, (scale, shift), groups)
    err1 = float(jnp.max(jnp.abs(out1 - ref1)))
    assert err1 < 1e-3, f"scale_shift (f32) max abs err {err1}"

    # case 3: default bf16 matmul operands (perf path) — loose check, since the
    # only deviation vs. the f32 reference is bf16 rounding of the conv operands.
    out2 = block_forward(x, params, (scale, shift), groups)
    jax.block_until_ready(out2)
    err2 = float(jnp.max(jnp.abs(out2 - ref1)))
    assert err2 < 5e-2, f"scale_shift (bf16) max abs err {err2}"

    print("KERNEL_OK")
</pallas_src>

<mosaic_0001>
module attributes {stable_mosaic.version = 11 : i64} {
  func.func @_block_kernel(%arg0: i32, %arg1: memref<1x18x18x4xf32, #tpu.memory_space<vmem>>, %arg2: memref<9x4x128xf32, #tpu.memory_space<vmem>>, %arg3: memref<1x128xf32, #tpu.memory_space<vmem>>, %arg4: memref<1x128xf32, #tpu.memory_space<vmem>>, %arg5: memref<1x128xf32, #tpu.memory_space<vmem>>, %arg6: memref<1x256x128xf32, #tpu.memory_space<vmem>>) attributes {dimension_semantics = [#tpu.dimension_semantics<parallel>], iteration_bounds = array<i64: 2>, scalar_prefetch = 0 : i64, scratch_operands = 0 : i64, tpu.core_type = #tpu.core_type<tc>, window_params = [{transform_indices = @transform_0, window_bounds = array<i64: 1, 18, 18, 4>}, {pipeline_mode = #tpu.pipeline_mode<synchronous>, transform_indices = @transform_1, window_bounds = array<i64: 9, 4, 128>}, {pipeline_mode = #tpu.pipeline_mode<synchronous>, transform_indices = @transform_2, window_bounds = array<i64: 1, 128>}, {pipeline_mode = #tpu.pipeline_mode<synchronous>, transform_indices = @transform_3, window_bounds = array<i64: 1, 128>}, {pipeline_mode = #tpu.pipeline_mode<synchronous>, transform_indices = @transform_4, window_bounds = array<i64: 1, 128>}, {transform_indices = @transform_5, window_bounds = array<i64: 1, 256, 128>}]} {
    %cst = arith.constant 0.000000e+00 : f32
    %0 = vector.broadcast %cst : f32 to vector<256x128xf32>
    %c0 = arith.constant 0 : index
    %c0_0 = arith.constant 0 : index
    %c0_1 = arith.constant 0 : index
    %c0_2 = arith.constant 0 : index
    %1 = vector.load %arg1[%c0, %c0_0, %c0_1, %c0_2] : memref<1x18x18x4xf32, #tpu.memory_space<vmem>>, vector<1x16x16x4xf32>
    %2 = vector.shape_cast %1 : vector<1x16x16x4xf32> to vector<16x16x4xf32>
    %3 = vector.shape_cast %2 : vector<16x16x4xf32> to vector<256x4xf32>
    %c0_3 = arith.constant 0 : index
    %c0_4 = arith.constant 0 : index
    %c0_5 = arith.constant 0 : index
    %4 = vector.load %arg2[%c0_3, %c0_4, %c0_5] : memref<9x4x128xf32, #tpu.memory_space<vmem>>, vector<1x4x128xf32>
    %5 = vector.shape_cast %4 : vector<1x4x128xf32> to vector<4x128xf32>
    %cst_6 = arith.constant dense<0.000000e+00> : vector<256x128xf32>
    %6 = tpu.matmul %3, %5, %cst_6 {dimension_numbers = #tpu.dot_dimension_numbers<[1], [0], [0], [1], [0, 0, 1, 1], [], []>} : vector<256x4xf32>, vector<4x128xf32>, vector<256x128xf32> -> vector<256x128xf32>
    %7 = arith.addf %0, %6 : vector<256x128xf32>
    %c0_7 = arith.constant 0 : index
    %c0_8 = arith.constant 0 : index
    %c1 = arith.constant 1 : index
    %c0_9 = arith.constant 0 : index
    %8 = vector.load %arg1[%c0_7, %c0_8, %c1, %c0_9] : memref<1x18x18x4xf32, #tpu.memory_space<vmem>>, vector<1x16x16x4xf32>
    %9 = vector.shape_cast %8 : vector<1x16x16x4xf32> to vector<16x16x4xf32>
    %10 = vector.shape_cast %9 : vector<16x16x4xf32> to vector<256x4xf32>
    %c1_10 = arith.constant 1 : index
    %c0_11 = arith.constant 0 : index
    %c0_12 = arith.constant 0 : index
    %11 = vector.load %arg2[%c1_10, %c0_11, %c0_12] : memref<9x4x128xf32, #tpu.memory_space<vmem>>, vector<1x4x128xf32>
    %12 = vector.shape_cast %11 : vector<1x4x128xf32> to vector<4x128xf32>
    %cst_13 = arith.constant dense<0.000000e+00> : vector<256x128xf32>
    %13 = tpu.matmul %10, %12, %cst_13 {dimension_numbers = #tpu.dot_dimension_numbers<[1], [0], [0], [1], [0, 0, 1, 1], [], []>} : vector<256x4xf32>, vector<4x128xf32>, vector<256x128xf32> -> vector<256x128xf32>
    %14 = arith.addf %7, %13 : vector<256x128xf32>
    %c0_14 = arith.constant 0 : index
    %c0_15 = arith.constant 0 : index
    %c2 = arith.constant 2 : index
    %c0_16 = arith.constant 0 : index
    %15 = vector.load %arg1[%c0_14, %c0_15, %c2, %c0_16] : memref<1x18x18x4xf32, #tpu.memory_space<vmem>>, vector<1x16x16x4xf32>
    %16 = vector.shape_cast %15 : vector<1x16x16x4xf32> to vector<16x16x4xf32>
    %17 = vector.shape_cast %16 : vector<16x16x4xf32> to vector<256x4xf32>
    %c2_17 = arith.constant 2 : index
    %c0_18 = arith.constant 0 : index
    %c0_19 = arith.constant 0 : index
    %18 = vector.load %arg2[%c2_17, %c0_18, %c0_19] : memref<9x4x128xf32, #tpu.memory_space<vmem>>, vector<1x4x128xf32>
    %19 = vector.shape_cast %18 : vector<1x4x128xf32> to vector<4x128xf32>
    %cst_20 = arith.constant dense<0.000000e+00> : vector<256x128xf32>
    %20 = tpu.matmul %17, %19, %cst_20 {dimension_numbers = #tpu.dot_dimension_numbers<[1], [0], [0], [1], [0, 0, 1, 1], [], []>} : vector<256x4xf32>, vector<4x128xf32>, vector<256x128xf32> -> vector<256x128xf32>
    %21 = arith.addf %14, %20 : vector<256x128xf32>
    %c0_21 = arith.constant 0 : index
    %c1_22 = arith.constant 1 : index
    %c0_23 = arith.constant 0 : index
    %c0_24 = arith.constant 0 : index
    %22 = vector.load %arg1[%c0_21, %c1_22, %c0_23, %c0_24] : memref<1x18x18x4xf32, #tpu.memory_space<vmem>>, vector<1x16x16x4xf32>
    %23 = vector.shape_cast %22 : vector<1x16x16x4xf32> to vector<16x16x4xf32>
    %24 = vector.shape_cast %23 : vector<16x16x4xf32> to vector<256x4xf32>
    %c3 = arith.constant 3 : index
    %c0_25 = arith.constant 0 : index
    %c0_26 = arith.constant 0 : index
    %25 = vector.load %arg2[%c3, %c0_25, %c0_26] : memref<9x4x128xf32, #tpu.memory_space<vmem>>, vector<1x4x128xf32>
    %26 = vector.shape_cast %25 : vector<1x4x128xf32> to vector<4x128xf32>
    %cst_27 = arith.constant dense<0.000000e+00> : vector<256x128xf32>
    %27 = tpu.matmul %24, %26, %cst_27 {dimension_numbers = #tpu.dot_dimension_numbers<[1], [0], [0], [1], [0, 0, 1, 1], [], []>} : vector<256x4xf32>, vector<4x128xf32>, vector<256x128xf32> -> vector<256x128xf32>
    %28 = arith.addf %21, %27 : vector<256x128xf32>
    %c0_28 = arith.constant 0 : index
    %c1_29 = arith.constant 1 : index
    %c1_30 = arith.constant 1 : index
    %c0_31 = arith.constant 0 : index
    %29 = vector.load %arg1[%c0_28, %c1_29, %c1_30, %c0_31] : memref<1x18x18x4xf32, #tpu.memory_space<vmem>>, vector<1x16x16x4xf32>
    %30 = vector.shape_cast %29 : vector<1x16x16x4xf32> to vector<16x16x4xf32>
    %31 = vector.shape_cast %30 : vector<16x16x4xf32> to vector<256x4xf32>
    %c4 = arith.constant 4 : index
    %c0_32 = arith.constant 0 : index
    %c0_33 = arith.constant 0 : index
    %32 = vector.load %arg2[%c4, %c0_32, %c0_33] : memref<9x4x128xf32, #tpu.memory_space<vmem>>, vector<1x4x128xf32>
    %33 = vector.shape_cast %32 : vector<1x4x128xf32> to vector<4x128xf32>
    %cst_34 = arith.constant dense<0.000000e+00> : vector<256x128xf32>
    %34 = tpu.matmul %31, %33, %cst_34 {dimension_numbers = #tpu.dot_dimension_numbers<[1], [0], [0], [1], [0, 0, 1, 1], [], []>} : vector<256x4xf32>, vector<4x128xf32>, vector<256x128xf32> -> vector<256x128xf32>
    %35 = arith.addf %28, %34 : vector<256x128xf32>
    %c0_35 = arith.constant 0 : index
    %c1_36 = arith.constant 1 : index
    %c2_37 = arith.constant 2 : index
    %c0_38 = arith.constant 0 : index
    %36 = vector.load %arg1[%c0_35, %c1_36, %c2_37, %c0_38] : memref<1x18x18x4xf32, #tpu.memory_space<vmem>>, vector<1x16x16x4xf32>
    %37 = vector.shape_cast %36 : vector<1x16x16x4xf32> to vector<16x16x4xf32>
    %38 = vector.shape_cast %37 : vector<16x16x4xf32> to vector<256x4xf32>
    %c5 = arith.constant 5 : index
    %c0_39 = arith.constant 0 : index
    %c0_40 = arith.constant 0 : index
    %39 = vector.load %arg2[%c5, %c0_39, %c0_40] : memref<9x4x128xf32, #tpu.memory_space<vmem>>, vector<1x4x128xf32>
    %40 = vector.shape_cast %39 : vector<1x4x128xf32> to vector<4x128xf32>
    %cst_41 = arith.constant dense<0.000000e+00> : vector<256x128xf32>
    %41 = tpu.matmul %38, %40, %cst_41 {dimension_numbers = #tpu.dot_dimension_numbers<[1], [0], [0], [1], [0, 0, 1, 1], [], []>} : vector<256x4xf32>, vector<4x128xf32>, vector<256x128xf32> -> vector<256x128xf32>
    %42 = arith.addf %35, %41 : vector<256x128xf32>
    %c0_42 = arith.constant 0 : index
    %c2_43 = arith.constant 2 : index
    %c0_44 = arith.constant 0 : index
    %c0_45 = arith.constant 0 : index
    %43 = vector.load %arg1[%c0_42, %c2_43, %c0_44, %c0_45] : memref<1x18x18x4xf32, #tpu.memory_space<vmem>>, vector<1x16x16x4xf32>
    %44 = vector.shape_cast %43 : vector<1x16x16x4xf32> to vector<16x16x4xf32>
    %45 = vector.shape_cast %44 : vector<16x16x4xf32> to vector<256x4xf32>
    %c6 = arith.constant 6 : index
    %c0_46 = arith.constant 0 : index
    %c0_47 = arith.constant 0 : index
    %46 = vector.load %arg2[%c6, %c0_46, %c0_47] : memref<9x4x128xf32, #tpu.memory_space<vmem>>, vector<1x4x128xf32>
    %47 = vector.shape_cast %46 : vector<1x4x128xf32> to vector<4x128xf32>
    %cst_48 = arith.constant dense<0.000000e+00> : vector<256x128xf32>
    %48 = tpu.matmul %45, %47, %cst_48 {dimension_numbers = #tpu.dot_dimension_numbers<[1], [0], [0], [1], [0, 0, 1, 1], [], []>} : vector<256x4xf32>, vector<4x128xf32>, vector<256x128xf32> -> vector<256x128xf32>
    %49 = arith.addf %42, %48 : vector<256x128xf32>
    %c0_49 = arith.constant 0 : index
    %c2_50 = arith.constant 2 : index
    %c1_51 = arith.constant 1 : index
    %c0_52 = arith.constant 0 : index
    %50 = vector.load %arg1[%c0_49, %c2_50, %c1_51, %c0_52] : memref<1x18x18x4xf32, #tpu.memory_space<vmem>>, vector<1x16x16x4xf32>
    %51 = vector.shape_cast %50 : vector<1x16x16x4xf32> to vector<16x16x4xf32>
    %52 = vector.shape_cast %51 : vector<16x16x4xf32> to vector<256x4xf32>
    %c7 = arith.constant 7 : index
    %c0_53 = arith.constant 0 : index
    %c0_54 = arith.constant 0 : index
    %53 = vector.load %arg2[%c7, %c0_53, %c0_54] : memref<9x4x128xf32, #tpu.memory_space<vmem>>, vector<1x4x128xf32>
    %54 = vector.shape_cast %53 : vector<1x4x128xf32> to vector<4x128xf32>
    %cst_55 = arith.constant dense<0.000000e+00> : vector<256x128xf32>
    %55 = tpu.matmul %52, %54, %cst_55 {dimension_numbers = #tpu.dot_dimension_numbers<[1], [0], [0], [1], [0, 0, 1, 1], [], []>} : vector<256x4xf32>, vector<4x128xf32>, vector<256x128xf32> -> vector<256x128xf32>
    %56 = arith.addf %49, %55 : vector<256x128xf32>
    %c0_56 = arith.constant 0 : index
    %c2_57 = arith.constant 2 : index
    %c2_58 = arith.constant 2 : index
    %c0_59 = arith.constant 0 : index
    %57 = vector.load %arg1[%c0_56, %c2_57, %c2_58, %c0_59] : memref<1x18x18x4xf32, #tpu.memory_space<vmem>>, vector<1x16x16x4xf32>
    %58 = vector.shape_cast %57 : vector<1x16x16x4xf32> to vector<16x16x4xf32>
    %59 = vector.shape_cast %58 : vector<16x16x4xf32> to vector<256x4xf32>
    %c8 = arith.constant 8 : index
    %c0_60 = arith.constant 0 : index
    %c0_61 = arith.constant 0 : index
    %60 = vector.load %arg2[%c8, %c0_60, %c0_61] : memref<9x4x128xf32, #tpu.memory_space<vmem>>, vector<1x4x128xf32>
    %61 = vector.shape_cast %60 : vector<1x4x128xf32> to vector<4x128xf32>
    %cst_62 = arith.constant dense<0.000000e+00> : vector<256x128xf32>
    %62 = tpu.matmul %59, %61, %cst_62 {dimension_numbers = #tpu.dot_dimension_numbers<[1], [0], [0], [1], [0, 0, 1, 1], [], []>} : vector<256x4xf32>, vector<4x128xf32>, vector<256x128xf32> -> vector<256x128xf32>
    %63 = arith.addf %56, %62 : vector<256x128xf32>
    %c0_63 = arith.constant 0 : index
    %c0_64 = arith.constant 0 : index
    %64 = vector.load %arg3[%c0_63, %c0_64] : memref<1x128xf32, #tpu.memory_space<vmem>>, vector<1x128xf32>
    %65 = vector.broadcast %64 : vector<1x128xf32> to vector<256x128xf32>
    %66 = arith.addf %63, %65 : vector<256x128xf32>
    %67 = tpu.iota {dimensions = array<i32: 1>} : vector<1x128xi32>
    %cst_65 = arith.constant dense<0.000000e+00> : vector<128xf32>
    %68 = vector.multi_reduction <add>, %66, %cst_65 [0] : vector<256x128xf32> to vector<128xf32>
    %69 = vector.shape_cast %68 : vector<128xf32> to vector<1x128xf32>
    %cst_66 = arith.constant 0.000000e+00 : f32
    %70 = vector.broadcast %cst_66 : f32 to vector<1x128xf32>
    %c0_i32 = arith.constant 0 : i32
    %71 = vector.broadcast %c0_i32 : i32 to vector<1x128xi32>
    %72 = arith.cmpi sge, %67, %71 : vector<1x128xi32>
    %c2_i32 = arith.constant 2 : i32
    %73 = vector.broadcast %c2_i32 : i32 to vector<1x128xi32>
    %74 = arith.cmpi slt, %67, %73 : vector<1x128xi32>
    %75 = arith.andi %72, %74 : vector<1x128xi1>
    %cst_67 = arith.constant 0.000000e+00 : f32
    %76 = vector.broadcast %cst_67 : f32 to vector<1x128xf32>
    %77 = arith.select %75, %69, %76 : vector<1x128xi1>, vector<1x128xf32>
    %78 = vector.shape_cast %77 : vector<1x128xf32> to vector<1x1x128xf32>
    %cst_68 = arith.constant dense<0.000000e+00> : vector<1xf32>
    %79 = vector.multi_reduction <add>, %78, %cst_68 [1, 2] : vector<1x1x128xf32> to vector<1xf32>
    %80 = vector.shape_cast %79 : vector<1xf32> to vector<1x1x1xf32>
    %81 = vector.extract %80[0, 0, 0] : f32 from vector<1x1x1xf32>
    %cst_69 = arith.constant 5.120000e+02 : f32
    %82 = arith.divf %81, %cst_69 : f32
    %cst_70 = arith.constant 0.000000e+00 : f32
    %83 = vector.broadcast %82 : f32 to vector<1x128xf32>
    %84 = vector.broadcast %cst_70 : f32 to vector<1x128xf32>
    %85 = arith.select %75, %83, %84 : vector<1x128xi1>, vector<1x128xf32>
    %86 = arith.addf %70, %85 : vector<1x128xf32>
    %c2_i32_71 = arith.constant 2 : i32
    %87 = vector.broadcast %c2_i32_71 : i32 to vector<1x128xi32>
    %88 = arith.cmpi sge, %67, %87 : vector<1x128xi32>
    %c4_i32 = arith.constant 4 : i32
    %89 = vector.broadcast %c4_i32 : i32 to vector<1x128xi32>
    %90 = arith.cmpi slt, %67, %89 : vector<1x128xi32>
    %91 = arith.andi %88, %90 : vector<1x128xi1>
    %cst_72 = arith.constant 0.000000e+00 : f32
    %92 = vector.broadcast %cst_72 : f32 to vector<1x128xf32>
    %93 = arith.select %91, %69, %92 : vector<1x128xi1>, vector<1x128xf32>
    %94 = vector.shape_cast %93 : vector<1x128xf32> to vector<1x1x128xf32>
    %cst_73 = arith.constant dense<0.000000e+00> : vector<1xf32>
    %95 = vector.multi_reduction <add>, %94, %cst_73 [1, 2] : vector<1x1x128xf32> to vector<1xf32>
    %96 = vector.shape_cast %95 : vector<1xf32> to vector<1x1x1xf32>
    %97 = vector.extract %96[0, 0, 0] : f32 from vector<1x1x1xf32>
    %cst_74 = arith.constant 5.120000e+02 : f32
    %98 = arith.divf %97, %cst_74 : f32
    %cst_75 = arith.constant 0.000000e+00 : f32
    %99 = vector.broadcast %98 : f32 to vector<1x128xf32>
    %100 = vector.broadcast %cst_75 : f32 to vector<1x128xf32>
    %101 = arith.select %91, %99, %100 : vector<1x128xi1>, vector<1x128xf32>
    %102 = arith.addf %86, %101 : vector<1x128xf32>
    %c4_i32_76 = arith.constant 4 : i32
    %103 = vector.broadcast %c4_i32_76 : i32 to vector<1x128xi32>
    %104 = arith.cmpi sge, %67, %103 : vector<1x128xi32>
    %c6_i32 = arith.constant 6 : i32
    %105 = vector.broadcast %c6_i32 : i32 to vector<1x128xi32>
    %106 = arith.cmpi slt, %67, %105 : vector<1x128xi32>
    %107 = arith.andi %104, %106 : vector<1x128xi1>
    %cst_77 = arith.constant 0.000000e+00 : f32
    %108 = vector.broadcast %cst_77 : f32 to vector<1x128xf32>
    %109 = arith.select %107, %69, %108 : vector<1x128xi1>, vector<1x128xf32>
    %110 = vector.shape_cast %109 : vector<1x128xf32> to vector<1x1x128xf32>
    %cst_78 = arith.constant dense<0.000000e+00> : vector<1xf32>
    %111 = vector.multi_reduction <add>, %110, %cst_78 [1, 2] : vector<1x1x128xf32> to vector<1xf32>
    %112 = vector.shape_cast %111 : vector<1xf32> to vector<1x1x1xf32>
    %113 = vector.extract %112[0, 0, 0] : f32 from vector<1x1x1xf32>
    %cst_79 = arith.constant 5.120000e+02 : f32
    %114 = arith.divf %113, %cst_79 : f32
    %cst_80 = arith.constant 0.000000e+00 : f32
    %115 = vector.broadcast %114 : f32 to vector<1x128xf32>
    %116 = vector.broadcast %cst_80 : f32 to vector<1x128xf32>
    %117 = arith.select %107, %115, %116 : vector<1x128xi1>, vector<1x128xf32>
    %118 = arith.addf %102, %117 : vector<1x128xf32>
    %c6_i32_81 = arith.constant 6 : i32
    %119 = vector.broadcast %c6_i32_81 : i32 to vector<1x128xi32>
    %120 = arith.cmpi sge, %67, %119 : vector<1x128xi32>
    %c8_i32 = arith.constant 8 : i32
    %121 = vector.broadcast %c8_i32 : i32 to vector<1x128xi32>
    %122 = arith.cmpi slt, %67, %121 : vector<1x128xi32>
    %123 = arith.andi %120, %122 : vector<1x128xi1>
    %cst_82 = arith.constant 0.000000e+00 : f32
    %124 = vector.broadcast %cst_82 : f32 to vector<1x128xf32>
    %125 = arith.select %123, %69, %124 : vector<1x128xi1>, vector<1x128xf32>
    %126 = vector.shape_cast %125 : vector<1x128xf32> to vector<1x1x128xf32>
    %cst_83 = arith.constant dense<0.000000e+00> : vector<1xf32>
    %127 = vector.multi_reduction <add>, %126, %cst_83 [1, 2] : vector<1x1x128xf32> to vector<1xf32>
    %128 = vector.shape_cast %127 : vector<1xf32> to vector<1x1x1xf32>
    %129 = vector.extract %128[0, 0, 0] : f32 from vector<1x1x1xf32>
    %cst_84 = arith.constant 5.120000e+02 : f32
    %130 = arith.divf %129, %cst_84 : f32
    %cst_85 = arith.constant 0.000000e+00 : f32
    %131 = vector.broadcast %130 : f32 to vector<1x128xf32>
    %132 = vector.broadcast %cst_85 : f32 to vector<1x128xf32>
    %133 = arith.select %123, %131, %132 : vector<1x128xi1>, vector<1x128xf32>
    %134 = arith.addf %118, %133 : vector<1x128xf32>
    %135 = vector.broadcast %134 : vector<1x128xf32> to vector<256x128xf32>
    %136 = arith.subf %66, %135 : vector<256x128xf32>
    %137 = arith.mulf %136, %136 : vector<256x128xf32>
    %cst_86 = arith.constant dense<0.000000e+00> : vector<128xf32>
    %138 = vector.multi_reduction <add>, %137, %cst_86 [0] : vector<256x128xf32> to vector<128xf32>
    %139 = vector.shape_cast %138 : vector<128xf32> to vector<1x128xf32>
    %cst_87 = arith.constant 0.000000e+00 : f32
    %140 = vector.broadcast %cst_87 : f32 to vector<1x128xf32>
    %c0_i32_88 = arith.constant 0 : i32
    %141 = vector.broadcast %c0_i32_88 : i32 to vector<1x128xi32>
    %142 = arith.cmpi sge, %67, %141 : vector<1x128xi32>
    %c2_i32_89 = arith.constant 2 : i32
    %143 = vector.broadcast %c2_i32_89 : i32 to vector<1x128xi32>
    %144 = arith.cmpi slt, %67, %143 : vector<1x128xi32>
    %145 = arith.andi %142, %144 : vector<1x128xi1>
    %cst_90 = arith.constant 0.000000e+00 : f32
    %146 = vector.broadcast %cst_90 : f32 to vector<1x128xf32>
    %147 = arith.select %145, %139, %146 : vector<1x128xi1>, vector<1x128xf32>
    %148 = vector.shape_cast %147 : vector<1x128xf32> to vector<1x1x128xf32>
    %cst_91 = arith.constant dense<0.000000e+00> : vector<1xf32>
    %149 = vector.multi_reduction <add>, %148, %cst_91 [1, 2] : vector<1x1x128xf32> to vector<1xf32>
    %150 = vector.shape_cast %149 : vector<1xf32> to vector<1x1x1xf32>
    %151 = vector.extract %150[0, 0, 0] : f32 from vector<1x1x1xf32>
    %cst_92 = arith.constant 5.120000e+02 : f32
    %152 = arith.divf %151, %cst_92 : f32
    %cst_93 = arith.constant 0.000000e+00 : f32
    %153 = vector.broadcast %152 : f32 to vector<1x128xf32>
    %154 = vector.broadcast %cst_93 : f32 to vector<1x128xf32>
    %155 = arith.select %145, %153, %154 : vector<1x128xi1>, vector<1x128xf32>
    %156 = arith.addf %140, %155 : vector<1x128xf32>
    %c2_i32_94 = arith.constant 2 : i32
    %157 = vector.broadcast %c2_i32_94 : i32 to vector<1x128xi32>
    %158 = arith.cmpi sge, %67, %157 : vector<1x128xi32>
    %c4_i32_95 = arith.constant 4 : i32
    %159 = vector.broadcast %c4_i32_95 : i32 to vector<1x128xi32>
    %160 = arith.cmpi slt, %67, %159 : vector<1x128xi32>
    %161 = arith.andi %158, %160 : vector<1x128xi1>
    %cst_96 = arith.constant 0.000000e+00 : f32
    %162 = vector.broadcast %cst_96 : f32 to vector<1x128xf32>
    %163 = arith.select %161, %139, %162 : vector<1x128xi1>, vector<1x128xf32>
    %164 = vector.shape_cast %163 : vector<1x128xf32> to vector<1x1x128xf32>
    %cst_97 = arith.constant dense<0.000000e+00> : vector<1xf32>
    %165 = vector.multi_reduction <add>, %164, %cst_97 [1, 2] : vector<1x1x128xf32> to vector<1xf32>
    %166 = vector.shape_cast %165 : vector<1xf32> to vector<1x1x1xf32>
    %167 = vector.extract %166[0, 0, 0] : f32 from vector<1x1x1xf32>
    %cst_98 = arith.constant 5.120000e+02 : f32
    %168 = arith.divf %167, %cst_98 : f32
    %cst_99 = arith.constant 0.000000e+00 : f32
    %169 = vector.broadcast %168 : f32 to vector<1x128xf32>
    %170 = vector.broadcast %cst_99 : f32 to vector<1x128xf32>
    %171 = arith.select %161, %169, %170 : vector<1x128xi1>, vector<1x128xf32>
    %172 = arith.addf %156, %171 : vector<1x128xf32>
    %c4_i32_100 = arith.constant 4 : i32
    %173 = vector.broadcast %c4_i32_100 : i32 to vector<1x128xi32>
    %174 = arith.cmpi sge, %67, %173 : vector<1x128xi32>
    %c6_i32_101 = arith.constant 6 : i32
    %175 = vector.broadcast %c6_i32_101 : i32 to vector<1x128xi32>
    %176 = arith.cmpi slt, %67, %175 : vector<1x128xi32>
    %177 = arith.andi %174, %176 : vector<1x128xi1>
    %cst_102 = arith.constant 0.000000e+00 : f32
    %178 = vector.broadcast %cst_102 : f32 to vector<1x128xf32>
    %179 = arith.select %177, %139, %178 : vector<1x128xi1>, vector<1x128xf32>
    %180 = vector.shape_cast %179 : vector<1x128xf32> to vector<1x1x128xf32>
    %cst_103 = arith.constant dense<0.000000e+00> : vector<1xf32>
    %181 = vector.multi_reduction <add>, %180, %cst_103 [1, 2] : vector<1x1x128xf32> to vector<1xf32>
    %182 = vector.shape_cast %181 : vector<1xf32> to vector<1x1x1xf32>
    %183 = vector.extract %182[0, 0, 0] : f32 from vector<1x1x1xf32>
    %cst_104 = arith.constant 5.120000e+02 : f32
    %184 = arith.divf %183, %cst_104 : f32
    %cst_105 = arith.constant 0.000000e+00 : f32
    %185 = vector.broadcast %184 : f32 to vector<1x128xf32>
    %186 = vector.broadcast %cst_105 : f32 to vector<1x128xf32>
    %187 = arith.select %177, %185, %186 : vector<1x128xi1>, vector<1x128xf32>
    %188 = arith.addf %172, %187 : vector<1x128xf32>
    %c6_i32_106 = arith.constant 6 : i32
    %189 = vector.broadcast %c6_i32_106 : i32 to vector<1x128xi32>
    %190 = arith.cmpi sge, %67, %189 : vector<1x128xi32>
    %c8_i32_107 = arith.constant 8 : i32
    %191 = vector.broadcast %c8_i32_107 : i32 to vector<1x128xi32>
    %192 = arith.cmpi slt, %67, %191 : vector<1x128xi32>
    %193 = arith.andi %190, %192 : vector<1x128xi1>
    %cst_108 = arith.constant 0.000000e+00 : f32
    %194 = vector.broadcast %cst_108 : f32 to vector<1x128xf32>
    %195 = arith.select %193, %139, %194 : vector<1x128xi1>, vector<1x128xf32>
    %196 = vector.shape_cast %195 : vector<1x128xf32> to vector<1x1x128xf32>
    %cst_109 = arith.constant dense<0.000000e+00> : vector<1xf32>
    %197 = vector.multi_reduction <add>, %196, %cst_109 [1, 2] : vector<1x1x128xf32> to vector<1xf32>
    %198 = vector.shape_cast %197 : vector<1xf32> to vector<1x1x1xf32>
    %199 = vector.extract %198[0, 0, 0] : f32 from vector<1x1x1xf32>
    %cst_110 = arith.constant 5.120000e+02 : f32
    %200 = arith.divf %199, %cst_110 : f32
    %cst_111 = arith.constant 0.000000e+00 : f32
    %201 = vector.broadcast %200 : f32 to vector<1x128xf32>
    %202 = vector.broadcast %cst_111 : f32 to vector<1x128xf32>
    %203 = arith.select %193, %201, %202 : vector<1x128xi1>, vector<1x128xf32>
    %204 = arith.addf %188, %203 : vector<1x128xf32>
    %cst_112 = arith.constant 9.99999974E-6 : f32
    %205 = vector.broadcast %cst_112 : f32 to vector<1x128xf32>
    %206 = arith.addf %204, %205 : vector<1x128xf32>
    %207 = math.rsqrt %206 : vector<1x128xf32>
    %c0_113 = arith.constant 0 : index
    %c0_114 = arith.constant 0 : index
    %208 = vector.load %arg4[%c0_113, %c0_114] : memref<1x128xf32, #tpu.memory_space<vmem>>, vector<1x128xf32>
    %209 = arith.mulf %207, %208 : vector<1x128xf32>
    %c0_115 = arith.constant 0 : index
    %c0_116 = arith.constant 0 : index
    %210 = vector.load %arg5[%c0_115, %c0_116] : memref<1x128xf32, #tpu.memory_space<vmem>>, vector<1x128xf32>
    %211 = vector.broadcast %209 : vector<1x128xf32> to vector<256x128xf32>
    %212 = arith.mulf %136, %211 : vector<256x128xf32>
    %213 = vector.broadcast %210 : vector<1x128xf32> to vector<256x128xf32>
    %214 = arith.addf %212, %213 : vector<256x128xf32>
    %215 = arith.negf %214 : vector<256x128xf32>
    %216 = math.exp %215 : vector<256x128xf32>
    %cst_117 = arith.constant 1.000000e+00 : f32
    %217 = vector.broadcast %cst_117 : f32 to vector<256x128xf32>
    %218 = arith.addf %217, %216 : vector<256x128xf32>
    %219 = arith.divf %217, %218 : vector<256x128xf32>
    %220 = arith.mulf %214, %219 : vector<256x128xf32>
    %c0_118 = arith.constant 0 : index
    %c0_119 = arith.constant 0 : index
    %c0_120 = arith.constant 0 : index
    %221 = vector.load %arg6[%c0_118, %c0_119, %c0_120] : memref<1x256x128xf32, #tpu.memory_space<vmem>>, vector<1x256x128xf32>
    %222 = vector.shape_cast %221 : vector<1x256x128xf32> to vector<256x128xf32>
    %223 = vector.shape_cast %220 : vector<256x128xf32> to vector<1x256x128xf32>
    tpu.vector_store %arg6[%c0_118, %c0_119, %c0_120], %223 {strides = array<i32>} : memref<1x256x128xf32, #tpu.memory_space<vmem>>, vector<1x256x128xf32>,
    return
  }
  func.func @transform_0(%arg0: i32) -> (i32, i32, i32, i32) {
    %c0_i32 = arith.constant 0 : i32
    %c0_i32_0 = arith.constant 0 : i32
    %c0_i32_1 = arith.constant 0 : i32
    %c0_i32_2 = arith.constant 0 : i32
    return %arg0, %c0_i32, %c0_i32_0, %c0_i32_1 : i32, i32, i32, i32
  }
  func.func @transform_1(%arg0: i32) -> (i32, i32, i32) {
    %c0_i32 = arith.constant 0 : i32
    %c0_i32_0 = arith.constant 0 : i32
    %c0_i32_1 = arith.constant 0 : i32
    %c0_i32_2 = arith.constant 0 : i32
    return %c0_i32, %c0_i32_0, %c0_i32_1 : i32, i32, i32
  }
  func.func @transform_2(%arg0: i32) -> (i32, i32) {
    %c0_i32 = arith.constant 0 : i32
    %c0_i32_0 = arith.constant 0 : i32
    %c0_i32_1 = arith.constant 0 : i32
    return %c0_i32, %c0_i32_0 : i32, i32
  }
  func.func @transform_3(%arg0: i32) -> (i32, i32) {
    %c0_i32 = arith.constant 0 : i32
    %c0_i32_0 = arith.constant 0 : i32
    %c0_i32_1 = arith.constant 0 : i32
    return %c0_i32, %c0_i32_0 : i32, i32
  }
  func.func @transform_4(%arg0: i32) -> (i32, i32) {
    %c0_i32 = arith.constant 0 : i32
    %c0_i32_0 = arith.constant 0 : i32
    %c0_i32_1 = arith.constant 0 : i32
    return %c0_i32, %c0_i32_0 : i32, i32
  }
  func.func @transform_5(%arg0: i32) -> (i32, i32, i32) {
    %c0_i32 = arith.constant 0 : i32
    %c0_i32_0 = arith.constant 0 : i32
    %c0_i32_1 = arith.constant 0 : i32
    return %arg0, %c0_i32, %c0_i32_0 : i32, i32, i32
  }
}

</mosaic_0001>

<llo_original>
// kernel: tpu_custom_call.1
$region0: #{tpu_custom_call.1}
  #allocation0 [shape = 'u32[]', space=smem, size = 0x4, offset = 0x4, fixed_abs, tag = 'smem constant byte address 0x4 - core index']
  #allocation1 [shape = 'u32[144,128]{1,0:T(1,128)}', space=vmem, size = 0x12000, scoped, tag = 'internal scratch']
  %s0 = inlined_call_operand.vmem [shape: f32[2,18,18,4], index: 0, kind: input, shape index: {}]
  %s1 = inlined_call_operand.vmem [shape: f32[9,4,128], index: 1, kind: input, shape index: {}]
  %s2 = inlined_call_operand.vmem [shape: f32[1,128], index: 2, kind: input, shape index: {}]
  %s3 = inlined_call_operand.vmem [shape: f32[1,128], index: 3, kind: input, shape index: {}]
  %s4 = inlined_call_operand.vmem [shape: f32[1,128], index: 4, kind: input, shape index: {}]
  %s5 = inlined_call_operand.hbm [shape: f32[2,256,128], index: 5, kind: output, shape index: {}]
  %s6 = sld [smem:[#allocation0]]
  $region53: #{tpu_custom_call.1} parent=0
    _
  %s8 = ssub.s32 1, %s6
  %s9 = scalar_select 0, %s8, %s6
  $region1: #{tpu_custom_call.1} parent=0
    #allocation2 [shape = 'u8[262144]{0}', space=vmem, size = 0x40000, scoped, tag = 'output window, operand 0']
    #allocation3 [shape = 's32[2]{0}', space=sflag, size = 0x8, scoped, tag = 'scoped memory for tpu_custom_call.1']
    %10 = vsyncpa [#allocation3], 0
    %s11 = scalar_lea.sflag [#allocation3], 1
    %12 = vsyncpa %s11, 0
    loop: start=0, step=1, limit=4
    $region2: #{tpu_custom_call.1} parent=1 // loop_pre_header
      _
    $region3: #{tpu_custom_call.1} parent=1 // loop_header
      %s14 = sphi 0, %s18
      %p15 = scmp.ge.s32.totalorder %s14, 4
      %s24 = sphi 0, %s26
      %s27 = sphi 0, %s24
      %s28 = sphi 0, %s27
      %s44 = sphi 0, %s28
      %s48 = sphi 0, %s48
      %s50 = sphi 0, %s48
      %s51 = sphi 0, %s50
      %s65 = sphi 0, %s51
      %s69 = sphi 0, %s69
      %s71 = sphi 0, %s69
      %s72 = sphi 0, %s71
      %s86 = sphi 0, %s72
      %s90 = sphi 0, %s90
      %s92 = sphi 0, %s90
      %s93 = sphi 0, %s92
      %s107 = sphi 0, %s93
      %s111 = sphi 0, %s111
      %s113 = sphi 0, %s111
      %s114 = sphi 0, %s113
      %s128 = sphi 0, %s114
      %s134 = sphi 0, %s136
      %s137 = sphi 0, %s134
      %s138 = sphi 0, %s137
      %s154 = sphi 0, %s138
    $region4: #{tpu_custom_call.1} parent=1 // loop_header_branch
      %17 = sbr.rel (%p15) target = $region8
    $region5: #{tpu_custom_call.1} parent=1 // loop_body
      %s19 = ssub.s32 %s14, 1
      %s20 = ssub.s32 %s14, 2
      %s21 = sadd.s32 %s14, 1
      %s22 = ssub.s32 %s14, %s21
      %p23 = scmp.eq.s32.totalorder %s22, 0
      %s25 = sadd.s32 %s24, 1
      %s26 = scalar_select %p23, %s24, %s25
      %p29 = pneg %p23
      %p30 = scmp.eq.s32.totalorder %s14, 1
      %p31 = por %p29, %p30
      %p32 = scmp.ne.s32.totalorder %s24, %s27
      %p33 = scmp.eq.s32.totalorder %s14, 0
      %p34 = por %p32, %p33
      %p35 = scmp.ne.s32.totalorder %s24, %s27
      %p36 = scmp.eq.s32.totalorder %s19, 1
      %p37 = por %p35, %p36
      %p38 = scmp.ne.s32.totalorder %s27, %s28
      %p39 = scmp.eq.s32.totalorder %s19, 0
      %p40 = por %p38, %p39
      %p41 = scmp.ne.s32.totalorder %s27, %s28
      %p42 = scmp.eq.s32.totalorder %s20, 1
      %p43 = por %p41, %p42
      %p45 = scmp.ne.s32.totalorder %s28, %s44
      %p46 = scmp.eq.s32.totalorder %s20, 0
      %p47 = por %p45, %p46
      %s49 = sadd.s32 %s48, 1
      %p52 = scmp.eq.s32.totalorder %s14, 1
      %p53 = scmp.ne.s32.totalorder %s48, %s50
      %p54 = scmp.eq.s32.totalorder %s14, 0
      %p55 = por %p53, %p54
      %p56 = scmp.ne.s32.totalorder %s48, %s50
      %p57 = scmp.eq.s32.totalorder %s19, 1
      %p58 = por %p56, %p57
      %p59 = scmp.ne.s32.totalorder %s50, %s51
      %p60 = scmp.eq.s32.totalorder %s19, 0
      %p61 = por %p59, %p60
      %p62 = scmp.ne.s32.totalorder %s50, %s51
      %p63 = scmp.eq.s32.totalorder %s20, 1
      %p64 = por %p62, %p63
      %p66 = scmp.ne.s32.totalorder %s51, %s65
      %p67 = scmp.eq.s32.totalorder %s20, 0
      %p68 = por %p66, %p67
      %s70 = sadd.s32 %s69, 1
      %p73 = scmp.eq.s32.totalorder %s14, 1
      %p74 = scmp.ne.s32.totalorder %s69, %s71
      %p75 = scmp.eq.s32.totalorder %s14, 0
      %p76 = por %p74, %p75
      %p77 = scmp.ne.s32.totalorder %s69, %s71
      %p78 = scmp.eq.s32.totalorder %s19, 1
      %p79 = por %p77, %p78
      %p80 = scmp.ne.s32.totalorder %s71, %s72
      %p81 = scmp.eq.s32.totalorder %s19, 0
      %p82 = por %p80, %p81
      %p83 = scmp.ne.s32.totalorder %s71, %s72
      %p84 = scmp.eq.s32.totalorder %s20, 1
      %p85 = por %p83, %p84
      %p87 = scmp.ne.s32.totalorder %s72, %s86
      %p88 = scmp.eq.s32.totalorder %s20, 0
      %p89 = por %p87, %p88
      %s91 = sadd.s32 %s90, 1
      %p94 = scmp.eq.s32.totalorder %s14, 1
      %p95 = scmp.ne.s32.totalorder %s90, %s92
      %p96 = scmp.eq.s32.totalorder %s14, 0
      %p97 = por %p95, %p96
      %p98 = scmp.ne.s32.totalorder %s90, %s92
      %p99 = scmp.eq.s32.totalorder %s19, 1
      %p100 = por %p98, %p99
      %p101 = scmp.ne.s32.totalorder %s92, %s93
      %p102 = scmp.eq.s32.totalorder %s19, 0
      %p103 = por %p101, %p102
      %p104 = scmp.ne.s32.totalorder %s92, %s93
      %p105 = scmp.eq.s32.totalorder %s20, 1
      %p106 = por %p104, %p105
      %p108 = scmp.ne.s32.totalorder %s93, %s107
      %p109 = scmp.eq.s32.totalorder %s20, 0
      %p110 = por %p108, %p109
      %s112 = sadd.s32 %s111, 1
      %p115 = scmp.eq.s32.totalorder %s14, 1
      %p116 = scmp.ne.s32.totalorder %s111, %s113
      %p117 = scmp.eq.s32.totalorder %s14, 0
      %p118 = por %p116, %p117
      %p119 = scmp.ne.s32.totalorder %s111, %s113
      %p120 = scmp.eq.s32.totalorder %s19, 1
      %p121 = por %p119, %p120
      %p122 = scmp.ne.s32.totalorder %s113, %s114
      %p123 = scmp.eq.s32.totalorder %s19, 0
      %p124 = por %p122, %p123
      %p125 = scmp.ne.s32.totalorder %s113, %s114
      %p126 = scmp.eq.s32.totalorder %s20, 1
      %p127 = por %p125, %p126
      %p129 = scmp.ne.s32.totalorder %s114, %s128
      %p130 = scmp.eq.s32.totalorder %s20, 0
      %p131 = por %p129, %p130
      %s132 = ssub.s32 %s14, %s21
      %p133 = scmp.eq.s32.totalorder %s132, 0
      %s135 = sadd.s32 %s134, 1
      %s136 = scalar_select %p133, %s134, %s135
      %p139 = pneg %p133
      %p140 = scmp.eq.s32.totalorder %s14, 1
      %p141 = por %p139, %p140
      %p142 = scmp.ne.s32.totalorder %s134, %s137
      %p143 = scmp.eq.s32.totalorder %s14, 0
      %p144 = por %p142, %p143
      %p145 = scmp.ne.s32.totalorder %s134, %s137
      %p146 = scmp.eq.s32.totalorder %s19, 1
      %p147 = por %p145, %p146
      %p148 = scmp.ne.s32.totalorder %s137, %s138
      %p149 = scmp.eq.s32.totalorder %s19, 0
      %p150 = por %p148, %p149
      %p151 = scmp.ne.s32.totalorder %s137, %s138
      %p152 = scmp.eq.s32.totalorder %s20, 1
      %p153 = por %p151, %p152
      %p155 = scmp.ne.s32.totalorder %s138, %s154
      %p156 = scmp.eq.s32.totalorder %s20, 0
      %p157 = por %p155, %p156
      %p158 = scmp.le.s32.totalorder 1, %s14
      %p159 = scmp.lt.s32.totalorder %s14, 3
      %p160 = pnand %p158, %p159
      %p161 = pneg %p160
      // Predicated region
      $region9: #{tpu_custom_call.1} parent=5 // pred_check
        _
      $region10: #{tpu_custom_call.1} parent=5 // pred_check_branch
        %163 = sbr.rel (%p160) target = $region12
      $region11: #{tpu_custom_call.1} parent=5 // pred_region
        %s164 = ssub.s32 %s14, 1
        // Predicated region
        $region13: #{tpu_custom_call.1} parent=11 // pred_check
          %p165 = pneg %p61
        $region14: #{tpu_custom_call.1} parent=11 // pred_check_branch
          %167 = sbr.rel (%p165) target = $region16
        $region15: #{tpu_custom_call.1} parent=11 // pred_region
          _
        $region16: #{tpu_custom_call.1} parent=11 // pred_fallthru
          _
        // Predicated region
        $region17: #{tpu_custom_call.1} parent=11 // pred_check
          %p168 = pneg %p82
        $region18: #{tpu_custom_call.1} parent=11 // pred_check_branch
          %170 = sbr.rel (%p168) target = $region20
        $region19: #{tpu_custom_call.1} parent=11 // pred_region
          _
        $region20: #{tpu_custom_call.1} parent=11 // pred_fallthru
          _
        // Predicated region
        $region21: #{tpu_custom_call.1} parent=11 // pred_check
          %p171 = pneg %p103
        $region22: #{tpu_custom_call.1} parent=11 // pred_check_branch
          %173 = sbr.rel (%p171) target = $region24
        $region23: #{tpu_custom_call.1} parent=11 // pred_region
          _
        $region24: #{tpu_custom_call.1} parent=11 // pred_fallthru
          _
        // Predicated region
        $region25: #{tpu_custom_call.1} parent=11 // pred_check
          %p174 = pneg %p124
        $region26: #{tpu_custom_call.1} parent=11 // pred_check_branch
          %176 = sbr.rel (%p174) target = $region28
        $region27: #{tpu_custom_call.1} parent=11 // pred_region
          _
        $region28: #{tpu_custom_call.1} parent=11 // pred_fallthru
          _
      $region12: #{tpu_custom_call.1} parent=5 // pred_fallthru
        _
      %p177 = scmp.lt.s32.totalorder %s14, 2
      // Predicated region
      $region29: #{tpu_custom_call.1} parent=5 // pred_check
        %p178 = pneg %p177
      $region30: #{tpu_custom_call.1} parent=5 // pred_check_branch
        %180 = sbr.rel (%p178) target = $region32
      $region31: #{tpu_custom_call.1} parent=5 // pred_region
        // Predicated region
        $region33: #{tpu_custom_call.1} parent=31 // pred_check
          %p181 = pneg %p34
        $region34: #{tpu_custom_call.1} parent=31 // pred_check_branch
          %183 = sbr.rel (%p181) target = $region36
        $region35: #{tpu_custom_call.1} parent=31 // pred_region
          %p184 = scmp.lt.s32.totalorder %s14, 1
          %s185 = scalar_select %p184, %s14, 1
          %s186 = smul.addr %s185, 54
          %s187 = smul.addr %s186, 8
          %s188 = scalar_lea.vmem %s0, %s187
        $region36: #{tpu_custom_call.1} parent=31 // pred_fallthru
          _
      $region32: #{tpu_custom_call.1} parent=5 // pred_fallthru
        _
      %p189 = scmp.le.s32.totalorder 1, %s14
      %p190 = scmp.lt.s32.totalorder %s14, 3
      %p191 = pnand %p189, %p190
      %p192 = pneg %p191
      // Predicated region
      $region37: #{tpu_custom_call.1} parent=5 // pred_check
        _
      $region38: #{tpu_custom_call.1} parent=5 // pred_check_branch
        %194 = sbr.rel (%p191) target = $region40
      $region39: #{tpu_custom_call.1} parent=5 // pred_region
        %s195 = ssub.s32 %s14, 1
        %p196 = scmp.lt.s32.totalorder %s19, 1
        %s197 = scalar_select %p196, %s19, 1
        %s198 = smul.addr %s197, 54
        %s199 = smul.addr %s198, 8
        %s200 = scalar_lea.vmem %s0, %s199
        %p201 = pneg %p40
        %p202 = pneg %p37
        %p203 = pneg %p61
        %p204 = pneg %p58
        %p205 = pneg %p82
        %p206 = pneg %p79
        %p207 = pneg %p103
        %p208 = pneg %p100
        %p209 = pneg %p124
        %p210 = pneg %p121
        %p211 = pneg %p150
        %p212 = pneg %p147
        %s213 = sand.u32 %s137, 1
        %s214 = scalar_lea.sflag [#allocation3], %s213
        %s215 = sand.u32 %s137, 1
        %s216 = smul.addr %s215, 256
        %s217 = scalar_lea.vmem [#allocation2], %s216
        %p218 = scmp.lt.s32.totalorder %s19, 1
        %s219 = scalar_select %p218, %s19, 1
        %s220 = smul.addr %s219, 54
        %s221 = smul.addr %s220, 8
        %s222 = scalar_lea.vmem %s0, %s221
        %v223 = vld [vmem:[%s222] sm:$0xff]
        %v224 = vld [vmem:[%s222 + $0x8] sm:$0xff]
        %v225 = vld [vmem:[%s222 + $0x18] sm:$0xff]
        %v226 = vld [vmem:[%s222 + $0x20] sm:$0xff]
        %v227 = vld [vmem:[%s222 + $0x30] sm:$0xff]
        %v228 = vld [vmem:[%s222 + $0x38] sm:$0xff]
        %v229 = vld [vmem:[%s222 + $0x48] sm:$0xff]
        %v230 = vld [vmem:[%s222 + $0x50] sm:$0xff]
        %v231 = vld [vmem:[%s222 + $0x60] sm:$0xff]
        %v232 = vld [vmem:[%s222 + $0x68] sm:$0xff]
        %v233 = vld [vmem:[%s222 + $0x78] sm:$0xff]
        %v234 = vld [vmem:[%s222 + $0x80] sm:$0xff]
        %v235 = vld [vmem:[%s222 + $0x90] sm:$0xff]
        %v236 = vld [vmem:[%s222 + $0x98] sm:$0xff]
        %v237 = vld [vmem:[%s222 + $0xa8] sm:$0xff]
        %v238 = vld [vmem:[%s222 + $0xb0] sm:$0xff]
        %v239 = vld [vmem:[%s222 + $0xc0] sm:$0xff]
        %v240 = vld [vmem:[%s222 + $0xc8] sm:$0xff]
        %v241 = vld [vmem:[%s222 + $0xd8] sm:$0xff]
        %v242 = vld [vmem:[%s222 + $0xe0] sm:$0xff]
        %v243 = vld [vmem:[%s222 + $0xf0] sm:$0xff]
        %v244 = vld [vmem:[%s222 + $0xf8] sm:$0xff]
        %v245 = vld [vmem:[%s222 + $0x108] sm:$0xff]
        %v246 = vld [vmem:[%s222 + $0x110] sm:$0xff]
        %v247 = vld [vmem:[%s222 + $0x120] sm:$0xff]
        %v248 = vld [vmem:[%s222 + $0x128] sm:$0xff]
        %v249 = vld [vmem:[%s222 + $0x138] sm:$0xff]
        %v250 = vld [vmem:[%s222 + $0x140] sm:$0xff]
        %v251 = vld [vmem:[%s222 + $0x150] sm:$0xff]
        %v252 = vld [vmem:[%s222 + $0x158] sm:$0xff]
        %v253 = vld [vmem:[%s222 + $0x168] sm:$0xff]
        %v254 = vld [vmem:[%s222 + $0x170] sm:$0xff]
        %v255 = vld [vmem:[%s1] sm:$0xf]
        %v256 = vld [vmem:[%s222 + $0x1] sm:$0xff]
        %v257 = vld [vmem:[%s222 + $0x9] sm:$0xff]
        %v258 = vld [vmem:[%s222 + $0x19] sm:$0xff]
        %v259 = vld [vmem:[%s222 + $0x21] sm:$0xff]
        %v260 = vld [vmem:[%s222 + $0x31] sm:$0xff]
        %v261 = vld [vmem:[%s222 + $0x39] sm:$0xff]
        %v262 = vld [vmem:[%s222 + $0x49] sm:$0xff]
        %v263 = vld [vmem:[%s222 + $0x51] sm:$0xff]
        %v264 = vld [vmem:[%s222 + $0x61] sm:$0xff]
        %v265 = vld [vmem:[%s222 + $0x69] sm:$0xff]
        %v266 = vld [vmem:[%s222 + $0x79] sm:$0xff]
        %v267 = vld [vmem:[%s222 + $0x81] sm:$0xff]
        %v268 = vld [vmem:[%s222 + $0x91] sm:$0xff]
        %v269 = vld [vmem:[%s222 + $0x99] sm:$0xff]
        %v270 = vld [vmem:[%s222 + $0xa9] sm:$0xff]
        %v271 = vld [vmem:[%s222 + $0xb1] sm:$0xff]
        %v272 = vld [vmem:[%s222 + $0xc1] sm:$0xff]
        %v273 = vld [vmem:[%s222 + $0xc9] sm:$0xff]
        %v274 = vld [vmem:[%s222 + $0xd9] sm:$0xff]
        %v275 = vld [vmem:[%s222 + $0xe1] sm:$0xff]
        %v276 = vld [vmem:[%s222 + $0xf1] sm:$0xff]
        %v277 = vld [vmem:[%s222 + $0xf9] sm:$0xff]
        %v278 = vld [vmem:[%s222 + $0x109] sm:$0xff]
        %v279 = vld [vmem:[%s222 + $0x111] sm:$0xff]
        %v280 = vld [vmem:[%s222 + $0x121] sm:$0xff]
        %v281 = vld [vmem:[%s222 + $0x129] sm:$0xff]
        %v282 = vld [vmem:[%s222 + $0x139] sm:$0xff]
        %v283 = vld [vmem:[%s222 + $0x141] sm:$0xff]
        %v284 = vld [vmem:[%s222 + $0x151] sm:$0xff]
        %v285 = vld [vmem:[%s222 + $0x159] sm:$0xff]
        %v286 = vld [vmem:[%s222 + $0x169] sm:$0xff]
        %v287 = vld [vmem:[%s222 + $0x171] sm:$0xff]
        %s288 = scalar_lea.vmem %s1, 4
        %v289 = vld [vmem:[%s288] sm:$0xf]
        %vm290 = vcmask 31744
        %v292 = vsel %vm290, %v256, 0
        %v295 = vsel %vm290, %v257, 0
        %v298 = vsel %vm290, %v258, 0
        %v301 = vsel %vm290, %v259, 0
        %v304 = vsel %vm290, %v260, 0
        %v307 = vsel %vm290, %v261, 0
        %v310 = vsel %vm290, %v262, 0
        %v313 = vsel %vm290, %v263, 0
        %v316 = vsel %vm290, %v264, 0
        %v319 = vsel %vm290, %v265, 0
        %v322 = vsel %vm290, %v266, 0
        %v325 = vsel %vm290, %v267, 0
        %v328 = vsel %vm290, %v268, 0
        %v331 = vsel %vm290, %v269, 0
        %v334 = vsel %vm290, %v270, 0
        %v337 = vsel %vm290, %v271, 0
        %v340 = vsel %vm290, %v272, 0
        %v343 = vsel %vm290, %v273, 0
        %v346 = vsel %vm290, %v274, 0
        %v349 = vsel %vm290, %v275, 0
        %v352 = vsel %vm290, %v276, 0
        %v355 = vsel %vm290, %v277, 0
        %v358 = vsel %vm290, %v278, 0
        %v361 = vsel %vm290, %v279, 0
        %v364 = vsel %vm290, %v280, 0
        %v367 = vsel %vm290, %v281, 0
        %v370 = vsel %vm290, %v282, 0
        %v373 = vsel %vm290, %v283, 0
        %v376 = vsel %vm290, %v284, 0
        %v379 = vsel %vm290, %v285, 0
        %v382 = vsel %vm290, %v286, 0
        %v385 = vsel %vm290, %v287, 0
        %vm387 = vcmask 1043456
        %v389 = vsel %vm387, %v289, 0
        %391 = vmatprep.subr.mxu0 0.0
        %392 = vmatpush1.msra.mxu0 0.0
        %393 = vmatprep.subr.mxu0 0.0
        %394 = vmatpush1.msra.mxu0 0.0
        %395 = vmatprep.subr.mxu0 0.0
        %396 = vmatpush1.msra.mxu0 0.0
        %397 = vmatprep.subr.mxu0 0.0
        %398 = vmatpush1.msra.mxu0 0.0
        %399 = vmatprep.subr.mxu0 0.0
        %400 = vmatpush1.msra.mxu0 0.0
        %401 = vmatprep.subr.mxu0 0.0
        %402 = vmatpush1.msra.mxu0 0.0
        %403 = vmatprep.subr.mxu0 0.0
        %404 = vmatpush1.msra.mxu0 0.0
        %405 = vmatprep.subr.mxu0 0.0
        %406 = vmatpush1.msra.mxu0 0.0
        %407 = vmatprep.subr.mxu0 0.0
        %408 = vmatpush1.msra.mxu0 0.0
        %409 = vmatprep.subr.mxu0 0.0
        %410 = vmatpush1.msra.mxu0 0.0
        %411 = vmatprep.subr.mxu0 0.0
        %412 = vmatpush1.msra.mxu0 0.0
        %413 = vmatprep.subr.mxu0 0.0
        %414 = vmatpush1.msra.mxu0 0.0
        %415 = vmatprep.subr.mxu0 0.0
        %416 = vmatpush1.msra.mxu0 0.0
        %417 = vmatprep.subr.mxu0 0.0
        %418 = vmatpush1.msra.mxu0 0.0
        %419 = vmatprep.subr.mxu0 0.0
        %420 = vmatpush1.msra.mxu0 0.0
        %421 = vmatprep.subr.mxu0 0.0
        %422 = vmatpush1.msra.mxu0 %v389
        %423 = vmatprep.subr.mxu0 0.0
        %424 = vmatpush2.msra.mxu0 0.0
        %425 = vmatprep.subr.mxu0 0.0
        %426 = vmatpush2.msra.mxu0 0.0
        %427 = vmatprep.subr.mxu0 0.0
        %428 = vmatpush2.msra.mxu0 0.0
        %429 = vmatprep.subr.mxu0 0.0
        %430 = vmatpush2.msra.mxu0 0.0
        %431 = vmatprep.subr.mxu0 0.0
        %432 = vmatpush2.msra.mxu0 0.0
        %433 = vmatprep.subr.mxu0 0.0
        %434 = vmatpush2.msra.mxu0 0.0
        %435 = vmatprep.subr.mxu0 0.0
        %436 = vmatpush2.msra.mxu0 0.0
        %437 = vmatprep.subr.mxu0 0.0
        %438 = vmatpush2.msra.mxu0 0.0
        %439 = vmatprep.subr.mxu0 0.0
        %440 = vmatpush2.msra.mxu0 0.0
        %441 = vmatprep.subr.mxu0 0.0
        %442 = vmatpush2.msra.mxu0 0.0
        %443 = vmatprep.subr.mxu0 0.0
        %444 = vmatpush2.msra.mxu0 0.0
        %445 = vmatprep.subr.mxu0 0.0
        %446 = vmatpush2.msra.mxu0 0.0
        %447 = vmatprep.subr.mxu0 0.0
        %448 = vmatpush2.msra.mxu0 0.0
        %449 = vmatprep.subr.mxu0 0.0
        %450 = vmatpush2.msra.mxu0 0.0
        %451 = vmatprep.subr.mxu0 0.0
        %452 = vmatpush2.msra.mxu0 0.0
        %453 = vmatprep.subr.mxu0 0.0
        %454 = vmatpush2.msra.mxu0 0.0
        %455 = vmatprep.mubr.f32.mxu0 0.0
        %456 = vmatmul.mubr.f32.gmra.mxu0 %v292
        %v457 = vpop.f32.mrf.mxu0
        %v458 = vadd.f32 0.0, %v457
        %v459 = vpop.f32.mrf.mxu0
        %460 = vmatprep.mubr.f32.mxu0 0.0
        %461 = vmatmul.mubr.f32.gmra.mxu0 %v295
        %v462 = vpop.f32.mrf.mxu0
        %v463 = vadd.f32 0.0, %v462
        %v464 = vpop.f32.mrf.mxu0
        %465 = vmatprep.mubr.f32.mxu0 0.0
        %466 = vmatmul.mubr.f32.gmra.mxu0 %v298
        %v467 = vpop.f32.mrf.mxu0
        %v468 = vadd.f32 0.0, %v467
        %v469 = vpop.f32.mrf.mxu0
        %470 = vmatprep.mubr.f32.mxu0 0.0
        %471 = vmatmul.mubr.f32.gmra.mxu0 %v301
        %v472 = vpop.f32.mrf.mxu0
        %v473 = vadd.f32 0.0, %v472
        %v474 = vpop.f32.mrf.mxu0
        %475 = vmatprep.mubr.f32.mxu0 0.0
        %476 = vmatmul.mubr.f32.gmra.mxu0 %v304
        %v477 = vpop.f32.mrf.mxu0
        %v478 = vadd.f32 0.0, %v477
        %v479 = vpop.f32.mrf.mxu0
        %480 = vmatprep.mubr.f32.mxu0 0.0
        %481 = vmatmul.mubr.f32.gmra.mxu0 %v307
        %v482 = vpop.f32.mrf.mxu0
        %v483 = vadd.f32 0.0, %v482
        %v484 = vpop.f32.mrf.mxu0
        %485 = vmatprep.mubr.f32.mxu0 0.0
        %486 = vmatmul.mubr.f32.gmra.mxu0 %v310
        %v487 = vpop.f32.mrf.mxu0
        %v488 = vadd.f32 0.0, %v487
        %v489 = vpop.f32.mrf.mxu0
        %490 = vmatprep.mubr.f32.mxu0 0.0
        %491 = vmatmul.mubr.f32.gmra.mxu0 %v313
        %v492 = vpop.f32.mrf.mxu0
        %v493 = vadd.f32 0.0, %v492
        %v494 = vpop.f32.mrf.mxu0
        %495 = vmatprep.mubr.f32.mxu0 0.0
        %496 = vmatmul.mubr.f32.gmra.mxu0 %v316
        %v497 = vpop.f32.mrf.mxu0
        %v498 = vadd.f32 0.0, %v497
        %v499 = vpop.f32.mrf.mxu0
        %500 = vmatprep.mubr.f32.mxu0 0.0
        %501 = vmatmul.mubr.f32.gmra.mxu0 %v319
        %v502 = vpop.f32.mrf.mxu0
        %v503 = vadd.f32 0.0, %v502
        %v504 = vpop.f32.mrf.mxu0
        %505 = vmatprep.mubr.f32.mxu0 0.0
        %506 = vmatmul.mubr.f32.gmra.mxu0 %v322
        %v507 = vpop.f32.mrf.mxu0
        %v508 = vadd.f32 0.0, %v507
        %v509 = vpop.f32.mrf.mxu0
        %510 = vmatprep.mubr.f32.mxu0 0.0
        %511 = vmatmul.mubr.f32.gmra.mxu0 %v325
        %v512 = vpop.f32.mrf.mxu0
        %v513 = vadd.f32 0.0, %v512
        %v514 = vpop.f32.mrf.mxu0
        %515 = vmatprep.mubr.f32.mxu0 0.0
        %516 = vmatmul.mubr.f32.gmra.mxu0 %v328
        %v517 = vpop.f32.mrf.mxu0
        %v518 = vadd.f32 0.0, %v517
        %v519 = vpop.f32.mrf.mxu0
        %520 = vmatprep.mubr.f32.mxu0 0.0
        %521 = vmatmul.mubr.f32.gmra.mxu0 %v331
        %v522 = vpop.f32.mrf.mxu0
        %v523 = vadd.f32 0.0, %v522
        %v524 = vpop.f32.mrf.mxu0
        %525 = vmatprep.mubr.f32.mxu0 0.0
        %526 = vmatmul.mubr.f32.gmra.mxu0 %v334
        %v527 = vpop.f32.mrf.mxu0
        %v528 = vadd.f32 0.0, %v527
        %v529 = vpop.f32.mrf.mxu0
        %530 = vmatprep.mubr.f32.mxu0 0.0
        %531 = vmatmul.mubr.f32.gmra.mxu0 %v337
        %v532 = vpop.f32.mrf.mxu0
        %v533 = vadd.f32 0.0, %v532
        %v534 = vpop.f32.mrf.mxu0
        %535 = vmatprep.mubr.f32.mxu0 0.0
        %536 = vmatmul.mubr.f32.gmra.mxu0 %v340
        %v537 = vpop.f32.mrf.mxu0
        %v538 = vadd.f32 0.0, %v537
        %v539 = vpop.f32.mrf.mxu0
        %540 = vmatprep.mubr.f32.mxu0 0.0
        %541 = vmatmul.mubr.f32.gmra.mxu0 %v343
        %v542 = vpop.f32.mrf.mxu0
        %v543 = vadd.f32 0.0, %v542
        %v544 = vpop.f32.mrf.mxu0
        %545 = vmatprep.mubr.f32.mxu0 0.0
        %546 = vmatmul.mubr.f32.gmra.mxu0 %v346
        %v547 = vpop.f32.mrf.mxu0
        %v548 = vadd.f32 0.0, %v547
        %v549 = vpop.f32.mrf.mxu0
        %550 = vmatprep.mubr.f32.mxu0 0.0
        %551 = vmatmul.mubr.f32.gmra.mxu0 %v349
        %v552 = vpop.f32.mrf.mxu0
        %v553 = vadd.f32 0.0, %v552
        %v554 = vpop.f32.mrf.mxu0
        %555 = vmatprep.mubr.f32.mxu0 0.0
        %556 = vmatmul.mubr.f32.gmra.mxu0 %v352
        %v557 = vpop.f32.mrf.mxu0
        %v558 = vadd.f32 0.0, %v557
        %v559 = vpop.f32.mrf.mxu0
        %560 = vmatprep.mubr.f32.mxu0 0.0
        %561 = vmatmul.mubr.f32.gmra.mxu0 %v355
        %v562 = vpop.f32.mrf.mxu0
        %v563 = vadd.f32 0.0, %v562
        %v564 = vpop.f32.mrf.mxu0
        %565 = vmatprep.mubr.f32.mxu0 0.0
        %566 = vmatmul.mubr.f32.gmra.mxu0 %v358
        %v567 = vpop.f32.mrf.mxu0
        %v568 = vadd.f32 0.0, %v567
        %v569 = vpop.f32.mrf.mxu0
        %570 = vmatprep.mubr.f32.mxu0 0.0
        %571 = vmatmul.mubr.f32.gmra.mxu0 %v361
        %v572 = vpop.f32.mrf.mxu0
        %v573 = vadd.f32 0.0, %v572
        %v574 = vpop.f32.mrf.mxu0
        %575 = vmatprep.mubr.f32.mxu0 0.0
        %576 = vmatmul.mubr.f32.gmra.mxu0 %v364
        %v577 = vpop.f32.mrf.mxu0
        %v578 = vadd.f32 0.0, %v577
        %v579 = vpop.f32.mrf.mxu0
        %580 = vmatprep.mubr.f32.mxu0 0.0
        %581 = vmatmul.mubr.f32.gmra.mxu0 %v367
        %v582 = vpop.f32.mrf.mxu0
        %v583 = vadd.f32 0.0, %v582
        %v584 = vpop.f32.mrf.mxu0
        %585 = vmatprep.mubr.f32.mxu0 0.0
        %586 = vmatmul.mubr.f32.gmra.mxu0 %v370
        %v587 = vpop.f32.mrf.mxu0
        %v588 = vadd.f32 0.0, %v587
        %v589 = vpop.f32.mrf.mxu0
        %590 = vmatprep.mubr.f32.mxu0 0.0
        %591 = vmatmul.mubr.f32.gmra.mxu0 %v373
        %v592 = vpop.f32.mrf.mxu0
        %v593 = vadd.f32 0.0, %v592
        %v594 = vpop.f32.mrf.mxu0
        %595 = vmatprep.mubr.f32.mxu0 0.0
        %596 = vmatmul.mubr.f32.gmra.mxu0 %v376
        %v597 = vpop.f32.mrf.mxu0
        %v598 = vadd.f32 0.0, %v597
        %v599 = vpop.f32.mrf.mxu0
        %600 = vmatprep.mubr.f32.mxu0 0.0
        %601 = vmatmul.mubr.f32.gmra.mxu0 %v379
        %v602 = vpop.f32.mrf.mxu0
        %v603 = vadd.f32 0.0, %v602
        %v604 = vpop.f32.mrf.mxu0
        %605 = vmatprep.mubr.f32.mxu0 0.0
        %606 = vmatmul.mubr.f32.gmra.mxu0 %v382
        %v607 = vpop.f32.mrf.mxu0
        %v608 = vadd.f32 0.0, %v607
        %v609 = vpop.f32.mrf.mxu0
        %610 = vmatprep.mubr.f32.mxu0 0.0
        %611 = vmatmul.mubr.f32.gmra.mxu0 %v385
        %v612 = vpop.f32.mrf.mxu0
        %v613 = vadd.f32 0.0, %v612
        %v614 = vpop.f32.mrf.mxu0
        %615 = vdwg.mxu0
        %v617 = vsel %vm290, %v223, 0
        %v620 = vsel %vm290, %v224, 0
        %v623 = vsel %vm290, %v225, 0
        %v626 = vsel %vm290, %v226, 0
        %v629 = vsel %vm290, %v227, 0
        %v632 = vsel %vm290, %v228, 0
        %v635 = vsel %vm290, %v229, 0
        %v638 = vsel %vm290, %v230, 0
        %v641 = vsel %vm290, %v231, 0
        %v644 = vsel %vm290, %v232, 0
        %v647 = vsel %vm290, %v233, 0
        %v650 = vsel %vm290, %v234, 0
        %v653 = vsel %vm290, %v235, 0
        %v656 = vsel %vm290, %v236, 0
        %v659 = vsel %vm290, %v237, 0
        %v662 = vsel %vm290, %v238, 0
        %v665 = vsel %vm290, %v239, 0
        %v668 = vsel %vm290, %v240, 0
        %v671 = vsel %vm290, %v241, 0
        %v674 = vsel %vm290, %v242, 0
        %v677 = vsel %vm290, %v243, 0
        %v680 = vsel %vm290, %v244, 0
        %v683 = vsel %vm290, %v245, 0
        %v686 = vsel %vm290, %v246, 0
        %v689 = vsel %vm290, %v247, 0
        %v692 = vsel %vm290, %v248, 0
        %v695 = vsel %vm290, %v249, 0
        %v698 = vsel %vm290, %v250, 0
        %v701 = vsel %vm290, %v251, 0
        %v704 = vsel %vm290, %v252, 0
        %v707 = vsel %vm290, %v253, 0
        %v710 = vsel %vm290, %v254, 0
        %v713 = vsel %vm387, %v255, 0
        %715 = vmatprep.subr.mxu0 0.0
        %716 = vmatpush1.msra.mxu0 0.0
        %717 = vmatprep.subr.mxu0 0.0
        %718 = vmatpush1.msra.mxu0 0.0
        %719 = vmatprep.subr.mxu0 0.0
        %720 = vmatpush1.msra.mxu0 0.0
        %721 = vmatprep.subr.mxu0 0.0
        %722 = vmatpush1.msra.mxu0 0.0
        %723 = vmatprep.subr.mxu0 0.0
        %724 = vmatpush1.msra.mxu0 0.0
        %725 = vmatprep.subr.mxu0 0.0
        %726 = vmatpush1.msra.mxu0 0.0
        %727 = vmatprep.subr.mxu0 0.0
        %728 = vmatpush1.msra.mxu0 0.0
        %729 = vmatprep.subr.mxu0 0.0
        %730 = vmatpush1.msra.mxu0 0.0
        %731 = vmatprep.subr.mxu0 0.0
        %732 = vmatpush1.msra.mxu0 0.0
        %733 = vmatprep.subr.mxu0 0.0
        %734 = vmatpush1.msra.mxu0 0.0
        %735 = vmatprep.subr.mxu0 0.0
        %736 = vmatpush1.msra.mxu0 0.0
        %737 = vmatprep.subr.mxu0 0.0
        %738 = vmatpush1.msra.mxu0 0.0
        %739 = vmatprep.subr.mxu0 0.0
        %740 = vmatpush1.msra.mxu0 0.0
        %741 = vmatprep.subr.mxu0 0.0
        %742 = vmatpush1.msra.mxu0 0.0
        %743 = vmatprep.subr.mxu0 0.0
        %744 = vmatpush1.msra.mxu0 0.0
        %745 = vmatprep.subr.mxu0 0.0
        %746 = vmatpush1.msra.mxu0 %v713
        %747 = vmatprep.subr.mxu0 0.0
        %748 = vmatpush2.msra.mxu0 0.0
        %749 = vmatprep.subr.mxu0 0.0
        %750 = vmatpush2.msra.mxu0 0.0
        %751 = vmatprep.subr.mxu0 0.0
        %752 = vmatpush2.msra.mxu0 0.0
        %753 = vmatprep.subr.mxu0 0.0
        %754 = vmatpush2.msra.mxu0 0.0
        %755 = vmatprep.subr.mxu0 0.0
        %756 = vmatpush2.msra.mxu0 0.0
        %757 = vmatprep.subr.mxu0 0.0
        %758 = vmatpush2.msra.mxu0 0.0
        %759 = vmatprep.subr.mxu0 0.0
        %760 = vmatpush2.msra.mxu0 0.0
        %761 = vmatprep.subr.mxu0 0.0
        %762 = vmatpush2.msra.mxu0 0.0
        %763 = vmatprep.subr.mxu0 0.0
        %764 = vmatpush2.msra.mxu0 0.0
        %765 = vmatprep.subr.mxu0 0.0
        %766 = vmatpush2.msra.mxu0 0.0
        %767 = vmatprep.subr.mxu0 0.0
        %768 = vmatpush2.msra.mxu0 0.0
        %769 = vmatprep.subr.mxu0 0.0
        %770 = vmatpush2.msra.mxu0 0.0
        %771 = vmatprep.subr.mxu0 0.0
        %772 = vmatpush2.msra.mxu0 0.0
        %773 = vmatprep.subr.mxu0 0.0
        %774 = vmatpush2.msra.mxu0 0.0
        %775 = vmatprep.subr.mxu0 0.0
        %776 = vmatpush2.msra.mxu0 0.0
        %777 = vmatprep.subr.mxu0 0.0
        %778 = vmatpush2.msra.mxu0 0.0
        %779 = vmatprep.mubr.f32.mxu0 0.0
        %780 = vmatmul.mubr.f32.gmra.mxu0 %v617
        %v781 = vpop.f32.mrf.mxu0
        %v782 = vadd.f32 %v458, %v781
        %v783 = vpop.f32.mrf.mxu0
        %784 = vmatprep.mubr.f32.mxu0 0.0
        %785 = vmatmul.mubr.f32.gmra.mxu0 %v620
        %v786 = vpop.f32.mrf.mxu0
        %v787 = vadd.f32 %v463, %v786
        %v788 = vpop.f32.mrf.mxu0
        %789 = vmatprep.mubr.f32.mxu0 0.0
        %790 = vmatmul.mubr.f32.gmra.mxu0 %v623
        %v791 = vpop.f32.mrf.mxu0
        %v792 = vadd.f32 %v468, %v791
        %v793 = vpop.f32.mrf.mxu0
        %794 = vmatprep.mubr.f32.mxu0 0.0
        %795 = vmatmul.mubr.f32.gmra.mxu0 %v626
        %v796 = vpop.f32.mrf.mxu0
        %v797 = vadd.f32 %v473, %v796
        %v798 = vpop.f32.mrf.mxu0
        %799 = vmatprep.mubr.f32.mxu0 0.0
        %800 = vmatmul.mubr.f32.gmra.mxu0 %v629
        %v801 = vpop.f32.mrf.mxu0
        %v802 = vadd.f32 %v478, %v801
        %v803 = vpop.f32.mrf.mxu0
        %804 = vmatprep.mubr.f32.mxu0 0.0
        %805 = vmatmul.mubr.f32.gmra.mxu0 %v632
        %v806 = vpop.f32.mrf.mxu0
        %v807 = vadd.f32 %v483, %v806
        %v808 = vpop.f32.mrf.mxu0
        %809 = vmatprep.mubr.f32.mxu0 0.0
        %810 = vmatmul.mubr.f32.gmra.mxu0 %v635
        %v811 = vpop.f32.mrf.mxu0
        %v812 = vadd.f32 %v488, %v811
        %v813 = vpop.f32.mrf.mxu0
        %814 = vmatprep.mubr.f32.mxu0 0.0
        %815 = vmatmul.mubr.f32.gmra.mxu0 %v638
        %v816 = vpop.f32.mrf.mxu0
        %v817 = vadd.f32 %v493, %v816
        %v818 = vpop.f32.mrf.mxu0
        %819 = vmatprep.mubr.f32.mxu0 0.0
        %820 = vmatmul.mubr.f32.gmra.mxu0 %v641
        %v821 = vpop.f32.mrf.mxu0
        %v822 = vadd.f32 %v498, %v821
        %v823 = vpop.f32.mrf.mxu0
        %824 = vmatprep.mubr.f32.mxu0 0.0
        %825 = vmatmul.mubr.f32.gmra.mxu0 %v644
        %v826 = vpop.f32.mrf.mxu0
        %v827 = vadd.f32 %v503, %v826
        %v828 = vpop.f32.mrf.mxu0
        %829 = vmatprep.mubr.f32.mxu0 0.0
        %830 = vmatmul.mubr.f32.gmra.mxu0 %v647
        %v831 = vpop.f32.mrf.mxu0
        %v832 = vadd.f32 %v508, %v831
        %v833 = vpop.f32.mrf.mxu0
        %834 = vmatprep.mubr.f32.mxu0 0.0
        %835 = vmatmul.mubr.f32.gmra.mxu0 %v650
        %v836 = vpop.f32.mrf.mxu0
        %v837 = vadd.f32 %v513, %v836
        %v838 = vpop.f32.mrf.mxu0
        %839 = vmatprep.mubr.f32.mxu0 0.0
        %840 = vmatmul.mubr.f32.gmra.mxu0 %v653
        %v841 = vpop.f32.mrf.mxu0
        %v842 = vadd.f32 %v518, %v841
        %v843 = vpop.f32.mrf.mxu0
        %844 = vmatprep.mubr.f32.mxu0 0.0
        %845 = vmatmul.mubr.f32.gmra.mxu0 %v656
        %v846 = vpop.f32.mrf.mxu0
        %v847 = vadd.f32 %v523, %v846
        %v848 = vpop.f32.mrf.mxu0
        %849 = vmatprep.mubr.f32.mxu0 0.0
        %850 = vmatmul.mubr.f32.gmra.mxu0 %v659
        %v851 = vpop.f32.mrf.mxu0
        %v852 = vadd.f32 %v528, %v851
        %v853 = vpop.f32.mrf.mxu0
        %854 = vmatprep.mubr.f32.mxu0 0.0
        %855 = vmatmul.mubr.f32.gmra.mxu0 %v662
        %v856 = vpop.f32.mrf.mxu0
        %v857 = vadd.f32 %v533, %v856
        %v858 = vpop.f32.mrf.mxu0
        %859 = vmatprep.mubr.f32.mxu0 0.0
        %860 = vmatmul.mubr.f32.gmra.mxu0 %v665
        %v861 = vpop.f32.mrf.mxu0
        %v862 = vadd.f32 %v538, %v861
        %v863 = vpop.f32.mrf.mxu0
        %864 = vmatprep.mubr.f32.mxu0 0.0
        %865 = vmatmul.mubr.f32.gmra.mxu0 %v668
        %v866 = vpop.f32.mrf.mxu0
        %v867 = vadd.f32 %v543, %v866
        %v868 = vpop.f32.mrf.mxu0
        %869 = vmatprep.mubr.f32.mxu0 0.0
        %870 = vmatmul.mubr.f32.gmra.mxu0 %v671
        %v871 = vpop.f32.mrf.mxu0
        %v872 = vadd.f32 %v548, %v871
        %v873 = vpop.f32.mrf.mxu0
        %874 = vmatprep.mubr.f32.mxu0 0.0
        %875 = vmatmul.mubr.f32.gmra.mxu0 %v674
        %v876 = vpop.f32.mrf.mxu0
        %v877 = vadd.f32 %v553, %v876
        %v878 = vpop.f32.mrf.mxu0
        %879 = vmatprep.mubr.f32.mxu0 0.0
        %880 = vmatmul.mubr.f32.gmra.mxu0 %v677
        %v881 = vpop.f32.mrf.mxu0
        %v882 = vadd.f32 %v558, %v881
        %v883 = vpop.f32.mrf.mxu0
        %884 = vmatprep.mubr.f32.mxu0 0.0
        %885 = vmatmul.mubr.f32.gmra.mxu0 %v680
        %v886 = vpop.f32.mrf.mxu0
        %v887 = vadd.f32 %v563, %v886
        %v888 = vpop.f32.mrf.mxu0
        %889 = vmatprep.mubr.f32.mxu0 0.0
        %890 = vmatmul.mubr.f32.gmra.mxu0 %v683
        %v891 = vpop.f32.mrf.mxu0
        %v892 = vadd.f32 %v568, %v891
        %v893 = vpop.f32.mrf.mxu0
        %894 = vmatprep.mubr.f32.mxu0 0.0
        %895 = vmatmul.mubr.f32.gmra.mxu0 %v686
        %v896 = vpop.f32.mrf.mxu0
        %v897 = vadd.f32 %v573, %v896
        %v898 = vpop.f32.mrf.mxu0
        %899 = vmatprep.mubr.f32.mxu0 0.0
        %900 = vmatmul.mubr.f32.gmra.mxu0 %v689
        %v901 = vpop.f32.mrf.mxu0
        %v902 = vadd.f32 %v578, %v901
        %v903 = vpop.f32.mrf.mxu0
        %904 = vmatprep.mubr.f32.mxu0 0.0
        %905 = vmatmul.mubr.f32.gmra.mxu0 %v692
        %v906 = vpop.f32.mrf.mxu0
        %v907 = vadd.f32 %v583, %v906
        %v908 = vpop.f32.mrf.mxu0
        %909 = vmatprep.mubr.f32.mxu0 0.0
        %910 = vmatmul.mubr.f32.gmra.mxu0 %v695
        %v911 = vpop.f32.mrf.mxu0
        %v912 = vadd.f32 %v588, %v911
        %v913 = vpop.f32.mrf.mxu0
        %914 = vmatprep.mubr.f32.mxu0 0.0
        %915 = vmatmul.mubr.f32.gmra.mxu0 %v698
        %v916 = vpop.f32.mrf.mxu0
        %v917 = vadd.f32 %v593, %v916
        %v918 = vpop.f32.mrf.mxu0
        %919 = vmatprep.mubr.f32.mxu0 0.0
        %920 = vmatmul.mubr.f32.gmra.mxu0 %v701
        %v921 = vpop.f32.mrf.mxu0
        %v922 = vadd.f32 %v598, %v921
        %v923 = vpop.f32.mrf.mxu0
        %924 = vmatprep.mubr.f32.mxu0 0.0
        %925 = vmatmul.mubr.f32.gmra.mxu0 %v704
        %v926 = vpop.f32.mrf.mxu0
        %v927 = vadd.f32 %v603, %v926
        %v928 = vpop.f32.mrf.mxu0
        %929 = vmatprep.mubr.f32.mxu0 0.0
        %930 = vmatmul.mubr.f32.gmra.mxu0 %v707
        %v931 = vpop.f32.mrf.mxu0
        %v932 = vadd.f32 %v608, %v931
        %v933 = vpop.f32.mrf.mxu0
        %934 = vmatprep.mubr.f32.mxu0 0.0
        %935 = vmatmul.mubr.f32.gmra.mxu0 %v710
        %v936 = vpop.f32.mrf.mxu0
        %v937 = vadd.f32 %v613, %v936
        %v938 = vpop.f32.mrf.mxu0
        %939 = vdwg.mxu0
        %v940 = vld [vmem:[%s222 + $0x2] sm:$0xff]
        %v941 = vld [vmem:[%s222 + $0xa] sm:$0xff]
        %v942 = vld [vmem:[%s222 + $0x1a] sm:$0xff]
        %v943 = vld [vmem:[%s222 + $0x22] sm:$0xff]
        %v944 = vld [vmem:[%s222 + $0x32] sm:$0xff]
        %v945 = vld [vmem:[%s222 + $0x3a] sm:$0xff]
        %v946 = vld [vmem:[%s222 + $0x4a] sm:$0xff]
        %v947 = vld [vmem:[%s222 + $0x52] sm:$0xff]
        %v948 = vld [vmem:[%s222 + $0x62] sm:$0xff]
        %v949 = vld [vmem:[%s222 + $0x6a] sm:$0xff]
        %v950 = vld [vmem:[%s222 + $0x7a] sm:$0xff]
        %v951 = vld [vmem:[%s222 + $0x82] sm:$0xff]
        %v952 = vld [vmem:[%s222 + $0x92] sm:$0xff]
        %v953 = vld [vmem:[%s222 + $0x9a] sm:$0xff]
        %v954 = vld [vmem:[%s222 + $0xaa] sm:$0xff]
        %v955 = vld [vmem:[%s222 + $0xb2] sm:$0xff]
        %v956 = vld [vmem:[%s222 + $0xc2] sm:$0xff]
        %v957 = vld [vmem:[%s222 + $0xca] sm:$0xff]
        %v958 = vld [vmem:[%s222 + $0xda] sm:$0xff]
        %v959 = vld [vmem:[%s222 + $0xe2] sm:$0xff]
        %v960 = vld [vmem:[%s222 + $0xf2] sm:$0xff]
        %v961 = vld [vmem:[%s222 + $0xfa] sm:$0xff]
        %v962 = vld [vmem:[%s222 + $0x10a] sm:$0xff]
        %v963 = vld [vmem:[%s222 + $0x112] sm:$0xff]
        %v964 = vld [vmem:[%s222 + $0x122] sm:$0xff]
        %v965 = vld [vmem:[%s222 + $0x12a] sm:$0xff]
        %v966 = vld [vmem:[%s222 + $0x13a] sm:$0xff]
        %v967 = vld [vmem:[%s222 + $0x142] sm:$0xff]
        %v968 = vld [vmem:[%s222 + $0x152] sm:$0xff]
        %v969 = vld [vmem:[%s222 + $0x15a] sm:$0xff]
        %v970 = vld [vmem:[%s222 + $0x16a] sm:$0xff]
        %v971 = vld [vmem:[%s222 + $0x172] sm:$0xff]
        %s972 = scalar_lea.vmem %s1, 8
        %v973 = vld [vmem:[%s972] sm:$0xf]
        %v975 = vsel %vm290, %v940, 0
        %v978 = vsel %vm290, %v941, 0
        %v981 = vsel %vm290, %v942, 0
        %v984 = vsel %vm290, %v943, 0
        %v987 = vsel %vm290, %v944, 0
        %v990 = vsel %vm290, %v945, 0
        %v993 = vsel %vm290, %v946, 0
        %v996 = vsel %vm290, %v947, 0
        %v999 = vsel %vm290, %v948, 0
        %v1002 = vsel %vm290, %v949, 0
        %v1005 = vsel %vm290, %v950, 0
        %v1008 = vsel %vm290, %v951, 0
        %v1011 = vsel %vm290, %v952, 0
        %v1014 = vsel %vm290, %v953, 0
        %v1017 = vsel %vm290, %v954, 0
        %v1020 = vsel %vm290, %v955, 0
        %v1023 = vsel %vm290, %v956, 0
        %v1026 = vsel %vm290, %v957, 0
        %v1029 = vsel %vm290, %v958, 0
        %v1032 = vsel %vm290, %v959, 0
        %v1035 = vsel %vm290, %v960, 0
        %v1038 = vsel %vm290, %v961, 0
        %v1041 = vsel %vm290, %v962, 0
        %v1044 = vsel %vm290, %v963, 0
        %v1047 = vsel %vm290, %v964, 0
        %v1050 = vsel %vm290, %v965, 0
        %v1053 = vsel %vm290, %v966, 0
        %v1056 = vsel %vm290, %v967, 0
        %v1059 = vsel %vm290, %v968, 0
        %v1062 = vsel %vm290, %v969, 0
        %v1065 = vsel %vm290, %v970, 0
        %v1068 = vsel %vm290, %v971, 0
        %v1071 = vsel %vm387, %v973, 0
        %1073 = vmatprep.subr.mxu0 0.0
        %1074 = vmatpush1.msra.mxu0 0.0
        %1075 = vmatprep.subr.mxu0 0.0
        %1076 = vmatpush1.msra.mxu0 0.0
        %1077 = vmatprep.subr.mxu0 0.0
        %1078 = vmatpush1.msra.mxu0 0.0
        %1079 = vmatprep.subr.mxu0 0.0
        %1080 = vmatpush1.msra.mxu0 0.0
        %1081 = vmatprep.subr.mxu0 0.0
        %1082 = vmatpush1.msra.mxu0 0.0
        %1083 = vmatprep.subr.mxu0 0.0
        %1084 = vmatpush1.msra.mxu0 0.0
        %1085 = vmatprep.subr.mxu0 0.0
        %1086 = vmatpush1.msra.mxu0 0.0
        %1087 = vmatprep.subr.mxu0 0.0
        %1088 = vmatpush1.msra.mxu0 0.0
        %1089 = vmatprep.subr.mxu0 0.0
        %1090 = vmatpush1.msra.mxu0 0.0
        %1091 = vmatprep.subr.mxu0 0.0
        %1092 = vmatpush1.msra.mxu0 0.0
        %1093 = vmatprep.subr.mxu0 0.0
        %1094 = vmatpush1.msra.mxu0 0.0
        %1095 = vmatprep.subr.mxu0 0.0
        %1096 = vmatpush1.msra.mxu0 0.0
        %1097 = vmatprep.subr.mxu0 0.0
        %1098 = vmatpush1.msra.mxu0 0.0
        %1099 = vmatprep.subr.mxu0 0.0
        %1100 = vmatpush1.msra.mxu0 0.0
        %1101 = vmatprep.subr.mxu0 0.0
        %1102 = vmatpush1.msra.mxu0 0.0
        %1103 = vmatprep.subr.mxu0 0.0
        %1104 = vmatpush1.msra.mxu0 %v1071
        %1105 = vmatprep.subr.mxu0 0.0
        %1106 = vmatpush2.msra.mxu0 0.0
        %1107 = vmatprep.subr.mxu0 0.0
        %1108 = vmatpush2.msra.mxu0 0.0
        %1109 = vmatprep.subr.mxu0 0.0
        %1110 = vmatpush2.msra.mxu0 0.0
        %1111 = vmatprep.subr.mxu0 0.0
        %1112 = vmatpush2.msra.mxu0 0.0
        %1113 = vmatprep.subr.mxu0 0.0
        %1114 = vmatpush2.msra.mxu0 0.0
        %1115 = vmatprep.subr.mxu0 0.0
        %1116 = vmatpush2.msra.mxu0 0.0
        %1117 = vmatprep.subr.mxu0 0.0
        %1118 = vmatpush2.msra.mxu0 0.0
        %1119 = vmatprep.subr.mxu0 0.0
        %1120 = vmatpush2.msra.mxu0 0.0
        %1121 = vmatprep.subr.mxu0 0.0
        %1122 = vmatpush2.msra.mxu0 0.0
        %1123 = vmatprep.subr.mxu0 0.0
        %1124 = vmatpush2.msra.mxu0 0.0
        %1125 = vmatprep.subr.mxu0 0.0
        %1126 = vmatpush2.msra.mxu0 0.0
        %1127 = vmatprep.subr.mxu0 0.0
        %1128 = vmatpush2.msra.mxu0 0.0
        %1129 = vmatprep.subr.mxu0 0.0
        %1130 = vmatpush2.msra.mxu0 0.0
        %1131 = vmatprep.subr.mxu0 0.0
        %1132 = vmatpush2.msra.mxu0 0.0
        %1133 = vmatprep.subr.mxu0 0.0
        %1134 = vmatpush2.msra.mxu0 0.0
        %1135 = vmatprep.subr.mxu0 0.0
        %1136 = vmatpush2.msra.mxu0 0.0
        %1137 = vmatprep.mubr.f32.mxu0 0.0
        %1138 = vmatmul.mubr.f32.gmra.mxu0 %v975
        %v1139 = vpop.f32.mrf.mxu0
        %v1140 = vadd.f32 0.0, %v1139
        %v1141 = vpop.f32.mrf.mxu0
        %1142 = vmatprep.mubr.f32.mxu0 0.0
        %1143 = vmatmul.mubr.f32.gmra.mxu0 %v978
        %v1144 = vpop.f32.mrf.mxu0
        %v1145 = vadd.f32 0.0, %v1144
        %v1146 = vpop.f32.mrf.mxu0
        %1147 = vmatprep.mubr.f32.mxu0 0.0
        %1148 = vmatmul.mubr.f32.gmra.mxu0 %v981
        %v1149 = vpop.f32.mrf.mxu0
        %v1150 = vadd.f32 0.0, %v1149
        %v1151 = vpop.f32.mrf.mxu0
        %1152 = vmatprep.mubr.f32.mxu0 0.0
        %1153 = vmatmul.mubr.f32.gmra.mxu0 %v984
        %v1154 = vpop.f32.mrf.mxu0
        %v1155 = vadd.f32 0.0, %v1154
        %v1156 = vpop.f32.mrf.mxu0
        %1157 = vmatprep.mubr.f32.mxu0 0.0
        %1158 = vmatmul.mubr.f32.gmra.mxu0 %v987
        %v1159 = vpop.f32.mrf.mxu0
        %v1160 = vadd.f32 0.0, %v1159
        %v1161 = vpop.f32.mrf.mxu0
        %1162 = vmatprep.mubr.f32.mxu0 0.0
        %1163 = vmatmul.mubr.f32.gmra.mxu0 %v990
        %v1164 = vpop.f32.mrf.mxu0
        %v1165 = vadd.f32 0.0, %v1164
        %v1166 = vpop.f32.mrf.mxu0
        %1167 = vmatprep.mubr.f32.mxu0 0.0
        %1168 = vmatmul.mubr.f32.gmra.mxu0 %v993
        %v1169 = vpop.f32.mrf.mxu0
        %v1170 = vadd.f32 0.0, %v1169
        %v1171 = vpop.f32.mrf.mxu0
        %1172 = vmatprep.mubr.f32.mxu0 0.0
        %1173 = vmatmul.mubr.f32.gmra.mxu0 %v996
        %v1174 = vpop.f32.mrf.mxu0
        %v1175 = vadd.f32 0.0, %v1174
        %v1176 = vpop.f32.mrf.mxu0
        %1177 = vmatprep.mubr.f32.mxu0 0.0
        %1178 = vmatmul.mubr.f32.gmra.mxu0 %v999
        %v1179 = vpop.f32.mrf.mxu0
        %v1180 = vadd.f32 0.0, %v1179
        %v1181 = vpop.f32.mrf.mxu0
        %1182 = vmatprep.mubr.f32.mxu0 0.0
        %1183 = vmatmul.mubr.f32.gmra.mxu0 %v1002
        %v1184 = vpop.f32.mrf.mxu0
        %v1185 = vadd.f32 0.0, %v1184
        %v1186 = vpop.f32.mrf.mxu0
        %1187 = vmatprep.mubr.f32.mxu0 0.0
        %1188 = vmatmul.mubr.f32.gmra.mxu0 %v1005
        %v1189 = vpop.f32.mrf.mxu0
        %v1190 = vadd.f32 0.0, %v1189
        %v1191 = vpop.f32.mrf.mxu0
        %1192 = vmatprep.mubr.f32.mxu0 0.0
        %1193 = vmatmul.mubr.f32.gmra.mxu0 %v1008
        %v1194 = vpop.f32.mrf.mxu0
        %v1195 = vadd.f32 0.0, %v1194
        %v1196 = vpop.f32.mrf.mxu0
        %1197 = vmatprep.mubr.f32.mxu0 0.0
        %1198 = vmatmul.mubr.f32.gmra.mxu0 %v1011
        %v1199 = vpop.f32.mrf.mxu0
        %v1200 = vadd.f32 0.0, %v1199
        %v1201 = vpop.f32.mrf.mxu0
        %1202 = vmatprep.mubr.f32.mxu0 0.0
        %1203 = vmatmul.mubr.f32.gmra.mxu0 %v1014
        %v1204 = vpop.f32.mrf.mxu0
        %v1205 = vadd.f32 0.0, %v1204
        %v1206 = vpop.f32.mrf.mxu0
        %1207 = vmatprep.mubr.f32.mxu0 0.0
        %1208 = vmatmul.mubr.f32.gmra.mxu0 %v1017
        %v1209 = vpop.f32.mrf.mxu0
        %v1210 = vadd.f32 0.0, %v1209
        %v1211 = vpop.f32.mrf.mxu0
        %1212 = vmatprep.mubr.f32.mxu0 0.0
        %1213 = vmatmul.mubr.f32.gmra.mxu0 %v1020
        %v1214 = vpop.f32.mrf.mxu0
        %v1215 = vadd.f32 0.0, %v1214
        %v1216 = vpop.f32.mrf.mxu0
        %1217 = vmatprep.mubr.f32.mxu0 0.0
        %1218 = vmatmul.mubr.f32.gmra.mxu0 %v1023
        %v1219 = vpop.f32.mrf.mxu0
        %v1220 = vadd.f32 0.0, %v1219
        %v1221 = vpop.f32.mrf.mxu0
        %1222 = vmatprep.mubr.f32.mxu0 0.0
        %1223 = vmatmul.mubr.f32.gmra.mxu0 %v1026
        %v1224 = vpop.f32.mrf.mxu0
        %v1225 = vadd.f32 0.0, %v1224
        %v1226 = vpop.f32.mrf.mxu0
        %1227 = vmatprep.mubr.f32.mxu0 0.0
        %1228 = vmatmul.mubr.f32.gmra.mxu0 %v1029
        %v1229 = vpop.f32.mrf.mxu0
        %v1230 = vadd.f32 0.0, %v1229
        %v1231 = vpop.f32.mrf.mxu0
        %1232 = vmatprep.mubr.f32.mxu0 0.0
        %1233 = vmatmul.mubr.f32.gmra.mxu0 %v1032
        %v1234 = vpop.f32.mrf.mxu0
        %v1235 = vadd.f32 0.0, %v1234
        %v1236 = vpop.f32.mrf.mxu0
        %1237 = vmatprep.mubr.f32.mxu0 0.0
        %1238 = vmatmul.mubr.f32.gmra.mxu0 %v1035
        %v1239 = vpop.f32.mrf.mxu0
        %v1240 = vadd.f32 0.0, %v1239
        %v1241 = vpop.f32.mrf.mxu0
        %1242 = vmatprep.mubr.f32.mxu0 0.0
        %1243 = vmatmul.mubr.f32.gmra.mxu0 %v1038
        %v1244 = vpop.f32.mrf.mxu0
        %v1245 = vadd.f32 0.0, %v1244
        %v1246 = vpop.f32.mrf.mxu0
        %1247 = vmatprep.mubr.f32.mxu0 0.0
        %1248 = vmatmul.mubr.f32.gmra.mxu0 %v1041
        %v1249 = vpop.f32.mrf.mxu0
        %v1250 = vadd.f32 0.0, %v1249
        %v1251 = vpop.f32.mrf.mxu0
        %1252 = vmatprep.mubr.f32.mxu0 0.0
        %1253 = vmatmul.mubr.f32.gmra.mxu0 %v1044
        %v1254 = vpop.f32.mrf.mxu0
        %v1255 = vadd.f32 0.0, %v1254
        %v1256 = vpop.f32.mrf.mxu0
        %1257 = vmatprep.mubr.f32.mxu0 0.0
        %1258 = vmatmul.mubr.f32.gmra.mxu0 %v1047
        %v1259 = vpop.f32.mrf.mxu0
        %v1260 = vadd.f32 0.0, %v1259
        %v1261 = vpop.f32.mrf.mxu0
        %1262 = vmatprep.mubr.f32.mxu0 0.0
        %1263 = vmatmul.mubr.f32.gmra.mxu0 %v1050
        %v1264 = vpop.f32.mrf.mxu0
        %v1265 = vadd.f32 0.0, %v1264
        %v1266 = vpop.f32.mrf.mxu0
        %1267 = vmatprep.mubr.f32.mxu0 0.0
        %1268 = vmatmul.mubr.f32.gmra.mxu0 %v1053
        %v1269 = vpop.f32.mrf.mxu0
        %v1270 = vadd.f32 0.0, %v1269
        %v1271 = vpop.f32.mrf.mxu0
        %1272 = vmatprep.mubr.f32.mxu0 0.0
        %1273 = vmatmul.mubr.f32.gmra.mxu0 %v1056
        %v1274 = vpop.f32.mrf.mxu0
        %v1275 = vadd.f32 0.0, %v1274
        %v1276 = vpop.f32.mrf.mxu0
        %1277 = vmatprep.mubr.f32.mxu0 0.0
        %1278 = vmatmul.mubr.f32.gmra.mxu0 %v1059
        %v1279 = vpop.f32.mrf.mxu0
        %v1280 = vadd.f32 0.0, %v1279
        %v1281 = vpop.f32.mrf.mxu0
        %1282 = vmatprep.mubr.f32.mxu0 0.0
        %1283 = vmatmul.mubr.f32.gmra.mxu0 %v1062
        %v1284 = vpop.f32.mrf.mxu0
        %v1285 = vadd.f32 0.0, %v1284
        %v1286 = vpop.f32.mrf.mxu0
        %1287 = vmatprep.mubr.f32.mxu0 0.0
        %1288 = vmatmul.mubr.f32.gmra.mxu0 %v1065
        %v1289 = vpop.f32.mrf.mxu0
        %v1290 = vadd.f32 0.0, %v1289
        %v1291 = vpop.f32.mrf.mxu0
        %1292 = vmatprep.mubr.f32.mxu0 0.0
        %1293 = vmatmul.mubr.f32.gmra.mxu0 %v1068
        %v1294 = vpop.f32.mrf.mxu0
        %v1295 = vadd.f32 0.0, %v1294
        %v1296 = vpop.f32.mrf.mxu0
        %1297 = vdwg.mxu0
        %v1298 = vadd.f32 %v782, %v1140
        %v1299 = vadd.f32 %v787, %v1145
        %v1300 = vadd.f32 %v792, %v1150
        %v1301 = vadd.f32 %v797, %v1155
        %v1302 = vadd.f32 %v802, %v1160
        %v1303 = vadd.f32 %v807, %v1165
        %v1304 = vadd.f32 %v812, %v1170
        %v1305 = vadd.f32 %v817, %v1175
        %v1306 = vadd.f32 %v822, %v1180
        %v1307 = vadd.f32 %v827, %v1185
        %v1308 = vadd.f32 %v832, %v1190
        %v1309 = vadd.f32 %v837, %v1195
        %v1310 = vadd.f32 %v842, %v1200
        %v1311 = vadd.f32 %v847, %v1205
        %v1312 = vadd.f32 %v852, %v1210
        %v1313 = vadd.f32 %v857, %v1215
        %v1314 = vadd.f32 %v862, %v1220
        %v1315 = vadd.f32 %v867, %v1225
        %v1316 = vadd.f32 %v872, %v1230
        %v1317 = vadd.f32 %v877, %v1235
        %v1318 = vadd.f32 %v882, %v1240
        %v1319 = vadd.f32 %v887, %v1245
        %v1320 = vadd.f32 %v892, %v1250
        %v1321 = vadd.f32 %v897, %v1255
        %v1322 = vadd.f32 %v902, %v1260
        %v1323 = vadd.f32 %v907, %v1265
        %v1324 = vadd.f32 %v912, %v1270
        %v1325 = vadd.f32 %v917, %v1275
        %v1326 = vadd.f32 %v922, %v1280
        %v1327 = vadd.f32 %v927, %v1285
        %v1328 = vadd.f32 %v932, %v1290
        %v1329 = vadd.f32 %v937, %v1295
        %s1330 = scalar_lea.vmem %s222, 24
        %v1331 = vld [vmem:[%s1330] sm:$0xff]
        %v1332 = vld [vmem:[%s1330 + $0x8] sm:$0xff]
        %v1333 = vld [vmem:[%s1330 + $0x18] sm:$0xff]
        %v1334 = vld [vmem:[%s1330 + $0x20] sm:$0xff]
        %v1335 = vld [vmem:[%s1330 + $0x30] sm:$0xff]
        %v1336 = vld [vmem:[%s1330 + $0x38] sm:$0xff]
        %v1337 = vld [vmem:[%s1330 + $0x48] sm:$0xff]
        %v1338 = vld [vmem:[%s1330 + $0x50] sm:$0xff]
        %v1339 = vld [vmem:[%s1330 + $0x60] sm:$0xff]
        %v1340 = vld [vmem:[%s1330 + $0x68] sm:$0xff]
        %v1341 = vld [vmem:[%s1330 + $0x78] sm:$0xff]
        %v1342 = vld [vmem:[%s1330 + $0x80] sm:$0xff]
        %v1343 = vld [vmem:[%s1330 + $0x90] sm:$0xff]
        %v1344 = vld [vmem:[%s1330 + $0x98] sm:$0xff]
        %v1345 = vld [vmem:[%s1330 + $0xa8] sm:$0xff]
        %v1346 = vld [vmem:[%s1330 + $0xb0] sm:$0xff]
        %v1347 = vld [vmem:[%s1330 + $0xc0] sm:$0xff]
        %v1348 = vld [vmem:[%s1330 + $0xc8] sm:$0xff]
        %v1349 = vld [vmem:[%s1330 + $0xd8] sm:$0xff]
        %v1350 = vld [vmem:[%s1330 + $0xe0] sm:$0xff]
        %v1351 = vld [vmem:[%s1330 + $0xf0] sm:$0xff]
        %v1352 = vld [vmem:[%s1330 + $0xf8] sm:$0xff]
        %v1353 = vld [vmem:[%s1330 + $0x108] sm:$0xff]
        %v1354 = vld [vmem:[%s1330 + $0x110] sm:$0xff]
        %v1355 = vld [vmem:[%s1330 + $0x120] sm:$0xff]
        %v1356 = vld [vmem:[%s1330 + $0x128] sm:$0xff]
        %v1357 = vld [vmem:[%s1330 + $0x138] sm:$0xff]
        %v1358 = vld [vmem:[%s1330 + $0x140] sm:$0xff]
        %v1359 = vld [vmem:[%s1330 + $0x150] sm:$0xff]
        %v1360 = vld [vmem:[%s1330 + $0x158] sm:$0xff]
        %v1361 = vld [vmem:[%s1330 + $0x168] sm:$0xff]
        %v1362 = vld [vmem:[%s1330 + $0x170] sm:$0xff]
        %s1363 = scalar_lea.vmem %s1, 12
        %v1364 = vld [vmem:[%s1363] sm:$0xf]
        %v1366 = vsel %vm290, %v1331, 0
        %v1369 = vsel %vm290, %v1332, 0
        %v1372 = vsel %vm290, %v1333, 0
        %v1375 = vsel %vm290, %v1334, 0
        %v1378 = vsel %vm290, %v1335, 0
        %v1381 = vsel %vm290, %v1336, 0
        %v1384 = vsel %vm290, %v1337, 0
        %v1387 = vsel %vm290, %v1338, 0
        %v1390 = vsel %vm290, %v1339, 0
        %v1393 = vsel %vm290, %v1340, 0
        %v1396 = vsel %vm290, %v1341, 0
        %v1399 = vsel %vm290, %v1342, 0
        %v1402 = vsel %vm290, %v1343, 0
        %v1405 = vsel %vm290, %v1344, 0
        %v1408 = vsel %vm290, %v1345, 0
        %v1411 = vsel %vm290, %v1346, 0
        %v1414 = vsel %vm290, %v1347, 0
        %v1417 = vsel %vm290, %v1348, 0
        %v1420 = vsel %vm290, %v1349, 0
        %v1423 = vsel %vm290, %v1350, 0
        %v1426 = vsel %vm290, %v1351, 0
        %v1429 = vsel %vm290, %v1352, 0
        %v1432 = vsel %vm290, %v1353, 0
        %v1435 = vsel %vm290, %v1354, 0
        %v1438 = vsel %vm290, %v1355, 0
        %v1441 = vsel %vm290, %v1356, 0
        %v1444 = vsel %vm290, %v1357, 0
        %v1447 = vsel %vm290, %v1358, 0
        %v1450 = vsel %vm290, %v1359, 0
        %v1453 = vsel %vm290, %v1360, 0
        %v1456 = vsel %vm290, %v1361, 0
        %v1459 = vsel %vm290, %v1362, 0
        %v1462 = vsel %vm387, %v1364, 0
        %1464 = vmatprep.subr.mxu0 0.0
        %1465 = vmatpush1.msra.mxu0 0.0
        %1466 = vmatprep.subr.mxu0 0.0
        %1467 = vmatpush1.msra.mxu0 0.0
        %1468 = vmatprep.subr.mxu0 0.0
        %1469 = vmatpush1.msra.mxu0 0.0
        %1470 = vmatprep.subr.mxu0 0.0
        %1471 = vmatpush1.msra.mxu0 0.0
        %1472 = vmatprep.subr.mxu0 0.0
        %1473 = vmatpush1.msra.mxu0 0.0
        %1474 = vmatprep.subr.mxu0 0.0
        %1475 = vmatpush1.msra.mxu0 0.0
        %1476 = vmatprep.subr.mxu0 0.0
        %1477 = vmatpush1.msra.mxu0 0.0
        %1478 = vmatprep.subr.mxu0 0.0
        %1479 = vmatpush1.msra.mxu0 0.0
        %1480 = vmatprep.subr.mxu0 0.0
        %1481 = vmatpush1.msra.mxu0 0.0
        %1482 = vmatprep.subr.mxu0 0.0
        %1483 = vmatpush1.msra.mxu0 0.0
        %1484 = vmatprep.subr.mxu0 0.0
        %1485 = vmatpush1.msra.mxu0 0.0
        %1486 = vmatprep.subr.mxu0 0.0
        %1487 = vmatpush1.msra.mxu0 0.0
        %1488 = vmatprep.subr.mxu0 0.0
        %1489 = vmatpush1.msra.mxu0 0.0
        %1490 = vmatprep.subr.mxu0 0.0
        %1491 = vmatpush1.msra.mxu0 0.0
        %1492 = vmatprep.subr.mxu0 0.0
        %1493 = vmatpush1.msra.mxu0 0.0
        %1494 = vmatprep.subr.mxu0 0.0
        %1495 = vmatpush1.msra.mxu0 %v1462
        %1496 = vmatprep.subr.mxu0 0.0
        %1497 = vmatpush2.msra.mxu0 0.0
        %1498 = vmatprep.subr.mxu0 0.0
        %1499 = vmatpush2.msra.mxu0 0.0
        %1500 = vmatprep.subr.mxu0 0.0
        %1501 = vmatpush2.msra.mxu0 0.0
        %1502 = vmatprep.subr.mxu0 0.0
        %1503 = vmatpush2.msra.mxu0 0.0
        %1504 = vmatprep.subr.mxu0 0.0
        %1505 = vmatpush2.msra.mxu0 0.0
        %1506 = vmatprep.subr.mxu0 0.0
        %1507 = vmatpush2.msra.mxu0 0.0
        %1508 = vmatprep.subr.mxu0 0.0
        %1509 = vmatpush2.msra.mxu0 0.0
        %1510 = vmatprep.subr.mxu0 0.0
        %1511 = vmatpush2.msra.mxu0 0.0
        %1512 = vmatprep.subr.mxu0 0.0
        %1513 = vmatpush2.msra.mxu0 0.0
        %1514 = vmatprep.subr.mxu0 0.0
        %1515 = vmatpush2.msra.mxu0 0.0
        %1516 = vmatprep.subr.mxu0 0.0
        %1517 = vmatpush2.msra.mxu0 0.0
        %1518 = vmatprep.subr.mxu0 0.0
        %1519 = vmatpush2.msra.mxu0 0.0
        %1520 = vmatprep.subr.mxu0 0.0
        %1521 = vmatpush2.msra.mxu0 0.0
        %1522 = vmatprep.subr.mxu0 0.0
        %1523 = vmatpush2.msra.mxu0 0.0
        %1524 = vmatprep.subr.mxu0 0.0
        %1525 = vmatpush2.msra.mxu0 0.0
        %1526 = vmatprep.subr.mxu0 0.0
        %1527 = vmatpush2.msra.mxu0 0.0
        %1528 = vmatprep.mubr.f32.mxu0 0.0
        %1529 = vmatmul.mubr.f32.gmra.mxu0 %v1366
        %v1530 = vpop.f32.mrf.mxu0
        %v1531 = vadd.f32 0.0, %v1530
        %v1532 = vpop.f32.mrf.mxu0
        %1533 = vmatprep.mubr.f32.mxu0 0.0
        %1534 = vmatmul.mubr.f32.gmra.mxu0 %v1369
        %v1535 = vpop.f32.mrf.mxu0
        %v1536 = vadd.f32 0.0, %v1535
        %v1537 = vpop.f32.mrf.mxu0
        %1538 = vmatprep.mubr.f32.mxu0 0.0
        %1539 = vmatmul.mubr.f32.gmra.mxu0 %v1372
        %v1540 = vpop.f32.mrf.mxu0
        %v1541 = vadd.f32 0.0, %v1540
        %v1542 = vpop.f32.mrf.mxu0
        %1543 = vmatprep.mubr.f32.mxu0 0.0
        %1544 = vmatmul.mubr.f32.gmra.mxu0 %v1375
        %v1545 = vpop.f32.mrf.mxu0
        %v1546 = vadd.f32 0.0, %v1545
        %v1547 = vpop.f32.mrf.mxu0
        %1548 = vmatprep.mubr.f32.mxu0 0.0
        %1549 = vmatmul.mubr.f32.gmra.mxu0 %v1378
        %v1550 = vpop.f32.mrf.mxu0
        %v1551 = vadd.f32 0.0, %v1550
        %v1552 = vpop.f32.mrf.mxu0
        %1553 = vmatprep.mubr.f32.mxu0 0.0
        %1554 = vmatmul.mubr.f32.gmra.mxu0 %v1381
        %v1555 = vpop.f32.mrf.mxu0
        %v1556 = vadd.f32 0.0, %v1555
        %v1557 = vpop.f32.mrf.mxu0
        %1558 = vmatprep.mubr.f32.mxu0 0.0
        %1559 = vmatmul.mubr.f32.gmra.mxu0 %v1384
        %v1560 = vpop.f32.mrf.mxu0
        %v1561 = vadd.f32 0.0, %v1560
        %v1562 = vpop.f32.mrf.mxu0
        %1563 = vmatprep.mubr.f32.mxu0 0.0
        %1564 = vmatmul.mubr.f32.gmra.mxu0 %v1387
        %v1565 = vpop.f32.mrf.mxu0
        %v1566 = vadd.f32 0.0, %v1565
        %v1567 = vpop.f32.mrf.mxu0
        %1568 = vmatprep.mubr.f32.mxu0 0.0
        %1569 = vmatmul.mubr.f32.gmra.mxu0 %v1390
        %v1570 = vpop.f32.mrf.mxu0
        %v1571 = vadd.f32 0.0, %v1570
        %v1572 = vpop.f32.mrf.mxu0
        %1573 = vmatprep.mubr.f32.mxu0 0.0
        %1574 = vmatmul.mubr.f32.gmra.mxu0 %v1393
        %v1575 = vpop.f32.mrf.mxu0
        %v1576 = vadd.f32 0.0, %v1575
        %v1577 = vpop.f32.mrf.mxu0
        %1578 = vmatprep.mubr.f32.mxu0 0.0
        %1579 = vmatmul.mubr.f32.gmra.mxu0 %v1396
        %v1580 = vpop.f32.mrf.mxu0
        %v1581 = vadd.f32 0.0, %v1580
        %v1582 = vpop.f32.mrf.mxu0
        %1583 = vmatprep.mubr.f32.mxu0 0.0
        %1584 = vmatmul.mubr.f32.gmra.mxu0 %v1399
        %v1585 = vpop.f32.mrf.mxu0
        %v1586 = vadd.f32 0.0, %v1585
        %v1587 = vpop.f32.mrf.mxu0
        %1588 = vmatprep.mubr.f32.mxu0 0.0
        %1589 = vmatmul.mubr.f32.gmra.mxu0 %v1402
        %v1590 = vpop.f32.mrf.mxu0
        %v1591 = vadd.f32 0.0, %v1590
        %v1592 = vpop.f32.mrf.mxu0
        %1593 = vmatprep.mubr.f32.mxu0 0.0
        %1594 = vmatmul.mubr.f32.gmra.mxu0 %v1405
        %v1595 = vpop.f32.mrf.mxu0
        %v1596 = vadd.f32 0.0, %v1595
        %v1597 = vpop.f32.mrf.mxu0
        %1598 = vmatprep.mubr.f32.mxu0 0.0
        %1599 = vmatmul.mubr.f32.gmra.mxu0 %v1408
        %v1600 = vpop.f32.mrf.mxu0
        %v1601 = vadd.f32 0.0, %v1600
        %v1602 = vpop.f32.mrf.mxu0
        %1603 = vmatprep.mubr.f32.mxu0 0.0
        %1604 = vmatmul.mubr.f32.gmra.mxu0 %v1411
        %v1605 = vpop.f32.mrf.mxu0
        %v1606 = vadd.f32 0.0, %v1605
        %v1607 = vpop.f32.mrf.mxu0
        %1608 = vmatprep.mubr.f32.mxu0 0.0
        %1609 = vmatmul.mubr.f32.gmra.mxu0 %v1414
        %v1610 = vpop.f32.mrf.mxu0
        %v1611 = vadd.f32 0.0, %v1610
        %v1612 = vpop.f32.mrf.mxu0
        %1613 = vmatprep.mubr.f32.mxu0 0.0
        %1614 = vmatmul.mubr.f32.gmra.mxu0 %v1417
        %v1615 = vpop.f32.mrf.mxu0
        %v1616 = vadd.f32 0.0, %v1615
        %v1617 = vpop.f32.mrf.mxu0
        %1618 = vmatprep.mubr.f32.mxu0 0.0
        %1619 = vmatmul.mubr.f32.gmra.mxu0 %v1420
        %v1620 = vpop.f32.mrf.mxu0
        %v1621 = vadd.f32 0.0, %v1620
        %v1622 = vpop.f32.mrf.mxu0
        %1623 = vmatprep.mubr.f32.mxu0 0.0
        %1624 = vmatmul.mubr.f32.gmra.mxu0 %v1423
        %v1625 = vpop.f32.mrf.mxu0
        %v1626 = vadd.f32 0.0, %v1625
        %v1627 = vpop.f32.mrf.mxu0
        %1628 = vmatprep.mubr.f32.mxu0 0.0
        %1629 = vmatmul.mubr.f32.gmra.mxu0 %v1426
        %v1630 = vpop.f32.mrf.mxu0
        %v1631 = vadd.f32 0.0, %v1630
        %v1632 = vpop.f32.mrf.mxu0
        %1633 = vmatprep.mubr.f32.mxu0 0.0
        %1634 = vmatmul.mubr.f32.gmra.mxu0 %v1429
        %v1635 = vpop.f32.mrf.mxu0
        %v1636 = vadd.f32 0.0, %v1635
        %v1637 = vpop.f32.mrf.mxu0
        %1638 = vmatprep.mubr.f32.mxu0 0.0
        %1639 = vmatmul.mubr.f32.gmra.mxu0 %v1432
        %v1640 = vpop.f32.mrf.mxu0
        %v1641 = vadd.f32 0.0, %v1640
        %v1642 = vpop.f32.mrf.mxu0
        %1643 = vmatprep.mubr.f32.mxu0 0.0
        %1644 = vmatmul.mubr.f32.gmra.mxu0 %v1435
        %v1645 = vpop.f32.mrf.mxu0
        %v1646 = vadd.f32 0.0, %v1645
        %v1647 = vpop.f32.mrf.mxu0
        %1648 = vmatprep.mubr.f32.mxu0 0.0
        %1649 = vmatmul.mubr.f32.gmra.mxu0 %v1438
        %v1650 = vpop.f32.mrf.mxu0
        %v1651 = vadd.f32 0.0, %v1650
        %v1652 = vpop.f32.mrf.mxu0
        %1653 = vmatprep.mubr.f32.mxu0 0.0
        %1654 = vmatmul.mubr.f32.gmra.mxu0 %v1441
        %v1655 = vpop.f32.mrf.mxu0
        %v1656 = vadd.f32 0.0, %v1655
        %v1657 = vpop.f32.mrf.mxu0
        %1658 = vmatprep.mubr.f32.mxu0 0.0
        %1659 = vmatmul.mubr.f32.gmra.mxu0 %v1444
        %v1660 = vpop.f32.mrf.mxu0
        %v1661 = vadd.f32 0.0, %v1660
        %v1662 = vpop.f32.mrf.mxu0
        %1663 = vmatprep.mubr.f32.mxu0 0.0
        %1664 = vmatmul.mubr.f32.gmra.mxu0 %v1447
        %v1665 = vpop.f32.mrf.mxu0
        %v1666 = vadd.f32 0.0, %v1665
        %v1667 = vpop.f32.mrf.mxu0
        %1668 = vmatprep.mubr.f32.mxu0 0.0
        %1669 = vmatmul.mubr.f32.gmra.mxu0 %v1450
        %v1670 = vpop.f32.mrf.mxu0
        %v1671 = vadd.f32 0.0, %v1670
        %v1672 = vpop.f32.mrf.mxu0
        %1673 = vmatprep.mubr.f32.mxu0 0.0
        %1674 = vmatmul.mubr.f32.gmra.mxu0 %v1453
        %v1675 = vpop.f32.mrf.mxu0
        %v1676 = vadd.f32 0.0, %v1675
        %v1677 = vpop.f32.mrf.mxu0
        %1678 = vmatprep.mubr.f32.mxu0 0.0
        %1679 = vmatmul.mubr.f32.gmra.mxu0 %v1456
        %v1680 = vpop.f32.mrf.mxu0
        %v1681 = vadd.f32 0.0, %v1680
        %v1682 = vpop.f32.mrf.mxu0
        %1683 = vmatprep.mubr.f32.mxu0 0.0
        %1684 = vmatmul.mubr.f32.gmra.mxu0 %v1459
        %v1685 = vpop.f32.mrf.mxu0
        %v1686 = vadd.f32 0.0, %v1685
        %v1687 = vpop.f32.mrf.mxu0
        %1688 = vdwg.mxu0
        %v1689 = vadd.f32 %v1298, %v1531
        %v1690 = vadd.f32 %v1299, %v1536
        %v1691 = vadd.f32 %v1300, %v1541
        %v1692 = vadd.f32 %v1301, %v1546
        %v1693 = vadd.f32 %v1302, %v1551
        %v1694 = vadd.f32 %v1303, %v1556
        %v1695 = vadd.f32 %v1304, %v1561
        %v1696 = vadd.f32 %v1305, %v1566
        %v1697 = vadd.f32 %v1306, %v1571
        %v1698 = vadd.f32 %v1307, %v1576
        %v1699 = vadd.f32 %v1308, %v1581
        %v1700 = vadd.f32 %v1309, %v1586
        %v1701 = vadd.f32 %v1310, %v1591
        %v1702 = vadd.f32 %v1311, %v1596
        %v1703 = vadd.f32 %v1312, %v1601
        %v1704 = vadd.f32 %v1313, %v1606
        %v1705 = vadd.f32 %v1314, %v1611
        %v1706 = vadd.f32 %v1315, %v1616
        %v1707 = vadd.f32 %v1316, %v1621
        %v1708 = vadd.f32 %v1317, %v1626
        %v1709 = vadd.f32 %v1318, %v1631
        %v1710 = vadd.f32 %v1319, %v1636
        %v1711 = vadd.f32 %v1320, %v1641
        %v1712 = vadd.f32 %v1321, %v1646
        %v1713 = vadd.f32 %v1322, %v1651
        %v1714 = vadd.f32 %v1323, %v1656
        %v1715 = vadd.f32 %v1324, %v1661
        %v1716 = vadd.f32 %v1325, %v1666
        %v1717 = vadd.f32 %v1326, %v1671
        %v1718 = vadd.f32 %v1327, %v1676
        %v1719 = vadd.f32 %v1328, %v1681
        %v1720 = vadd.f32 %v1329, %v1686
        %v1721 = vld [vmem:[%s1330 + $0x1] sm:$0xff]
        %v1722 = vld [vmem:[%s1330 + $0x9] sm:$0xff]
        %v1723 = vld [vmem:[%s1330 + $0x19] sm:$0xff]
        %v1724 = vld [vmem:[%s1330 + $0x21] sm:$0xff]
        %v1725 = vld [vmem:[%s1330 + $0x31] sm:$0xff]
        %v1726 = vld [vmem:[%s1330 + $0x39] sm:$0xff]
        %v1727 = vld [vmem:[%s1330 + $0x49] sm:$0xff]
        %v1728 = vld [vmem:[%s1330 + $0x51] sm:$0xff]
        %v1729 = vld [vmem:[%s1330 + $0x61] sm:$0xff]
        %v1730 = vld [vmem:[%s1330 + $0x69] sm:$0xff]
        %v1731 = vld [vmem:[%s1330 + $0x79] sm:$0xff]
        %v1732 = vld [vmem:[%s1330 + $0x81] sm:$0xff]
        %v1733 = vld [vmem:[%s1330 + $0x91] sm:$0xff]
        %v1734 = vld [vmem:[%s1330 + $0x99] sm:$0xff]
        %v1735 = vld [vmem:[%s1330 + $0xa9] sm:$0xff]
        %v1736 = vld [vmem:[%s1330 + $0xb1] sm:$0xff]
        %v1737 = vld [vmem:[%s1330 + $0xc1] sm:$0xff]
        %v1738 = vld [vmem:[%s1330 + $0xc9] sm:$0xff]
        %v1739 = vld [vmem:[%s1330 + $0xd9] sm:$0xff]
        %v1740 = vld [vmem:[%s1330 + $0xe1] sm:$0xff]
        %v1741 = vld [vmem:[%s1330 + $0xf1] sm:$0xff]
        %v1742 = vld [vmem:[%s1330 + $0xf9] sm:$0xff]
        %v1743 = vld [vmem:[%s1330 + $0x109] sm:$0xff]
        %v1744 = vld [vmem:[%s1330 + $0x111] sm:$0xff]
        %v1745 = vld [vmem:[%s1330 + $0x121] sm:$0xff]
        %v1746 = vld [vmem:[%s1330 + $0x129] sm:$0xff]
        %v1747 = vld [vmem:[%s1330 + $0x139] sm:$0xff]
        %v1748 = vld [vmem:[%s1330 + $0x141] sm:$0xff]
        %v1749 = vld [vmem:[%s1330 + $0x151] sm:$0xff]
        %v1750 = vld [vmem:[%s1330 + $0x159] sm:$0xff]
        %v1751 = vld [vmem:[%s1330 + $0x169] sm:$0xff]
        %v1752 = vld [vmem:[%s1330 + $0x171] sm:$0xff]
        %s1753 = scalar_lea.vmem %s1, 16
        %v1754 = vld [vmem:[%s1753] sm:$0xf]
        %v1756 = vsel %vm290, %v1721, 0
        %v1759 = vsel %vm290, %v1722, 0
        %v1762 = vsel %vm290, %v1723, 0
        %v1765 = vsel %vm290, %v1724, 0
        %v1768 = vsel %vm290, %v1725, 0
        %v1771 = vsel %vm290, %v1726, 0
        %v1774 = vsel %vm290, %v1727, 0
        %v1777 = vsel %vm290, %v1728, 0
        %v1780 = vsel %vm290, %v1729, 0
        %v1783 = vsel %vm290, %v1730, 0
        %v1786 = vsel %vm290, %v1731, 0
        %v1789 = vsel %vm290, %v1732, 0
        %v1792 = vsel %vm290, %v1733, 0
        %v1795 = vsel %vm290, %v1734, 0
        %v1798 = vsel %vm290, %v1735, 0
        %v1801 = vsel %vm290, %v1736, 0
        %v1804 = vsel %vm290, %v1737, 0
        %v1807 = vsel %vm290, %v1738, 0
        %v1810 = vsel %vm290, %v1739, 0
        %v1813 = vsel %vm290, %v1740, 0
        %v1816 = vsel %vm290, %v1741, 0
        %v1819 = vsel %vm290, %v1742, 0
        %v1822 = vsel %vm290, %v1743, 0
        %v1825 = vsel %vm290, %v1744, 0
        %v1828 = vsel %vm290, %v1745, 0
        %v1831 = vsel %vm290, %v1746, 0
        %v1834 = vsel %vm290, %v1747, 0
        %v1837 = vsel %vm290, %v1748, 0
        %v1840 = vsel %vm290, %v1749, 0
        %v1843 = vsel %vm290, %v1750, 0
        %v1846 = vsel %vm290, %v1751, 0
        %v1849 = vsel %vm290, %v1752, 0
        %v1852 = vsel %vm387, %v1754, 0
        %1854 = vmatprep.subr.mxu0 0.0
        %1855 = vmatpush1.msra.mxu0 0.0
        %1856 = vmatprep.subr.mxu0 0.0
        %1857 = vmatpush1.msra.mxu0 0.0
        %1858 = vmatprep.subr.mxu0 0.0
        %1859 = vmatpush1.msra.mxu0 0.0
        %1860 = vmatprep.subr.mxu0 0.0
        %1861 = vmatpush1.msra.mxu0 0.0
        %1862 = vmatprep.subr.mxu0 0.0
        %1863 = vmatpush1.msra.mxu0 0.0
        %1864 = vmatprep.subr.mxu0 0.0
        %1865 = vmatpush1.msra.mxu0 0.0
        %1866 = vmatprep.subr.mxu0 0.0
        %1867 = vmatpush1.msra.mxu0 0.0
        %1868 = vmatprep.subr.mxu0 0.0
        %1869 = vmatpush1.msra.mxu0 0.0
        %1870 = vmatprep.subr.mxu0 0.0
        %1871 = vmatpush1.msra.mxu0 0.0
        %1872 = vmatprep.subr.mxu0 0.0
        %1873 = vmatpush1.msra.mxu0 0.0
        %1874 = vmatprep.subr.mxu0 0.0
        %1875 = vmatpush1.msra.mxu0 0.0
        %1876 = vmatprep.subr.mxu0 0.0
        %1877 = vmatpush1.msra.mxu0 0.0
        %1878 = vmatprep.subr.mxu0 0.0
        %1879 = vmatpush1.msra.mxu0 0.0
        %1880 = vmatprep.subr.mxu0 0.0
        %1881 = vmatpush1.msra.mxu0 0.0
        %1882 = vmatprep.subr.mxu0 0.0
        %1883 = vmatpush1.msra.mxu0 0.0
        %1884 = vmatprep.subr.mxu0 0.0
        %1885 = vmatpush1.msra.mxu0 %v1852
        %1886 = vmatprep.subr.mxu0 0.0
        %1887 = vmatpush2.msra.mxu0 0.0
        %1888 = vmatprep.subr.mxu0 0.0
        %1889 = vmatpush2.msra.mxu0 0.0
        %1890 = vmatprep.subr.mxu0 0.0
        %1891 = vmatpush2.msra.mxu0 0.0
        %1892 = vmatprep.subr.mxu0 0.0
        %1893 = vmatpush2.msra.mxu0 0.0
        %1894 = vmatprep.subr.mxu0 0.0
        %1895 = vmatpush2.msra.mxu0 0.0
        %1896 = vmatprep.subr.mxu0 0.0
        %1897 = vmatpush2.msra.mxu0 0.0
        %1898 = vmatprep.subr.mxu0 0.0
        %1899 = vmatpush2.msra.mxu0 0.0
        %1900 = vmatprep.subr.mxu0 0.0
        %1901 = vmatpush2.msra.mxu0 0.0
        %1902 = vmatprep.subr.mxu0 0.0
        %1903 = vmatpush2.msra.mxu0 0.0
        %1904 = vmatprep.subr.mxu0 0.0
        %1905 = vmatpush2.msra.mxu0 0.0
        %1906 = vmatprep.subr.mxu0 0.0
        %1907 = vmatpush2.msra.mxu0 0.0
        %1908 = vmatprep.subr.mxu0 0.0
        %1909 = vmatpush2.msra.mxu0 0.0
        %1910 = vmatprep.subr.mxu0 0.0
        %1911 = vmatpush2.msra.mxu0 0.0
        %1912 = vmatprep.subr.mxu0 0.0
        %1913 = vmatpush2.msra.mxu0 0.0
        %1914 = vmatprep.subr.mxu0 0.0
        %1915 = vmatpush2.msra.mxu0 0.0
        %1916 = vmatprep.subr.mxu0 0.0
        %1917 = vmatpush2.msra.mxu0 0.0
        %1918 = vmatprep.mubr.f32.mxu0 0.0
        %1919 = vmatmul.mubr.f32.gmra.mxu0 %v1756
        %v1920 = vpop.f32.mrf.mxu0
        %v1921 = vadd.f32 0.0, %v1920
        %v1922 = vpop.f32.mrf.mxu0
        %1923 = vmatprep.mubr.f32.mxu0 0.0
        %1924 = vmatmul.mubr.f32.gmra.mxu0 %v1759
        %v1925 = vpop.f32.mrf.mxu0
        %v1926 = vadd.f32 0.0, %v1925
        %v1927 = vpop.f32.mrf.mxu0
        %1928 = vmatprep.mubr.f32.mxu0 0.0
        %1929 = vmatmul.mubr.f32.gmra.mxu0 %v1762
        %v1930 = vpop.f32.mrf.mxu0
        %v1931 = vadd.f32 0.0, %v1930
        %v1932 = vpop.f32.mrf.mxu0
        %1933 = vmatprep.mubr.f32.mxu0 0.0
        %1934 = vmatmul.mubr.f32.gmra.mxu0 %v1765
        %v1935 = vpop.f32.mrf.mxu0
        %v1936 = vadd.f32 0.0, %v1935
        %v1937 = vpop.f32.mrf.mxu0
        %1938 = vmatprep.mubr.f32.mxu0 0.0
        %1939 = vmatmul.mubr.f32.gmra.mxu0 %v1768
        %v1940 = vpop.f32.mrf.mxu0
        %v1941 = vadd.f32 0.0, %v1940
        %v1942 = vpop.f32.mrf.mxu0
        %1943 = vmatprep.mubr.f32.mxu0 0.0
        %1944 = vmatmul.mubr.f32.gmra.mxu0 %v1771
        %v1945 = vpop.f32.mrf.mxu0
        %v1946 = vadd.f32 0.0, %v1945
        %v1947 = vpop.f32.mrf.mxu0
        %1948 = vmatprep.mubr.f32.mxu0 0.0
        %1949 = vmatmul.mubr.f32.gmra.mxu0 %v1774
        %v1950 = vpop.f32.mrf.mxu0
        %v1951 = vadd.f32 0.0, %v1950
        %v1952 = vpop.f32.mrf.mxu0
        %1953 = vmatprep.mubr.f32.mxu0 0.0
        %1954 = vmatmul.mubr.f32.gmra.mxu0 %v1777
        %v1955 = vpop.f32.mrf.mxu0
        %v1956 = vadd.f32 0.0, %v1955
        %v1957 = vpop.f32.mrf.mxu0
        %1958 = vmatprep.mubr.f32.mxu0 0.0
        %1959 = vmatmul.mubr.f32.gmra.mxu0 %v1780
        %v1960 = vpop.f32.mrf.mxu0
        %v1961 = vadd.f32 0.0, %v1960
        %v1962 = vpop.f32.mrf.mxu0
        %1963 = vmatprep.mubr.f32.mxu0 0.0
        %1964 = vmatmul.mubr.f32.gmra.mxu0 %v1783
        %v1965 = vpop.f32.mrf.mxu0
        %v1966 = vadd.f32 0.0, %v1965
        %v1967 = vpop.f32.mrf.mxu0
        %1968 = vmatprep.mubr.f32.mxu0 0.0
        %1969 = vmatmul.mubr.f32.gmra.mxu0 %v1786
        %v1970 = vpop.f32.mrf.mxu0
        %v1971 = vadd.f32 0.0, %v1970
        %v1972 = vpop.f32.mrf.mxu0
        %1973 = vmatprep.mubr.f32.mxu0 0.0
        %1974 = vmatmul.mubr.f32.gmra.mxu0 %v1789
        %v1975 = vpop.f32.mrf.mxu0
        %v1976 = vadd.f32 0.0, %v1975
        %v1977 = vpop.f32.mrf.mxu0
        %1978 = vmatprep.mubr.f32.mxu0 0.0
        %1979 = vmatmul.mubr.f32.gmra.mxu0 %v1792
        %v1980 = vpop.f32.mrf.mxu0
        %v1981 = vadd.f32 0.0, %v1980
        %v1982 = vpop.f32.mrf.mxu0
        %1983 = vmatprep.mubr.f32.mxu0 0.0
        %1984 = vmatmul.mubr.f32.gmra.mxu0 %v1795
        %v1985 = vpop.f32.mrf.mxu0
        %v1986 = vadd.f32 0.0, %v1985
        %v1987 = vpop.f32.mrf.mxu0
        %1988 = vmatprep.mubr.f32.mxu0 0.0
        %1989 = vmatmul.mubr.f32.gmra.mxu0 %v1798
        %v1990 = vpop.f32.mrf.mxu0
        %v1991 = vadd.f32 0.0, %v1990
        %v1992 = vpop.f32.mrf.mxu0
        %1993 = vmatprep.mubr.f32.mxu0 0.0
        %1994 = vmatmul.mubr.f32.gmra.mxu0 %v1801
        %v1995 = vpop.f32.mrf.mxu0
        %v1996 = vadd.f32 0.0, %v1995
        %v1997 = vpop.f32.mrf.mxu0
        %1998 = vmatprep.mubr.f32.mxu0 0.0
        %1999 = vmatmul.mubr.f32.gmra.mxu0 %v1804
        %v2000 = vpop.f32.mrf.mxu0
        %v2001 = vadd.f32 0.0, %v2000
        %v2002 = vpop.f32.mrf.mxu0
        %2003 = vmatprep.mubr.f32.mxu0 0.0
        %2004 = vmatmul.mubr.f32.gmra.mxu0 %v1807
        %v2005 = vpop.f32.mrf.mxu0
        %v2006 = vadd.f32 0.0, %v2005
        %v2007 = vpop.f32.mrf.mxu0
        %2008 = vmatprep.mubr.f32.mxu0 0.0
        %2009 = vmatmul.mubr.f32.gmra.mxu0 %v1810
        %v2010 = vpop.f32.mrf.mxu0
        %v2011 = vadd.f32 0.0, %v2010
        %v2012 = vpop.f32.mrf.mxu0
        %2013 = vmatprep.mubr.f32.mxu0 0.0
        %2014 = vmatmul.mubr.f32.gmra.mxu0 %v1813
        %v2015 = vpop.f32.mrf.mxu0
        %v2016 = vadd.f32 0.0, %v2015
        %v2017 = vpop.f32.mrf.mxu0
        %2018 = vmatprep.mubr.f32.mxu0 0.0
        %2019 = vmatmul.mubr.f32.gmra.mxu0 %v1816
        %v2020 = vpop.f32.mrf.mxu0
        %v2021 = vadd.f32 0.0, %v2020
        %v2022 = vpop.f32.mrf.mxu0
        %2023 = vmatprep.mubr.f32.mxu0 0.0
        %2024 = vmatmul.mubr.f32.gmra.mxu0 %v1819
        %v2025 = vpop.f32.mrf.mxu0
        %v2026 = vadd.f32 0.0, %v2025
        %v2027 = vpop.f32.mrf.mxu0
        %2028 = vmatprep.mubr.f32.mxu0 0.0
        %2029 = vmatmul.mubr.f32.gmra.mxu0 %v1822
        %v2030 = vpop.f32.mrf.mxu0
        %v2031 = vadd.f32 0.0, %v2030
        %v2032 = vpop.f32.mrf.mxu0
        %2033 = vmatprep.mubr.f32.mxu0 0.0
        %2034 = vmatmul.mubr.f32.gmra.mxu0 %v1825
        %v2035 = vpop.f32.mrf.mxu0
        %v2036 = vadd.f32 0.0, %v2035
        %v2037 = vpop.f32.mrf.mxu0
        %2038 = vmatprep.mubr.f32.mxu0 0.0
        %2039 = vmatmul.mubr.f32.gmra.mxu0 %v1828
        %v2040 = vpop.f32.mrf.mxu0
        %v2041 = vadd.f32 0.0, %v2040
        %v2042 = vpop.f32.mrf.mxu0
        %2043 = vmatprep.mubr.f32.mxu0 0.0
        %2044 = vmatmul.mubr.f32.gmra.mxu0 %v1831
        %v2045 = vpop.f32.mrf.mxu0
        %v2046 = vadd.f32 0.0, %v2045
        %v2047 = vpop.f32.mrf.mxu0
        %2048 = vmatprep.mubr.f32.mxu0 0.0
        %2049 = vmatmul.mubr.f32.gmra.mxu0 %v1834
        %v2050 = vpop.f32.mrf.mxu0
        %v2051 = vadd.f32 0.0, %v2050
        %v2052 = vpop.f32.mrf.mxu0
        %2053 = vmatprep.mubr.f32.mxu0 0.0
        %2054 = vmatmul.mubr.f32.gmra.mxu0 %v1837
        %v2055 = vpop.f32.mrf.mxu0
        %v2056 = vadd.f32 0.0, %v2055
        %v2057 = vpop.f32.mrf.mxu0
        %2058 = vmatprep.mubr.f32.mxu0 0.0
        %2059 = vmatmul.mubr.f32.gmra.mxu0 %v1840
        %v2060 = vpop.f32.mrf.mxu0
        %v2061 = vadd.f32 0.0, %v2060
        %v2062 = vpop.f32.mrf.mxu0
        %2063 = vmatprep.mubr.f32.mxu0 0.0
        %2064 = vmatmul.mubr.f32.gmra.mxu0 %v1843
        %v2065 = vpop.f32.mrf.mxu0
        %v2066 = vadd.f32 0.0, %v2065
        %v2067 = vpop.f32.mrf.mxu0
        %2068 = vmatprep.mubr.f32.mxu0 0.0
        %2069 = vmatmul.mubr.f32.gmra.mxu0 %v1846
        %v2070 = vpop.f32.mrf.mxu0
        %v2071 = vadd.f32 0.0, %v2070
        %v2072 = vpop.f32.mrf.mxu0
        %2073 = vmatprep.mubr.f32.mxu0 0.0
        %2074 = vmatmul.mubr.f32.gmra.mxu0 %v1849
        %v2075 = vpop.f32.mrf.mxu0
        %v2076 = vadd.f32 0.0, %v2075
        %v2077 = vpop.f32.mrf.mxu0
        %2078 = vdwg.mxu0
        %v2079 = vadd.f32 %v1689, %v1921
        %v2080 = vadd.f32 %v1690, %v1926
        %v2081 = vadd.f32 %v1691, %v1931
        %v2082 = vadd.f32 %v1692, %v1936
        %v2083 = vadd.f32 %v1693, %v1941
        %v2084 = vadd.f32 %v1694, %v1946
        %v2085 = vadd.f32 %v1695, %v1951
        %v2086 = vadd.f32 %v1696, %v1956
        %v2087 = vadd.f32 %v1697, %v1961
        %v2088 = vadd.f32 %v1698, %v1966
        %v2089 = vadd.f32 %v1699, %v1971
        %v2090 = vadd.f32 %v1700, %v1976
        %v2091 = vadd.f32 %v1701, %v1981
        %v2092 = vadd.f32 %v1702, %v1986
        %v2093 = vadd.f32 %v1703, %v1991
        %v2094 = vadd.f32 %v1704, %v1996
        %v2095 = vadd.f32 %v1705, %v2001
        %v2096 = vadd.f32 %v1706, %v2006
        %v2097 = vadd.f32 %v1707, %v2011
        %v2098 = vadd.f32 %v1708, %v2016
        %v2099 = vadd.f32 %v1709, %v2021
        %v2100 = vadd.f32 %v1710, %v2026
        %v2101 = vadd.f32 %v1711, %v2031
        %v2102 = vadd.f32 %v1712, %v2036
        %v2103 = vadd.f32 %v1713, %v2041
        %v2104 = vadd.f32 %v1714, %v2046
        %v2105 = vadd.f32 %v1715, %v2051
        %v2106 = vadd.f32 %v1716, %v2056
        %v2107 = vadd.f32 %v1717, %v2061
        %v2108 = vadd.f32 %v1718, %v2066
        %v2109 = vadd.f32 %v1719, %v2071
        %v2110 = vadd.f32 %v1720, %v2076
        %v2111 = vld [vmem:[%s1330 + $0x2] sm:$0xff]
        %v2112 = vld [vmem:[%s1330 + $0xa] sm:$0xff]
        %v2113 = vld [vmem:[%s1330 + $0x1a] sm:$0xff]
        %v2114 = vld [vmem:[%s1330 + $0x22] sm:$0xff]
        %v2115 = vld [vmem:[%s1330 + $0x32] sm:$0xff]
        %v2116 = vld [vmem:[%s1330 + $0x3a] sm:$0xff]
        %v2117 = vld [vmem:[%s1330 + $0x4a] sm:$0xff]
        %v2118 = vld [vmem:[%s1330 + $0x52] sm:$0xff]
        %v2119 = vld [vmem:[%s1330 + $0x62] sm:$0xff]
        %v2120 = vld [vmem:[%s1330 + $0x6a] sm:$0xff]
        %v2121 = vld [vmem:[%s1330 + $0x7a] sm:$0xff]
        %v2122 = vld [vmem:[%s1330 + $0x82] sm:$0xff]
        %v2123 = vld [vmem:[%s1330 + $0x92] sm:$0xff]
        %v2124 = vld [vmem:[%s1330 + $0x9a] sm:$0xff]
        %v2125 = vld [vmem:[%s1330 + $0xaa] sm:$0xff]
        %v2126 = vld [vmem:[%s1330 + $0xb2] sm:$0xff]
        %v2127 = vld [vmem:[%s1330 + $0xc2] sm:$0xff]
        %v2128 = vld [vmem:[%s1330 + $0xca] sm:$0xff]
        %v2129 = vld [vmem:[%s1330 + $0xda] sm:$0xff]
        %v2130 = vld [vmem:[%s1330 + $0xe2] sm:$0xff]
        %v2131 = vld [vmem:[%s1330 + $0xf2] sm:$0xff]
        %v2132 = vld [vmem:[%s1330 + $0xfa] sm:$0xff]
        %v2133 = vld [vmem:[%s1330 + $0x10a] sm:$0xff]
        %v2134 = vld [vmem:[%s1330 + $0x112] sm:$0xff]
        %v2135 = vld [vmem:[%s1330 + $0x122] sm:$0xff]
        %v2136 = vld [vmem:[%s1330 + $0x12a] sm:$0xff]
        %v2137 = vld [vmem:[%s1330 + $0x13a] sm:$0xff]
        %v2138 = vld [vmem:[%s1330 + $0x142] sm:$0xff]
        %v2139 = vld [vmem:[%s1330 + $0x152] sm:$0xff]
        %v2140 = vld [vmem:[%s1330 + $0x15a] sm:$0xff]
        %v2141 = vld [vmem:[%s1330 + $0x16a] sm:$0xff]
        %v2142 = vld [vmem:[%s1330 + $0x172] sm:$0xff]
        %s2143 = scalar_lea.vmem %s1, 20
        %v2144 = vld [vmem:[%s2143] sm:$0xf]
        %v2146 = vsel %vm290, %v2111, 0
        %v2149 = vsel %vm290, %v2112, 0
        %v2152 = vsel %vm290, %v2113, 0
        %v2155 = vsel %vm290, %v2114, 0
        %v2158 = vsel %vm290, %v2115, 0
        %v2161 = vsel %vm290, %v2116, 0
        %v2164 = vsel %vm290, %v2117, 0
        %v2167 = vsel %vm290, %v2118, 0
        %v2170 = vsel %vm290, %v2119, 0
        %v2173 = vsel %vm290, %v2120, 0
        %v2176 = vsel %vm290, %v2121, 0
        %v2179 = vsel %vm290, %v2122, 0
        %v2182 = vsel %vm290, %v2123, 0
        %v2185 = vsel %vm290, %v2124, 0
        %v2188 = vsel %vm290, %v2125, 0
        %v2191 = vsel %vm290, %v2126, 0
        %v2194 = vsel %vm290, %v2127, 0
        %v2197 = vsel %vm290, %v2128, 0
        %v2200 = vsel %vm290, %v2129, 0
        %v2203 = vsel %vm290, %v2130, 0
        %v2206 = vsel %vm290, %v2131, 0
        %v2209 = vsel %vm290, %v2132, 0
        %v2212 = vsel %vm290, %v2133, 0
        %v2215 = vsel %vm290, %v2134, 0
        %v2218 = vsel %vm290, %v2135, 0
        %v2221 = vsel %vm290, %v2136, 0
        %v2224 = vsel %vm290, %v2137, 0
        %v2227 = vsel %vm290, %v2138, 0
        %v2230 = vsel %vm290, %v2139, 0
        %v2233 = vsel %vm290, %v2140, 0
        %v2236 = vsel %vm290, %v2141, 0
        %v2239 = vsel %vm290, %v2142, 0
        %v2242 = vsel %vm387, %v2144, 0
        %2244 = vmatprep.subr.mxu0 0.0
        %2245 = vmatpush1.msra.mxu0 0.0
        %2246 = vmatprep.subr.mxu0 0.0
        %2247 = vmatpush1.msra.mxu0 0.0
        %2248 = vmatprep.subr.mxu0 0.0
        %2249 = vmatpush1.msra.mxu0 0.0
        %2250 = vmatprep.subr.mxu0 0.0
        %2251 = vmatpush1.msra.mxu0 0.0
        %2252 = vmatprep.subr.mxu0 0.0
        %2253 = vmatpush1.msra.mxu0 0.0
        %2254 = vmatprep.subr.mxu0 0.0
        %2255 = vmatpush1.msra.mxu0 0.0
        %2256 = vmatprep.subr.mxu0 0.0
        %2257 = vmatpush1.msra.mxu0 0.0
        %2258 = vmatprep.subr.mxu0 0.0
        %2259 = vmatpush1.msra.mxu0 0.0
        %2260 = vmatprep.subr.mxu0 0.0
        %2261 = vmatpush1.msra.mxu0 0.0
        %2262 = vmatprep.subr.mxu0 0.0
        %2263 = vmatpush1.msra.mxu0 0.0
        %2264 = vmatprep.subr.mxu0 0.0
        %2265 = vmatpush1.msra.mxu0 0.0
        %2266 = vmatprep.subr.mxu0 0.0
        %2267 = vmatpush1.msra.mxu0 0.0
        %2268 = vmatprep.subr.mxu0 0.0
        %2269 = vmatpush1.msra.mxu0 0.0
        %2270 = vmatprep.subr.mxu0 0.0
        %2271 = vmatpush1.msra.mxu0 0.0
        %2272 = vmatprep.subr.mxu0 0.0
        %2273 = vmatpush1.msra.mxu0 0.0
        %2274 = vmatprep.subr.mxu0 0.0
        %2275 = vmatpush1.msra.mxu0 %v2242
        %2276 = vmatprep.subr.mxu0 0.0
        %2277 = vmatpush2.msra.mxu0 0.0
        %2278 = vmatprep.subr.mxu0 0.0
        %2279 = vmatpush2.msra.mxu0 0.0
        %2280 = vmatprep.subr.mxu0 0.0
        %2281 = vmatpush2.msra.mxu0 0.0
        %2282 = vmatprep.subr.mxu0 0.0
        %2283 = vmatpush2.msra.mxu0 0.0
        %2284 = vmatprep.subr.mxu0 0.0
        %2285 = vmatpush2.msra.mxu0 0.0
        %2286 = vmatprep.subr.mxu0 0.0
        %2287 = vmatpush2.msra.mxu0 0.0
        %2288 = vmatprep.subr.mxu0 0.0
        %2289 = vmatpush2.msra.mxu0 0.0
        %2290 = vmatprep.subr.mxu0 0.0
        %2291 = vmatpush2.msra.mxu0 0.0
        %2292 = vmatprep.subr.mxu0 0.0
        %2293 = vmatpush2.msra.mxu0 0.0
        %2294 = vmatprep.subr.mxu0 0.0
        %2295 = vmatpush2.msra.mxu0 0.0
        %2296 = vmatprep.subr.mxu0 0.0
        %2297 = vmatpush2.msra.mxu0 0.0
        %2298 = vmatprep.subr.mxu0 0.0
        %2299 = vmatpush2.msra.mxu0 0.0
        %2300 = vmatprep.subr.mxu0 0.0
        %2301 = vmatpush2.msra.mxu0 0.0
        %2302 = vmatprep.subr.mxu0 0.0
        %2303 = vmatpush2.msra.mxu0 0.0
        %2304 = vmatprep.subr.mxu0 0.0
        %2305 = vmatpush2.msra.mxu0 0.0
        %2306 = vmatprep.subr.mxu0 0.0
        %2307 = vmatpush2.msra.mxu0 0.0
        %2308 = vmatprep.mubr.f32.mxu0 0.0
        %2309 = vmatmul.mubr.f32.gmra.mxu0 %v2146
        %v2310 = vpop.f32.mrf.mxu0
        %v2311 = vadd.f32 0.0, %v2310
        %v2312 = vpop.f32.mrf.mxu0
        %2313 = vmatprep.mubr.f32.mxu0 0.0
        %2314 = vmatmul.mubr.f32.gmra.mxu0 %v2149
        %v2315 = vpop.f32.mrf.mxu0
        %v2316 = vadd.f32 0.0, %v2315
        %v2317 = vpop.f32.mrf.mxu0
        %2318 = vmatprep.mubr.f32.mxu0 0.0
        %2319 = vmatmul.mubr.f32.gmra.mxu0 %v2152
        %v2320 = vpop.f32.mrf.mxu0
        %v2321 = vadd.f32 0.0, %v2320
        %v2322 = vpop.f32.mrf.mxu0
        %2323 = vmatprep.mubr.f32.mxu0 0.0
        %2324 = vmatmul.mubr.f32.gmra.mxu0 %v2155
        %v2325 = vpop.f32.mrf.mxu0
        %v2326 = vadd.f32 0.0, %v2325
        %v2327 = vpop.f32.mrf.mxu0
        %2328 = vmatprep.mubr.f32.mxu0 0.0
        %2329 = vmatmul.mubr.f32.gmra.mxu0 %v2158
        %v2330 = vpop.f32.mrf.mxu0
        %v2331 = vadd.f32 0.0, %v2330
        %v2332 = vpop.f32.mrf.mxu0
        %2333 = vmatprep.mubr.f32.mxu0 0.0
        %2334 = vmatmul.mubr.f32.gmra.mxu0 %v2161
        %v2335 = vpop.f32.mrf.mxu0
        %v2336 = vadd.f32 0.0, %v2335
        %v2337 = vpop.f32.mrf.mxu0
        %2338 = vmatprep.mubr.f32.mxu0 0.0
        %2339 = vmatmul.mubr.f32.gmra.mxu0 %v2164
        %v2340 = vpop.f32.mrf.mxu0
        %v2341 = vadd.f32 0.0, %v2340
        %v2342 = vpop.f32.mrf.mxu0
        %2343 = vmatprep.mubr.f32.mxu0 0.0
        %2344 = vmatmul.mubr.f32.gmra.mxu0 %v2167
        %v2345 = vpop.f32.mrf.mxu0
        %v2346 = vadd.f32 0.0, %v2345
        %v2347 = vpop.f32.mrf.mxu0
        %2348 = vmatprep.mubr.f32.mxu0 0.0
        %2349 = vmatmul.mubr.f32.gmra.mxu0 %v2170
        %v2350 = vpop.f32.mrf.mxu0
        %v2351 = vadd.f32 0.0, %v2350
        %v2352 = vpop.f32.mrf.mxu0
        %2353 = vmatprep.mubr.f32.mxu0 0.0
        %2354 = vmatmul.mubr.f32.gmra.mxu0 %v2173
        %v2355 = vpop.f32.mrf.mxu0
        %v2356 = vadd.f32 0.0, %v2355
        %v2357 = vpop.f32.mrf.mxu0
        %2358 = vmatprep.mubr.f32.mxu0 0.0
        %2359 = vmatmul.mubr.f32.gmra.mxu0 %v2176
        %v2360 = vpop.f32.mrf.mxu0
        %v2361 = vadd.f32 0.0, %v2360
        %v2362 = vpop.f32.mrf.mxu0
        %2363 = vmatprep.mubr.f32.mxu0 0.0
        %2364 = vmatmul.mubr.f32.gmra.mxu0 %v2179
        %v2365 = vpop.f32.mrf.mxu0
        %v2366 = vadd.f32 0.0, %v2365
        %v2367 = vpop.f32.mrf.mxu0
        %2368 = vmatprep.mubr.f32.mxu0 0.0
        %2369 = vmatmul.mubr.f32.gmra.mxu0 %v2182
        %v2370 = vpop.f32.mrf.mxu0
        %v2371 = vadd.f32 0.0, %v2370
        %v2372 = vpop.f32.mrf.mxu0
        %2373 = vmatprep.mubr.f32.mxu0 0.0
        %2374 = vmatmul.mubr.f32.gmra.mxu0 %v2185
        %v2375 = vpop.f32.mrf.mxu0
        %v2376 = vadd.f32 0.0, %v2375
        %v2377 = vpop.f32.mrf.mxu0
        %2378 = vmatprep.mubr.f32.mxu0 0.0
        %2379 = vmatmul.mubr.f32.gmra.mxu0 %v2188
        %v2380 = vpop.f32.mrf.mxu0
        %v2381 = vadd.f32 0.0, %v2380
        %v2382 = vpop.f32.mrf.mxu0
        %2383 = vmatprep.mubr.f32.mxu0 0.0
        %2384 = vmatmul.mubr.f32.gmra.mxu0 %v2191
        %v2385 = vpop.f32.mrf.mxu0
        %v2386 = vadd.f32 0.0, %v2385
        %v2387 = vpop.f32.mrf.mxu0
        %2388 = vmatprep.mubr.f32.mxu0 0.0
        %2389 = vmatmul.mubr.f32.gmra.mxu0 %v2194
        %v2390 = vpop.f32.mrf.mxu0
        %v2391 = vadd.f32 0.0, %v2390
        %v2392 = vpop.f32.mrf.mxu0
        %2393 = vmatprep.mubr.f32.mxu0 0.0
        %2394 = vmatmul.mubr.f32.gmra.mxu0 %v2197
        %v2395 = vpop.f32.mrf.mxu0
        %v2396 = vadd.f32 0.0, %v2395
        %v2397 = vpop.f32.mrf.mxu0
        %2398 = vmatprep.mubr.f32.mxu0 0.0
        %2399 = vmatmul.mubr.f32.gmra.mxu0 %v2200
        %v2400 = vpop.f32.mrf.mxu0
        %v2401 = vadd.f32 0.0, %v2400
        %v2402 = vpop.f32.mrf.mxu0
        %2403 = vmatprep.mubr.f32.mxu0 0.0
        %2404 = vmatmul.mubr.f32.gmra.mxu0 %v2203
        %v2405 = vpop.f32.mrf.mxu0
        %v2406 = vadd.f32 0.0, %v2405
        %v2407 = vpop.f32.mrf.mxu0
        %2408 = vmatprep.mubr.f32.mxu0 0.0
        %2409 = vmatmul.mubr.f32.gmra.mxu0 %v2206
        %v2410 = vpop.f32.mrf.mxu0
        %v2411 = vadd.f32 0.0, %v2410
        %v2412 = vpop.f32.mrf.mxu0
        %2413 = vmatprep.mubr.f32.mxu0 0.0
        %2414 = vmatmul.mubr.f32.gmra.mxu0 %v2209
        %v2415 = vpop.f32.mrf.mxu0
        %v2416 = vadd.f32 0.0, %v2415
        %v2417 = vpop.f32.mrf.mxu0
        %2418 = vmatprep.mubr.f32.mxu0 0.0
        %2419 = vmatmul.mubr.f32.gmra.mxu0 %v2212
        %v2420 = vpop.f32.mrf.mxu0
        %v2421 = vadd.f32 0.0, %v2420
        %v2422 = vpop.f32.mrf.mxu0
        %2423 = vmatprep.mubr.f32.mxu0 0.0
        %2424 = vmatmul.mubr.f32.gmra.mxu0 %v2215
        %v2425 = vpop.f32.mrf.mxu0
        %v2426 = vadd.f32 0.0, %v2425
        %v2427 = vpop.f32.mrf.mxu0
        %2428 = vmatprep.mubr.f32.mxu0 0.0
        %2429 = vmatmul.mubr.f32.gmra.mxu0 %v2218
        %v2430 = vpop.f32.mrf.mxu0
        %v2431 = vadd.f32 0.0, %v2430
        %v2432 = vpop.f32.mrf.mxu0
        %2433 = vmatprep.mubr.f32.mxu0 0.0
        %2434 = vmatmul.mubr.f32.gmra.mxu0 %v2221
        %v2435 = vpop.f32.mrf.mxu0
        %v2436 = vadd.f32 0.0, %v2435
        %v2437 = vpop.f32.mrf.mxu0
        %2438 = vmatprep.mubr.f32.mxu0 0.0
        %2439 = vmatmul.mubr.f32.gmra.mxu0 %v2224
        %v2440 = vpop.f32.mrf.mxu0
        %v2441 = vadd.f32 0.0, %v2440
        %v2442 = vpop.f32.mrf.mxu0
        %2443 = vmatprep.mubr.f32.mxu0 0.0
        %2444 = vmatmul.mubr.f32.gmra.mxu0 %v2227
        %v2445 = vpop.f32.mrf.mxu0
        %v2446 = vadd.f32 0.0, %v2445
        %v2447 = vpop.f32.mrf.mxu0
        %2448 = vmatprep.mubr.f32.mxu0 0.0
        %2449 = vmatmul.mubr.f32.gmra.mxu0 %v2230
        %v2450 = vpop.f32.mrf.mxu0
        %v2451 = vadd.f32 0.0, %v2450
        %v2452 = vpop.f32.mrf.mxu0
        %2453 = vmatprep.mubr.f32.mxu0 0.0
        %2454 = vmatmul.mubr.f32.gmra.mxu0 %v2233
        %v2455 = vpop.f32.mrf.mxu0
        %v2456 = vadd.f32 0.0, %v2455
        %v2457 = vpop.f32.mrf.mxu0
        %2458 = vmatprep.mubr.f32.mxu0 0.0
        %2459 = vmatmul.mubr.f32.gmra.mxu0 %v2236
        %v2460 = vpop.f32.mrf.mxu0
        %v2461 = vadd.f32 0.0, %v2460
        %v2462 = vpop.f32.mrf.mxu0
        %2463 = vmatprep.mubr.f32.mxu0 0.0
        %2464 = vmatmul.mubr.f32.gmra.mxu0 %v2239
        %v2465 = vpop.f32.mrf.mxu0
        %v2466 = vadd.f32 0.0, %v2465
        %v2467 = vpop.f32.mrf.mxu0
        %2468 = vdwg.mxu0
        %v2469 = vadd.f32 %v2079, %v2311
        %v2470 = vadd.f32 %v2080, %v2316
        %v2471 = vadd.f32 %v2081, %v2321
        %v2472 = vadd.f32 %v2082, %v2326
        %v2473 = vadd.f32 %v2083, %v2331
        %v2474 = vadd.f32 %v2084, %v2336
        %v2475 = vadd.f32 %v2085, %v2341
        %v2476 = vadd.f32 %v2086, %v2346
        %v2477 = vadd.f32 %v2087, %v2351
        %v2478 = vadd.f32 %v2088, %v2356
        %v2479 = vadd.f32 %v2089, %v2361
        %v2480 = vadd.f32 %v2090, %v2366
        %v2481 = vadd.f32 %v2091, %v2371
        %v2482 = vadd.f32 %v2092, %v2376
        %v2483 = vadd.f32 %v2093, %v2381
        %v2484 = vadd.f32 %v2094, %v2386
        %v2485 = vadd.f32 %v2095, %v2391
        %v2486 = vadd.f32 %v2096, %v2396
        %v2487 = vadd.f32 %v2097, %v2401
        %v2488 = vadd.f32 %v2098, %v2406
        %v2489 = vadd.f32 %v2099, %v2411
        %v2490 = vadd.f32 %v2100, %v2416
        %v2491 = vadd.f32 %v2101, %v2421
        %v2492 = vadd.f32 %v2102, %v2426
        %v2493 = vadd.f32 %v2103, %v2431
        %v2494 = vadd.f32 %v2104, %v2436
        %v2495 = vadd.f32 %v2105, %v2441
        %v2496 = vadd.f32 %v2106, %v2446
        %v2497 = vadd.f32 %v2107, %v2451
        %v2498 = vadd.f32 %v2108, %v2456
        %v2499 = vadd.f32 %v2109, %v2461
        %v2500 = vadd.f32 %v2110, %v2466
        %s2501 = scalar_lea.vmem %s222, 48
        %v2502 = vld [vmem:[%s2501] sm:$0xff]
        %v2503 = vld [vmem:[%s2501 + $0x8] sm:$0xff]
        %v2504 = vld [vmem:[%s2501 + $0x18] sm:$0xff]
        %v2505 = vld [vmem:[%s2501 + $0x20] sm:$0xff]
        %v2506 = vld [vmem:[%s2501 + $0x30] sm:$0xff]
        %v2507 = vld [vmem:[%s2501 + $0x38] sm:$0xff]
        %v2508 = vld [vmem:[%s2501 + $0x48] sm:$0xff]
        %v2509 = vld [vmem:[%s2501 + $0x50] sm:$0xff]
        %v2510 = vld [vmem:[%s2501 + $0x60] sm:$0xff]
        %v2511 = vld [vmem:[%s2501 + $0x68] sm:$0xff]
        %v2512 = vld [vmem:[%s2501 + $0x78] sm:$0xff]
        %v2513 = vld [vmem:[%s2501 + $0x80] sm:$0xff]
        %v2514 = vld [vmem:[%s2501 + $0x90] sm:$0xff]
        %v2515 = vld [vmem:[%s2501 + $0x98] sm:$0xff]
        %v2516 = vld [vmem:[%s2501 + $0xa8] sm:$0xff]
        %v2517 = vld [vmem:[%s2501 + $0xb0] sm:$0xff]
        %v2518 = vld [vmem:[%s2501 + $0xc0] sm:$0xff]
        %v2519 = vld [vmem:[%s2501 + $0xc8] sm:$0xff]
        %v2520 = vld [vmem:[%s2501 + $0xd8] sm:$0xff]
        %v2521 = vld [vmem:[%s2501 + $0xe0] sm:$0xff]
        %v2522 = vld [vmem:[%s2501 + $0xf0] sm:$0xff]
        %v2523 = vld [vmem:[%s2501 + $0xf8] sm:$0xff]
        %v2524 = vld [vmem:[%s2501 + $0x108] sm:$0xff]
        %v2525 = vld [vmem:[%s2501 + $0x110] sm:$0xff]
        %v2526 = vld [vmem:[%s2501 + $0x120] sm:$0xff]
        %v2527 = vld [vmem:[%s2501 + $0x128] sm:$0xff]
        %v2528 = vld [vmem:[%s2501 + $0x138] sm:$0xff]
        %v2529 = vld [vmem:[%s2501 + $0x140] sm:$0xff]
        %v2530 = vld [vmem:[%s2501 + $0x150] sm:$0xff]
        %v2531 = vld [vmem:[%s2501 + $0x158] sm:$0xff]
        %v2532 = vld [vmem:[%s2501 + $0x168] sm:$0xff]
        %v2533 = vld [vmem:[%s2501 + $0x170] sm:$0xff]
        %s2534 = scalar_lea.vmem %s1, 24
        %v2535 = vld [vmem:[%s2534] sm:$0xf]
        %v2537 = vsel %vm290, %v2502, 0
        %v2540 = vsel %vm290, %v2503, 0
        %v2543 = vsel %vm290, %v2504, 0
        %v2546 = vsel %vm290, %v2505, 0
        %v2549 = vsel %vm290, %v2506, 0
        %v2552 = vsel %vm290, %v2507, 0
        %v2555 = vsel %vm290, %v2508, 0
        %v2558 = vsel %vm290, %v2509, 0
        %v2561 = vsel %vm290, %v2510, 0
        %v2564 = vsel %vm290, %v2511, 0
        %v2567 = vsel %vm290, %v2512, 0
        %v2570 = vsel %vm290, %v2513, 0
        %v2573 = vsel %vm290, %v2514, 0
        %v2576 = vsel %vm290, %v2515, 0
        %v2579 = vsel %vm290, %v2516, 0
        %v2582 = vsel %vm290, %v2517, 0
        %v2585 = vsel %vm290, %v2518, 0
        %v2588 = vsel %vm290, %v2519, 0
        %v2591 = vsel %vm290, %v2520, 0
        %v2594 = vsel %vm290, %v2521, 0
        %v2597 = vsel %vm290, %v2522, 0
        %v2600 = vsel %vm290, %v2523, 0
        %v2603 = vsel %vm290, %v2524, 0
        %v2606 = vsel %vm290, %v2525, 0
        %v2609 = vsel %vm290, %v2526, 0
        %v2612 = vsel %vm290, %v2527, 0
        %v2615 = vsel %vm290, %v2528, 0
        %v2618 = vsel %vm290, %v2529, 0
        %v2621 = vsel %vm290, %v2530, 0
        %v2624 = vsel %vm290, %v2531, 0
        %v2627 = vsel %vm290, %v2532, 0
        %v2630 = vsel %vm290, %v2533, 0
        %v2633 = vsel %vm387, %v2535, 0
        %2635 = vmatprep.subr.mxu0 0.0
        %2636 = vmatpush1.msra.mxu0 0.0
        %2637 = vmatprep.subr.mxu0 0.0
        %2638 = vmatpush1.msra.mxu0 0.0
        %2639 = vmatprep.subr.mxu0 0.0
        %2640 = vmatpush1.msra.mxu0 0.0
        %2641 = vmatprep.subr.mxu0 0.0
        %2642 = vmatpush1.msra.mxu0 0.0
        %2643 = vmatprep.subr.mxu0 0.0
        %2644 = vmatpush1.msra.mxu0 0.0
        %2645 = vmatprep.subr.mxu0 0.0
        %2646 = vmatpush1.msra.mxu0 0.0
        %2647 = vmatprep.subr.mxu0 0.0
        %2648 = vmatpush1.msra.mxu0 0.0
        %2649 = vmatprep.subr.mxu0 0.0
        %2650 = vmatpush1.msra.mxu0 0.0
        %2651 = vmatprep.subr.mxu0 0.0
        %2652 = vmatpush1.msra.mxu0 0.0
        %2653 = vmatprep.subr.mxu0 0.0
        %2654 = vmatpush1.msra.mxu0 0.0
        %2655 = vmatprep.subr.mxu0 0.0
        %2656 = vmatpush1.msra.mxu0 0.0
        %2657 = vmatprep.subr.mxu0 0.0
        %2658 = vmatpush1.msra.mxu0 0.0
        %2659 = vmatprep.subr.mxu0 0.0
        %2660 = vmatpush1.msra.mxu0 0.0
        %2661 = vmatprep.subr.mxu0 0.0
        %2662 = vmatpush1.msra.mxu0 0.0
        %2663 = vmatprep.subr.mxu0 0.0
        %2664 = vmatpush1.msra.mxu0 0.0
        %2665 = vmatprep.subr.mxu0 0.0
        %2666 = vmatpush1.msra.mxu0 %v2633
        %2667 = vmatprep.subr.mxu0 0.0
        %2668 = vmatpush2.msra.mxu0 0.0
        %2669 = vmatprep.subr.mxu0 0.0
        %2670 = vmatpush2.msra.mxu0 0.0
        %2671 = vmatprep.subr.mxu0 0.0
        %2672 = vmatpush2.msra.mxu0 0.0
        %2673 = vmatprep.subr.mxu0 0.0
        %2674 = vmatpush2.msra.mxu0 0.0
        %2675 = vmatprep.subr.mxu0 0.0
        %2676 = vmatpush2.msra.mxu0 0.0
        %2677 = vmatprep.subr.mxu0 0.0
        %2678 = vmatpush2.msra.mxu0 0.0
        %2679 = vmatprep.subr.mxu0 0.0
        %2680 = vmatpush2.msra.mxu0 0.0
        %2681 = vmatprep.subr.mxu0 0.0
        %2682 = vmatpush2.msra.mxu0 0.0
        %2683 = vmatprep.subr.mxu0 0.0
        %2684 = vmatpush2.msra.mxu0 0.0
        %2685 = vmatprep.subr.mxu0 0.0
        %2686 = vmatpush2.msra.mxu0 0.0
        %2687 = vmatprep.subr.mxu0 0.0
        %2688 = vmatpush2.msra.mxu0 0.0
        %2689 = vmatprep.subr.mxu0 0.0
        %2690 = vmatpush2.msra.mxu0 0.0
        %2691 = vmatprep.subr.mxu0 0.0
        %2692 = vmatpush2.msra.mxu0 0.0
        %2693 = vmatprep.subr.mxu0 0.0
        %2694 = vmatpush2.msra.mxu0 0.0
        %2695 = vmatprep.subr.mxu0 0.0
        %2696 = vmatpush2.msra.mxu0 0.0
        %2697 = vmatprep.subr.mxu0 0.0
        %2698 = vmatpush2.msra.mxu0 0.0
        %2699 = vmatprep.mubr.f32.mxu0 0.0
        %2700 = vmatmul.mubr.f32.gmra.mxu0 %v2537
        %v2701 = vpop.f32.mrf.mxu0
        %v2702 = vadd.f32 0.0, %v2701
        %v2703 = vpop.f32.mrf.mxu0
        %2704 = vmatprep.mubr.f32.mxu0 0.0
        %2705 = vmatmul.mubr.f32.gmra.mxu0 %v2540
        %v2706 = vpop.f32.mrf.mxu0
        %v2707 = vadd.f32 0.0, %v2706
        %v2708 = vpop.f32.mrf.mxu0
        %2709 = vmatprep.mubr.f32.mxu0 0.0
        %2710 = vmatmul.mubr.f32.gmra.mxu0 %v2543
        %v2711 = vpop.f32.mrf.mxu0
        %v2712 = vadd.f32 0.0, %v2711
        %v2713 = vpop.f32.mrf.mxu0
        %2714 = vmatprep.mubr.f32.mxu0 0.0
        %2715 = vmatmul.mubr.f32.gmra.mxu0 %v2546
        %v2716 = vpop.f32.mrf.mxu0
        %v2717 = vadd.f32 0.0, %v2716
        %v2718 = vpop.f32.mrf.mxu0
        %2719 = vmatprep.mubr.f32.mxu0 0.0
        %2720 = vmatmul.mubr.f32.gmra.mxu0 %v2549
        %v2721 = vpop.f32.mrf.mxu0
        %v2722 = vadd.f32 0.0, %v2721
        %v2723 = vpop.f32.mrf.mxu0
        %2724 = vmatprep.mubr.f32.mxu0 0.0
        %2725 = vmatmul.mubr.f32.gmra.mxu0 %v2552
        %v2726 = vpop.f32.mrf.mxu0
        %v2727 = vadd.f32 0.0, %v2726
        %v2728 = vpop.f32.mrf.mxu0
        %2729 = vmatprep.mubr.f32.mxu0 0.0
        %2730 = vmatmul.mubr.f32.gmra.mxu0 %v2555
        %v2731 = vpop.f32.mrf.mxu0
        %v2732 = vadd.f32 0.0, %v2731
        %v2733 = vpop.f32.mrf.mxu0
        %2734 = vmatprep.mubr.f32.mxu0 0.0
        %2735 = vmatmul.mubr.f32.gmra.mxu0 %v2558
        %v2736 = vpop.f32.mrf.mxu0
        %v2737 = vadd.f32 0.0, %v2736
        %v2738 = vpop.f32.mrf.mxu0
        %2739 = vmatprep.mubr.f32.mxu0 0.0
        %2740 = vmatmul.mubr.f32.gmra.mxu0 %v2561
        %v2741 = vpop.f32.mrf.mxu0
        %v2742 = vadd.f32 0.0, %v2741
        %v2743 = vpop.f32.mrf.mxu0
        %2744 = vmatprep.mubr.f32.mxu0 0.0
        %2745 = vmatmul.mubr.f32.gmra.mxu0 %v2564
        %v2746 = vpop.f32.mrf.mxu0
        %v2747 = vadd.f32 0.0, %v2746
        %v2748 = vpop.f32.mrf.mxu0
        %2749 = vmatprep.mubr.f32.mxu0 0.0
        %2750 = vmatmul.mubr.f32.gmra.mxu0 %v2567
        %v2751 = vpop.f32.mrf.mxu0
        %v2752 = vadd.f32 0.0, %v2751
        %v2753 = vpop.f32.mrf.mxu0
        %2754 = vmatprep.mubr.f32.mxu0 0.0
        %2755 = vmatmul.mubr.f32.gmra.mxu0 %v2570
        %v2756 = vpop.f32.mrf.mxu0
        %v2757 = vadd.f32 0.0, %v2756
        %v2758 = vpop.f32.mrf.mxu0
        %2759 = vmatprep.mubr.f32.mxu0 0.0
        %2760 = vmatmul.mubr.f32.gmra.mxu0 %v2573
        %v2761 = vpop.f32.mrf.mxu0
        %v2762 = vadd.f32 0.0, %v2761
        %v2763 = vpop.f32.mrf.mxu0
        %2764 = vmatprep.mubr.f32.mxu0 0.0
        %2765 = vmatmul.mubr.f32.gmra.mxu0 %v2576
        %v2766 = vpop.f32.mrf.mxu0
        %v2767 = vadd.f32 0.0, %v2766
        %v2768 = vpop.f32.mrf.mxu0
        %2769 = vmatprep.mubr.f32.mxu0 0.0
        %2770 = vmatmul.mubr.f32.gmra.mxu0 %v2579
        %v2771 = vpop.f32.mrf.mxu0
        %v2772 = vadd.f32 0.0, %v2771
        %v2773 = vpop.f32.mrf.mxu0
        %2774 = vmatprep.mubr.f32.mxu0 0.0
        %2775 = vmatmul.mubr.f32.gmra.mxu0 %v2582
        %v2776 = vpop.f32.mrf.mxu0
        %v2777 = vadd.f32 0.0, %v2776
        %v2778 = vpop.f32.mrf.mxu0
        %2779 = vmatprep.mubr.f32.mxu0 0.0
        %2780 = vmatmul.mubr.f32.gmra.mxu0 %v2585
        %v2781 = vpop.f32.mrf.mxu0
        %v2782 = vadd.f32 0.0, %v2781
        %v2783 = vpop.f32.mrf.mxu0
        %2784 = vmatprep.mubr.f32.mxu0 0.0
        %2785 = vmatmul.mubr.f32.gmra.mxu0 %v2588
        %v2786 = vpop.f32.mrf.mxu0
        %v2787 = vadd.f32 0.0, %v2786
        %v2788 = vpop.f32.mrf.mxu0
        %2789 = vmatprep.mubr.f32.mxu0 0.0
        %2790 = vmatmul.mubr.f32.gmra.mxu0 %v2591
        %v2791 = vpop.f32.mrf.mxu0
        %v2792 = vadd.f32 0.0, %v2791
        %v2793 = vpop.f32.mrf.mxu0
        %2794 = vmatprep.mubr.f32.mxu0 0.0
        %2795 = vmatmul.mubr.f32.gmra.mxu0 %v2594
        %v2796 = vpop.f32.mrf.mxu0
        %v2797 = vadd.f32 0.0, %v2796
        %v2798 = vpop.f32.mrf.mxu0
        %2799 = vmatprep.mubr.f32.mxu0 0.0
        %2800 = vmatmul.mubr.f32.gmra.mxu0 %v2597
        %v2801 = vpop.f32.mrf.mxu0
        %v2802 = vadd.f32 0.0, %v2801
        %v2803 = vpop.f32.mrf.mxu0
        %2804 = vmatprep.mubr.f32.mxu0 0.0
        %2805 = vmatmul.mubr.f32.gmra.mxu0 %v2600
        %v2806 = vpop.f32.mrf.mxu0
        %v2807 = vadd.f32 0.0, %v2806
        %v2808 = vpop.f32.mrf.mxu0
        %2809 = vmatprep.mubr.f32.mxu0 0.0
        %2810 = vmatmul.mubr.f32.gmra.mxu0 %v2603
        %v2811 = vpop.f32.mrf.mxu0
        %v2812 = vadd.f32 0.0, %v2811
        %v2813 = vpop.f32.mrf.mxu0
        %2814 = vmatprep.mubr.f32.mxu0 0.0
        %2815 = vmatmul.mubr.f32.gmra.mxu0 %v2606
        %v2816 = vpop.f32.mrf.mxu0
        %v2817 = vadd.f32 0.0, %v2816
        %v2818 = vpop.f32.mrf.mxu0
        %2819 = vmatprep.mubr.f32.mxu0 0.0
        %2820 = vmatmul.mubr.f32.gmra.mxu0 %v2609
        %v2821 = vpop.f32.mrf.mxu0
        %v2822 = vadd.f32 0.0, %v2821
        %v2823 = vpop.f32.mrf.mxu0
        %2824 = vmatprep.mubr.f32.mxu0 0.0
        %2825 = vmatmul.mubr.f32.gmra.mxu0 %v2612
        %v2826 = vpop.f32.mrf.mxu0
        %v2827 = vadd.f32 0.0, %v2826
        %v2828 = vpop.f32.mrf.mxu0
        %2829 = vmatprep.mubr.f32.mxu0 0.0
        %2830 = vmatmul.mubr.f32.gmra.mxu0 %v2615
        %v2831 = vpop.f32.mrf.mxu0
        %v2832 = vadd.f32 0.0, %v2831
        %v2833 = vpop.f32.mrf.mxu0
        %2834 = vmatprep.mubr.f32.mxu0 0.0
        %2835 = vmatmul.mubr.f32.gmra.mxu0 %v2618
        %v2836 = vpop.f32.mrf.mxu0
        %v2837 = vadd.f32 0.0, %v2836
        %v2838 = vpop.f32.mrf.mxu0
        %2839 = vmatprep.mubr.f32.mxu0 0.0
        %2840 = vmatmul.mubr.f32.gmra.mxu0 %v2621
        %v2841 = vpop.f32.mrf.mxu0
        %v2842 = vadd.f32 0.0, %v2841
        %v2843 = vpop.f32.mrf.mxu0
        %2844 = vmatprep.mubr.f32.mxu0 0.0
        %2845 = vmatmul.mubr.f32.gmra.mxu0 %v2624
        %v2846 = vpop.f32.mrf.mxu0
        %v2847 = vadd.f32 0.0, %v2846
        %v2848 = vpop.f32.mrf.mxu0
        %2849 = vmatprep.mubr.f32.mxu0 0.0
        %2850 = vmatmul.mubr.f32.gmra.mxu0 %v2627
        %v2851 = vpop.f32.mrf.mxu0
        %v2852 = vadd.f32 0.0, %v2851
        %v2853 = vpop.f32.mrf.mxu0
        %2854 = vmatprep.mubr.f32.mxu0 0.0
        %2855 = vmatmul.mubr.f32.gmra.mxu0 %v2630
        %v2856 = vpop.f32.mrf.mxu0
        %v2857 = vadd.f32 0.0, %v2856
        %v2858 = vpop.f32.mrf.mxu0
        %2859 = vdwg.mxu0
        %v2860 = vadd.f32 %v2469, %v2702
        %v2861 = vadd.f32 %v2470, %v2707
        %v2862 = vadd.f32 %v2471, %v2712
        %v2863 = vadd.f32 %v2472, %v2717
        %v2864 = vadd.f32 %v2473, %v2722
        %v2865 = vadd.f32 %v2474, %v2727
        %v2866 = vadd.f32 %v2475, %v2732
        %v2867 = vadd.f32 %v2476, %v2737
        %v2868 = vadd.f32 %v2477, %v2742
        %v2869 = vadd.f32 %v2478, %v2747
        %v2870 = vadd.f32 %v2479, %v2752
        %v2871 = vadd.f32 %v2480, %v2757
        %v2872 = vadd.f32 %v2481, %v2762
        %v2873 = vadd.f32 %v2482, %v2767
        %v2874 = vadd.f32 %v2483, %v2772
        %v2875 = vadd.f32 %v2484, %v2777
        %v2876 = vadd.f32 %v2485, %v2782
        %v2877 = vadd.f32 %v2486, %v2787
        %v2878 = vadd.f32 %v2487, %v2792
        %v2879 = vadd.f32 %v2488, %v2797
        %v2880 = vadd.f32 %v2489, %v2802
        %v2881 = vadd.f32 %v2490, %v2807
        %v2882 = vadd.f32 %v2491, %v2812
        %v2883 = vadd.f32 %v2492, %v2817
        %v2884 = vadd.f32 %v2493, %v2822
        %v2885 = vadd.f32 %v2494, %v2827
        %v2886 = vadd.f32 %v2495, %v2832
        %v2887 = vadd.f32 %v2496, %v2837
        %v2888 = vadd.f32 %v2497, %v2842
        %v2889 = vadd.f32 %v2498, %v2847
        %v2890 = vadd.f32 %v2499, %v2852
        %v2891 = vadd.f32 %v2500, %v2857
        %v2892 = vld [vmem:[%s2501 + $0x1] sm:$0xff]
        %v2893 = vld [vmem:[%s2501 + $0x9] sm:$0xff]
        %v2894 = vld [vmem:[%s2501 + $0x19] sm:$0xff]
        %v2895 = vld [vmem:[%s2501 + $0x21] sm:$0xff]
        %v2896 = vld [vmem:[%s2501 + $0x31] sm:$0xff]
        %v2897 = vld [vmem:[%s2501 + $0x39] sm:$0xff]
        %v2898 = vld [vmem:[%s2501 + $0x49] sm:$0xff]
        %v2899 = vld [vmem:[%s2501 + $0x51] sm:$0xff]
        %v2900 = vld [vmem:[%s2501 + $0x61] sm:$0xff]
        %v2901 = vld [vmem:[%s2501 + $0x69] sm:$0xff]
        %v2902 = vld [vmem:[%s2501 + $0x79] sm:$0xff]
        %v2903 = vld [vmem:[%s2501 + $0x81] sm:$0xff]
        %v2904 = vld [vmem:[%s2501 + $0x91] sm:$0xff]
        %v2905 = vld [vmem:[%s2501 + $0x99] sm:$0xff]
        %v2906 = vld [vmem:[%s2501 + $0xa9] sm:$0xff]
        %v2907 = vld [vmem:[%s2501 + $0xb1] sm:$0xff]
        %v2908 = vld [vmem:[%s2501 + $0xc1] sm:$0xff]
        %v2909 = vld [vmem:[%s2501 + $0xc9] sm:$0xff]
        %v2910 = vld [vmem:[%s2501 + $0xd9] sm:$0xff]
        %v2911 = vld [vmem:[%s2501 + $0xe1] sm:$0xff]
        %v2912 = vld [vmem:[%s2501 + $0xf1] sm:$0xff]
        %v2913 = vld [vmem:[%s2501 + $0xf9] sm:$0xff]
        %v2914 = vld [vmem:[%s2501 + $0x109] sm:$0xff]
        %v2915 = vld [vmem:[%s2501 + $0x111] sm:$0xff]
        %v2916 = vld [vmem:[%s2501 + $0x121] sm:$0xff]
        %v2917 = vld [vmem:[%s2501 + $0x129] sm:$0xff]
        %v2918 = vld [vmem:[%s2501 + $0x139] sm:$0xff]
        %v2919 = vld [vmem:[%s2501 + $0x141] sm:$0xff]
        %v2920 = vld [vmem:[%s2501 + $0x151] sm:$0xff]
        %v2921 = vld [vmem:[%s2501 + $0x159] sm:$0xff]
        %v2922 = vld [vmem:[%s2501 + $0x169] sm:$0xff]
        %v2923 = vld [vmem:[%s2501 + $0x171] sm:$0xff]
        %s2924 = scalar_lea.vmem %s1, 28
        %v2925 = vld [vmem:[%s2924] sm:$0xf]
        %v2927 = vsel %vm290, %v2892, 0
        %v2930 = vsel %vm290, %v2893, 0
        %v2933 = vsel %vm290, %v2894, 0
        %v2936 = vsel %vm290, %v2895, 0
        %v2939 = vsel %vm290, %v2896, 0
        %v2942 = vsel %vm290, %v2897, 0
        %v2945 = vsel %vm290, %v2898, 0
        %v2948 = vsel %vm290, %v2899, 0
        %v2951 = vsel %vm290, %v2900, 0
        %v2954 = vsel %vm290, %v2901, 0
        %v2957 = vsel %vm290, %v2902, 0
        %v2960 = vsel %vm290, %v2903, 0
        %v2963 = vsel %vm290, %v2904, 0
        %v2966 = vsel %vm290, %v2905, 0
        %v2969 = vsel %vm290, %v2906, 0
        %v2972 = vsel %vm290, %v2907, 0
        %v2975 = vsel %vm290, %v2908, 0
        %v2978 = vsel %vm290, %v2909, 0
        %v2981 = vsel %vm290, %v2910, 0
        %v2984 = vsel %vm290, %v2911, 0
        %v2987 = vsel %vm290, %v2912, 0
        %v2990 = vsel %vm290, %v2913, 0
        %v2993 = vsel %vm290, %v2914, 0
        %v2996 = vsel %vm290, %v2915, 0
        %v2999 = vsel %vm290, %v2916, 0
        %v3002 = vsel %vm290, %v2917, 0
        %v3005 = vsel %vm290, %v2918, 0
        %v3008 = vsel %vm290, %v2919, 0
        %v3011 = vsel %vm290, %v2920, 0
        %v3014 = vsel %vm290, %v2921, 0
        %v3017 = vsel %vm290, %v2922, 0
        %v3020 = vsel %vm290, %v2923, 0
        %v3023 = vsel %vm387, %v2925, 0
        %3025 = vmatprep.subr.mxu0 0.0
        %3026 = vmatpush1.msra.mxu0 0.0
        %3027 = vmatprep.subr.mxu0 0.0
        %3028 = vmatpush1.msra.mxu0 0.0
        %3029 = vmatprep.subr.mxu0 0.0
        %3030 = vmatpush1.msra.mxu0 0.0
        %3031 = vmatprep.subr.mxu0 0.0
        %3032 = vmatpush1.msra.mxu0 0.0
        %3033 = vmatprep.subr.mxu0 0.0
        %3034 = vmatpush1.msra.mxu0 0.0
        %3035 = vmatprep.subr.mxu0 0.0
        %3036 = vmatpush1.msra.mxu0 0.0
        %3037 = vmatprep.subr.mxu0 0.0
        %3038 = vmatpush1.msra.mxu0 0.0
        %3039 = vmatprep.subr.mxu0 0.0
        %3040 = vmatpush1.msra.mxu0 0.0
        %3041 = vmatprep.subr.mxu0 0.0
        %3042 = vmatpush1.msra.mxu0 0.0
        %3043 = vmatprep.subr.mxu0 0.0
        %3044 = vmatpush1.msra.mxu0 0.0
        %3045 = vmatprep.subr.mxu0 0.0
        %3046 = vmatpush1.msra.mxu0 0.0
        %3047 = vmatprep.subr.mxu0 0.0
        %3048 = vmatpush1.msra.mxu0 0.0
        %3049 = vmatprep.subr.mxu0 0.0
        %3050 = vmatpush1.msra.mxu0 0.0
        %3051 = vmatprep.subr.mxu0 0.0
        %3052 = vmatpush1.msra.mxu0 0.0
        %3053 = vmatprep.subr.mxu0 0.0
        %3054 = vmatpush1.msra.mxu0 0.0
        %3055 = vmatprep.subr.mxu0 0.0
        %3056 = vmatpush1.msra.mxu0 %v3023
        %3057 = vmatprep.subr.mxu0 0.0
        %3058 = vmatpush2.msra.mxu0 0.0
        %3059 = vmatprep.subr.mxu0 0.0
        %3060 = vmatpush2.msra.mxu0 0.0
        %3061 = vmatprep.subr.mxu0 0.0
        %3062 = vmatpush2.msra.mxu0 0.0
        %3063 = vmatprep.subr.mxu0 0.0
        %3064 = vmatpush2.msra.mxu0 0.0
        %3065 = vmatprep.subr.mxu0 0.0
        %3066 = vmatpush2.msra.mxu0 0.0
        %3067 = vmatprep.subr.mxu0 0.0
        %3068 = vmatpush2.msra.mxu0 0.0
        %3069 = vmatprep.subr.mxu0 0.0
        %3070 = vmatpush2.msra.mxu0 0.0
        %3071 = vmatprep.subr.mxu0 0.0
        %3072 = vmatpush2.msra.mxu0 0.0
        %3073 = vmatprep.subr.mxu0 0.0
        %3074 = vmatpush2.msra.mxu0 0.0
        %3075 = vmatprep.subr.mxu0 0.0
        %3076 = vmatpush2.msra.mxu0 0.0
        %3077 = vmatprep.subr.mxu0 0.0
        %3078 = vmatpush2.msra.mxu0 0.0
        %3079 = vmatprep.subr.mxu0 0.0
        %3080 = vmatpush2.msra.mxu0 0.0
        %3081 = vmatprep.subr.mxu0 0.0
        %3082 = vmatpush2.msra.mxu0 0.0
        %3083 = vmatprep.subr.mxu0 0.0
        %3084 = vmatpush2.msra.mxu0 0.0
        %3085 = vmatprep.subr.mxu0 0.0
        %3086 = vmatpush2.msra.mxu0 0.0
        %3087 = vmatprep.subr.mxu0 0.0
        %3088 = vmatpush2.msra.mxu0 0.0
        %3089 = vmatprep.mubr.f32.mxu0 0.0
        %3090 = vmatmul.mubr.f32.gmra.mxu0 %v2927
        %v3091 = vpop.f32.mrf.mxu0
        %v3092 = vadd.f32 0.0, %v3091
        %v3093 = vpop.f32.mrf.mxu0
        %3094 = vmatprep.mubr.f32.mxu0 0.0
        %3095 = vmatmul.mubr.f32.gmra.mxu0 %v2930
        %v3096 = vpop.f32.mrf.mxu0
        %v3097 = vadd.f32 0.0, %v3096
        %v3098 = vpop.f32.mrf.mxu0
        %3099 = vmatprep.mubr.f32.mxu0 0.0
        %3100 = vmatmul.mubr.f32.gmra.mxu0 %v2933
        %v3101 = vpop.f32.mrf.mxu0
        %v3102 = vadd.f32 0.0, %v3101
        %v3103 = vpop.f32.mrf.mxu0
        %3104 = vmatprep.mubr.f32.mxu0 0.0
        %3105 = vmatmul.mubr.f32.gmra.mxu0 %v2936
        %v3106 = vpop.f32.mrf.mxu0
        %v3107 = vadd.f32 0.0, %v3106
        %v3108 = vpop.f32.mrf.mxu0
        %3109 = vmatprep.mubr.f32.mxu0 0.0
        %3110 = vmatmul.mubr.f32.gmra.mxu0 %v2939
        %v3111 = vpop.f32.mrf.mxu0
        %v3112 = vadd.f32 0.0, %v3111
        %v3113 = vpop.f32.mrf.mxu0
        %3114 = vmatprep.mubr.f32.mxu0 0.0
        %3115 = vmatmul.mubr.f32.gmra.mxu0 %v2942
        %v3116 = vpop.f32.mrf.mxu0
        %v3117 = vadd.f32 0.0, %v3116
        %v3118 = vpop.f32.mrf.mxu0
        %3119 = vmatprep.mubr.f32.mxu0 0.0
        %3120 = vmatmul.mubr.f32.gmra.mxu0 %v2945
        %v3121 = vpop.f32.mrf.mxu0
        %v3122 = vadd.f32 0.0, %v3121
        %v3123 = vpop.f32.mrf.mxu0
        %3124 = vmatprep.mubr.f32.mxu0 0.0
        %3125 = vmatmul.mubr.f32.gmra.mxu0 %v2948
        %v3126 = vpop.f32.mrf.mxu0
        %v3127 = vadd.f32 0.0, %v3126
        %v3128 = vpop.f32.mrf.mxu0
        %3129 = vmatprep.mubr.f32.mxu0 0.0
        %3130 = vmatmul.mubr.f32.gmra.mxu0 %v2951
        %v3131 = vpop.f32.mrf.mxu0
        %v3132 = vadd.f32 0.0, %v3131
        %v3133 = vpop.f32.mrf.mxu0
        %3134 = vmatprep.mubr.f32.mxu0 0.0
        %3135 = vmatmul.mubr.f32.gmra.mxu0 %v2954
        %v3136 = vpop.f32.mrf.mxu0
        %v3137 = vadd.f32 0.0, %v3136
        %v3138 = vpop.f32.mrf.mxu0
        %3139 = vmatprep.mubr.f32.mxu0 0.0
        %3140 = vmatmul.mubr.f32.gmra.mxu0 %v2957
        %v3141 = vpop.f32.mrf.mxu0
        %v3142 = vadd.f32 0.0, %v3141
        %v3143 = vpop.f32.mrf.mxu0
        %3144 = vmatprep.mubr.f32.mxu0 0.0
        %3145 = vmatmul.mubr.f32.gmra.mxu0 %v2960
        %v3146 = vpop.f32.mrf.mxu0
        %v3147 = vadd.f32 0.0, %v3146
        %v3148 = vpop.f32.mrf.mxu0
        %3149 = vmatprep.mubr.f32.mxu0 0.0
        %3150 = vmatmul.mubr.f32.gmra.mxu0 %v2963
        %v3151 = vpop.f32.mrf.mxu0
        %v3152 = vadd.f32 0.0, %v3151
        %v3153 = vpop.f32.mrf.mxu0
        %3154 = vmatprep.mubr.f32.mxu0 0.0
        %3155 = vmatmul.mubr.f32.gmra.mxu0 %v2966
        %v3156 = vpop.f32.mrf.mxu0
        %v3157 = vadd.f32 0.0, %v3156
        %v3158 = vpop.f32.mrf.mxu0
        %3159 = vmatprep.mubr.f32.mxu0 0.0
        %3160 = vmatmul.mubr.f32.gmra.mxu0 %v2969
        %v3161 = vpop.f32.mrf.mxu0
        %v3162 = vadd.f32 0.0, %v3161
        %v3163 = vpop.f32.mrf.mxu0
        %3164 = vmatprep.mubr.f32.mxu0 0.0
        %3165 = vmatmul.mubr.f32.gmra.mxu0 %v2972
        %v3166 = vpop.f32.mrf.mxu0
        %v3167 = vadd.f32 0.0, %v3166
        %v3168 = vpop.f32.mrf.mxu0
        %3169 = vmatprep.mubr.f32.mxu0 0.0
        %3170 = vmatmul.mubr.f32.gmra.mxu0 %v2975
        %v3171 = vpop.f32.mrf.mxu0
        %v3172 = vadd.f32 0.0, %v3171
        %v3173 = vpop.f32.mrf.mxu0
        %3174 = vmatprep.mubr.f32.mxu0 0.0
        %3175 = vmatmul.mubr.f32.gmra.mxu0 %v2978
        %v3176 = vpop.f32.mrf.mxu0
        %v3177 = vadd.f32 0.0, %v3176
        %v3178 = vpop.f32.mrf.mxu0
        %3179 = vmatprep.mubr.f32.mxu0 0.0
        %3180 = vmatmul.mubr.f32.gmra.mxu0 %v2981
        %v3181 = vpop.f32.mrf.mxu0
        %v3182 = vadd.f32 0.0, %v3181
        %v3183 = vpop.f32.mrf.mxu0
        %3184 = vmatprep.mubr.f32.mxu0 0.0
        %3185 = vmatmul.mubr.f32.gmra.mxu0 %v2984
        %v3186 = vpop.f32.mrf.mxu0
        %v3187 = vadd.f32 0.0, %v3186
        %v3188 = vpop.f32.mrf.mxu0
        %3189 = vmatprep.mubr.f32.mxu0 0.0
        %3190 = vmatmul.mubr.f32.gmra.mxu0 %v2987
        %v3191 = vpop.f32.mrf.mxu0
        %v3192 = vadd.f32 0.0, %v3191
        %v3193 = vpop.f32.mrf.mxu0
        %3194 = vmatprep.mubr.f32.mxu0 0.0
        %3195 = vmatmul.mubr.f32.gmra.mxu0 %v2990
        %v3196 = vpop.f32.mrf.mxu0
        %v3197 = vadd.f32 0.0, %v3196
        %v3198 = vpop.f32.mrf.mxu0
        %3199 = vmatprep.mubr.f32.mxu0 0.0
        %3200 = vmatmul.mubr.f32.gmra.mxu0 %v2993
        %v3201 = vpop.f32.mrf.mxu0
        %v3202 = vadd.f32 0.0, %v3201
        %v3203 = vpop.f32.mrf.mxu0
        %3204 = vmatprep.mubr.f32.mxu0 0.0
        %3205 = vmatmul.mubr.f32.gmra.mxu0 %v2996
        %v3206 = vpop.f32.mrf.mxu0
        %v3207 = vadd.f32 0.0, %v3206
        %v3208 = vpop.f32.mrf.mxu0
        %3209 = vmatprep.mubr.f32.mxu0 0.0
        %3210 = vmatmul.mubr.f32.gmra.mxu0 %v2999
        %v3211 = vpop.f32.mrf.mxu0
        %v3212 = vadd.f32 0.0, %v3211
        %v3213 = vpop.f32.mrf.mxu0
        %3214 = vmatprep.mubr.f32.mxu0 0.0
        %3215 = vmatmul.mubr.f32.gmra.mxu0 %v3002
        %v3216 = vpop.f32.mrf.mxu0
        %v3217 = vadd.f32 0.0, %v3216
        %v3218 = vpop.f32.mrf.mxu0
        %3219 = vmatprep.mubr.f32.mxu0 0.0
        %3220 = vmatmul.mubr.f32.gmra.mxu0 %v3005
        %v3221 = vpop.f32.mrf.mxu0
        %v3222 = vadd.f32 0.0, %v3221
        %v3223 = vpop.f32.mrf.mxu0
        %3224 = vmatprep.mubr.f32.mxu0 0.0
        %3225 = vmatmul.mubr.f32.gmra.mxu0 %v3008
        %v3226 = vpop.f32.mrf.mxu0
        %v3227 = vadd.f32 0.0, %v3226
        %v3228 = vpop.f32.mrf.mxu0
        %3229 = vmatprep.mubr.f32.mxu0 0.0
        %3230 = vmatmul.mubr.f32.gmra.mxu0 %v3011
        %v3231 = vpop.f32.mrf.mxu0
        %v3232 = vadd.f32 0.0, %v3231
        %v3233 = vpop.f32.mrf.mxu0
        %3234 = vmatprep.mubr.f32.mxu0 0.0
        %3235 = vmatmul.mubr.f32.gmra.mxu0 %v3014
        %v3236 = vpop.f32.mrf.mxu0
        %v3237 = vadd.f32 0.0, %v3236
        %v3238 = vpop.f32.mrf.mxu0
        %3239 = vmatprep.mubr.f32.mxu0 0.0
        %3240 = vmatmul.mubr.f32.gmra.mxu0 %v3017
        %v3241 = vpop.f32.mrf.mxu0
        %v3242 = vadd.f32 0.0, %v3241
        %v3243 = vpop.f32.mrf.mxu0
        %3244 = vmatprep.mubr.f32.mxu0 0.0
        %3245 = vmatmul.mubr.f32.gmra.mxu0 %v3020
        %v3246 = vpop.f32.mrf.mxu0
        %v3247 = vadd.f32 0.0, %v3246
        %v3248 = vpop.f32.mrf.mxu0
        %3249 = vdwg.mxu0
        %v3250 = vadd.f32 %v2860, %v3092
        %v3251 = vadd.f32 %v2861, %v3097
        %v3252 = vadd.f32 %v2862, %v3102
        %v3253 = vadd.f32 %v2863, %v3107
        %v3254 = vadd.f32 %v2864, %v3112
        %v3255 = vadd.f32 %v2865, %v3117
        %v3256 = vadd.f32 %v2866, %v3122
        %v3257 = vadd.f32 %v2867, %v3127
        %v3258 = vadd.f32 %v2868, %v3132
        %v3259 = vadd.f32 %v2869, %v3137
        %v3260 = vadd.f32 %v2870, %v3142
        %v3261 = vadd.f32 %v2871, %v3147
        %v3262 = vadd.f32 %v2872, %v3152
        %v3263 = vadd.f32 %v2873, %v3157
        %v3264 = vadd.f32 %v2874, %v3162
        %v3265 = vadd.f32 %v2875, %v3167
        %v3266 = vadd.f32 %v2876, %v3172
        %v3267 = vadd.f32 %v2877, %v3177
        %v3268 = vadd.f32 %v2878, %v3182
        %v3269 = vadd.f32 %v2879, %v3187
        %v3270 = vadd.f32 %v2880, %v3192
        %v3271 = vadd.f32 %v2881, %v3197
        %v3272 = vadd.f32 %v2882, %v3202
        %v3273 = vadd.f32 %v2883, %v3207
        %v3274 = vadd.f32 %v2884, %v3212
        %v3275 = vadd.f32 %v2885, %v3217
        %v3276 = vadd.f32 %v2886, %v3222
        %v3277 = vadd.f32 %v2887, %v3227
        %v3278 = vadd.f32 %v2888, %v3232
        %v3279 = vadd.f32 %v2889, %v3237
        %v3280 = vadd.f32 %v2890, %v3242
        %v3281 = vadd.f32 %v2891, %v3247
        %v3282 = vld [vmem:[%s2501 + $0x2] sm:$0xff]
        %v3283 = vld [vmem:[%s2501 + $0xa] sm:$0xff]
        %v3284 = vld [vmem:[%s2501 + $0x1a] sm:$0xff]
        %v3285 = vld [vmem:[%s2501 + $0x22] sm:$0xff]
        %v3286 = vld [vmem:[%s2501 + $0x32] sm:$0xff]
        %v3287 = vld [vmem:[%s2501 + $0x3a] sm:$0xff]
        %v3288 = vld [vmem:[%s2501 + $0x4a] sm:$0xff]
        %v3289 = vld [vmem:[%s2501 + $0x52] sm:$0xff]
        %v3290 = vld [vmem:[%s2501 + $0x62] sm:$0xff]
        %v3291 = vld [vmem:[%s2501 + $0x6a] sm:$0xff]
        %v3292 = vld [vmem:[%s2501 + $0x7a] sm:$0xff]
        %v3293 = vld [vmem:[%s2501 + $0x82] sm:$0xff]
        %v3294 = vld [vmem:[%s2501 + $0x92] sm:$0xff]
        %v3295 = vld [vmem:[%s2501 + $0x9a] sm:$0xff]
        %v3296 = vld [vmem:[%s2501 + $0xaa] sm:$0xff]
        %v3297 = vld [vmem:[%s2501 + $0xb2] sm:$0xff]
        %v3298 = vld [vmem:[%s2501 + $0xc2] sm:$0xff]
        %v3299 = vld [vmem:[%s2501 + $0xca] sm:$0xff]
        %v3300 = vld [vmem:[%s2501 + $0xda] sm:$0xff]
        %v3301 = vld [vmem:[%s2501 + $0xe2] sm:$0xff]
        %v3302 = vld [vmem:[%s2501 + $0xf2] sm:$0xff]
        %v3303 = vld [vmem:[%s2501 + $0xfa] sm:$0xff]
        %v3304 = vld [vmem:[%s2501 + $0x10a] sm:$0xff]
        %v3305 = vld [vmem:[%s2501 + $0x112] sm:$0xff]
        %v3306 = vld [vmem:[%s2501 + $0x122] sm:$0xff]
        %v3307 = vld [vmem:[%s2501 + $0x12a] sm:$0xff]
        %v3308 = vld [vmem:[%s2501 + $0x13a] sm:$0xff]
        %v3309 = vld [vmem:[%s2501 + $0x142] sm:$0xff]
        %v3310 = vld [vmem:[%s2501 + $0x152] sm:$0xff]
        %v3311 = vld [vmem:[%s2501 + $0x15a] sm:$0xff]
        %v3312 = vld [vmem:[%s2501 + $0x16a] sm:$0xff]
        %v3313 = vld [vmem:[%s2501 + $0x172] sm:$0xff]
        %s3314 = scalar_lea.vmem %s1, 32
        %v3315 = vld [vmem:[%s3314] sm:$0xf]
        %v3317 = vsel %vm290, %v3282, 0
        %v3320 = vsel %vm290, %v3283, 0
        %v3323 = vsel %vm290, %v3284, 0
        %v3326 = vsel %vm290, %v3285, 0
        %v3329 = vsel %vm290, %v3286, 0
        %v3332 = vsel %vm290, %v3287, 0
        %v3335 = vsel %vm290, %v3288, 0
        %v3338 = vsel %vm290, %v3289, 0
        %v3341 = vsel %vm290, %v3290, 0
        %v3344 = vsel %vm290, %v3291, 0
        %v3347 = vsel %vm290, %v3292, 0
        %v3350 = vsel %vm290, %v3293, 0
        %v3353 = vsel %vm290, %v3294, 0
        %v3356 = vsel %vm290, %v3295, 0
        %v3359 = vsel %vm290, %v3296, 0
        %v3362 = vsel %vm290, %v3297, 0
        %v3365 = vsel %vm290, %v3298, 0
        %v3368 = vsel %vm290, %v3299, 0
        %v3371 = vsel %vm290, %v3300, 0
        %v3374 = vsel %vm290, %v3301, 0
        %v3377 = vsel %vm290, %v3302, 0
        %v3380 = vsel %vm290, %v3303, 0
        %v3383 = vsel %vm290, %v3304, 0
        %v3386 = vsel %vm290, %v3305, 0
        %v3389 = vsel %vm290, %v3306, 0
        %v3392 = vsel %vm290, %v3307, 0
        %v3395 = vsel %vm290, %v3308, 0
        %v3398 = vsel %vm290, %v3309, 0
        %v3401 = vsel %vm290, %v3310, 0
        %v3404 = vsel %vm290, %v3311, 0
        %v3407 = vsel %vm290, %v3312, 0
        %v3410 = vsel %vm290, %v3313, 0
        %v3413 = vsel %vm387, %v3315, 0
        %3415 = vmatprep.subr.mxu0 0.0
        %3416 = vmatpush1.msra.mxu0 0.0
        %3417 = vmatprep.subr.mxu0 0.0
        %3418 = vmatpush1.msra.mxu0 0.0
        %3419 = vmatprep.subr.mxu0 0.0
        %3420 = vmatpush1.msra.mxu0 0.0
        %3421 = vmatprep.subr.mxu0 0.0
        %3422 = vmatpush1.msra.mxu0 0.0
        %3423 = vmatprep.subr.mxu0 0.0
        %3424 = vmatpush1.msra.mxu0 0.0
        %3425 = vmatprep.subr.mxu0 0.0
        %3426 = vmatpush1.msra.mxu0 0.0
        %3427 = vmatprep.subr.mxu0 0.0
        %3428 = vmatpush1.msra.mxu0 0.0
        %3429 = vmatprep.subr.mxu0 0.0
        %3430 = vmatpush1.msra.mxu0 0.0
        %3431 = vmatprep.subr.mxu0 0.0
        %3432 = vmatpush1.msra.mxu0 0.0
        %3433 = vmatprep.subr.mxu0 0.0
        %3434 = vmatpush1.msra.mxu0 0.0
        %3435 = vmatprep.subr.mxu0 0.0
        %3436 = vmatpush1.msra.mxu0 0.0
        %3437 = vmatprep.subr.mxu0 0.0
        %3438 = vmatpush1.msra.mxu0 0.0
        %3439 = vmatprep.subr.mxu0 0.0
        %3440 = vmatpush1.msra.mxu0 0.0
        %3441 = vmatprep.subr.mxu0 0.0
        %3442 = vmatpush1.msra.mxu0 0.0
        %3443 = vmatprep.subr.mxu0 0.0
        %3444 = vmatpush1.msra.mxu0 0.0
        %3445 = vmatprep.subr.mxu0 0.0
        %3446 = vmatpush1.msra.mxu0 %v3413
        %3447 = vmatprep.subr.mxu0 0.0
        %3448 = vmatpush2.msra.mxu0 0.0
        %3449 = vmatprep.subr.mxu0 0.0
        %3450 = vmatpush2.msra.mxu0 0.0
        %3451 = vmatprep.subr.mxu0 0.0
        %3452 = vmatpush2.msra.mxu0 0.0
        %3453 = vmatprep.subr.mxu0 0.0
        %3454 = vmatpush2.msra.mxu0 0.0
        %3455 = vmatprep.subr.mxu0 0.0
        %3456 = vmatpush2.msra.mxu0 0.0
        %3457 = vmatprep.subr.mxu0 0.0
        %3458 = vmatpush2.msra.mxu0 0.0
        %3459 = vmatprep.subr.mxu0 0.0
        %3460 = vmatpush2.msra.mxu0 0.0
        %3461 = vmatprep.subr.mxu0 0.0
        %3462 = vmatpush2.msra.mxu0 0.0
        %3463 = vmatprep.subr.mxu0 0.0
        %3464 = vmatpush2.msra.mxu0 0.0
        %3465 = vmatprep.subr.mxu0 0.0
        %3466 = vmatpush2.msra.mxu0 0.0
        %3467 = vmatprep.subr.mxu0 0.0
        %3468 = vmatpush2.msra.mxu0 0.0
        %3469 = vmatprep.subr.mxu0 0.0
        %3470 = vmatpush2.msra.mxu0 0.0
        %3471 = vmatprep.subr.mxu0 0.0
        %3472 = vmatpush2.msra.mxu0 0.0
        %3473 = vmatprep.subr.mxu0 0.0
        %3474 = vmatpush2.msra.mxu0 0.0
        %3475 = vmatprep.subr.mxu0 0.0
        %3476 = vmatpush2.msra.mxu0 0.0
        %3477 = vmatprep.subr.mxu0 0.0
        %3478 = vmatpush2.msra.mxu0 0.0
        %3479 = vmatprep.mubr.f32.mxu0 0.0
        %3480 = vmatmul.mubr.f32.gmra.mxu0 %v3317
        %v3481 = vpop.f32.mrf.mxu0
        %v3482 = vadd.f32 0.0, %v3481
        %v3483 = vpop.f32.mrf.mxu0
        %3484 = vmatprep.mubr.f32.mxu0 0.0
        %3485 = vmatmul.mubr.f32.gmra.mxu0 %v3320
        %v3486 = vpop.f32.mrf.mxu0
        %v3487 = vadd.f32 0.0, %v3486
        %v3488 = vpop.f32.mrf.mxu0
        %3489 = vmatprep.mubr.f32.mxu0 0.0
        %3490 = vmatmul.mubr.f32.gmra.mxu0 %v3323
        %v3491 = vpop.f32.mrf.mxu0
        %v3492 = vadd.f32 0.0, %v3491
        %v3493 = vpop.f32.mrf.mxu0
        %3494 = vmatprep.mubr.f32.mxu0 0.0
        %3495 = vmatmul.mubr.f32.gmra.mxu0 %v3326
        %v3496 = vpop.f32.mrf.mxu0
        %v3497 = vadd.f32 0.0, %v3496
        %v3498 = vpop.f32.mrf.mxu0
        %3499 = vmatprep.mubr.f32.mxu0 0.0
        %3500 = vmatmul.mubr.f32.gmra.mxu0 %v3329
        %v3501 = vpop.f32.mrf.mxu0
        %v3502 = vadd.f32 0.0, %v3501
        %v3503 = vpop.f32.mrf.mxu0
        %3504 = vmatprep.mubr.f32.mxu0 0.0
        %3505 = vmatmul.mubr.f32.gmra.mxu0 %v3332
        %v3506 = vpop.f32.mrf.mxu0
        %v3507 = vadd.f32 0.0, %v3506
        %v3508 = vpop.f32.mrf.mxu0
        %3509 = vmatprep.mubr.f32.mxu0 0.0
        %3510 = vmatmul.mubr.f32.gmra.mxu0 %v3335
        %v3511 = vpop.f32.mrf.mxu0
        %v3512 = vadd.f32 0.0, %v3511
        %v3513 = vpop.f32.mrf.mxu0
        %3514 = vmatprep.mubr.f32.mxu0 0.0
        %3515 = vmatmul.mubr.f32.gmra.mxu0 %v3338
        %v3516 = vpop.f32.mrf.mxu0
        %v3517 = vadd.f32 0.0, %v3516
        %v3518 = vpop.f32.mrf.mxu0
        %3519 = vmatprep.mubr.f32.mxu0 0.0
        %3520 = vmatmul.mubr.f32.gmra.mxu0 %v3341
        %v3521 = vpop.f32.mrf.mxu0
        %v3522 = vadd.f32 0.0, %v3521
        %v3523 = vpop.f32.mrf.mxu0
        %3524 = vmatprep.mubr.f32.mxu0 0.0
        %3525 = vmatmul.mubr.f32.gmra.mxu0 %v3344
        %v3526 = vpop.f32.mrf.mxu0
        %v3527 = vadd.f32 0.0, %v3526
        %v3528 = vpop.f32.mrf.mxu0
        %3529 = vmatprep.mubr.f32.mxu0 0.0
        %3530 = vmatmul.mubr.f32.gmra.mxu0 %v3347
        %v3531 = vpop.f32.mrf.mxu0
        %v3532 = vadd.f32 0.0, %v3531
        %v3533 = vpop.f32.mrf.mxu0
        %3534 = vmatprep.mubr.f32.mxu0 0.0
        %3535 = vmatmul.mubr.f32.gmra.mxu0 %v3350
        %v3536 = vpop.f32.mrf.mxu0
        %v3537 = vadd.f32 0.0, %v3536
        %v3538 = vpop.f32.mrf.mxu0
        %3539 = vmatprep.mubr.f32.mxu0 0.0
        %3540 = vmatmul.mubr.f32.gmra.mxu0 %v3353
        %v3541 = vpop.f32.mrf.mxu0
        %v3542 = vadd.f32 0.0, %v3541
        %v3543 = vpop.f32.mrf.mxu0
        %3544 = vmatprep.mubr.f32.mxu0 0.0
        %3545 = vmatmul.mubr.f32.gmra.mxu0 %v3356
        %v3546 = vpop.f32.mrf.mxu0
        %v3547 = vadd.f32 0.0, %v3546
        %v3548 = vpop.f32.mrf.mxu0
        %3549 = vmatprep.mubr.f32.mxu0 0.0
        %3550 = vmatmul.mubr.f32.gmra.mxu0 %v3359
        %v3551 = vpop.f32.mrf.mxu0
        %v3552 = vadd.f32 0.0, %v3551
        %v3553 = vpop.f32.mrf.mxu0
        %3554 = vmatprep.mubr.f32.mxu0 0.0
        %3555 = vmatmul.mubr.f32.gmra.mxu0 %v3362
        %v3556 = vpop.f32.mrf.mxu0
        %v3557 = vadd.f32 0.0, %v3556
        %v3558 = vpop.f32.mrf.mxu0
        %3559 = vmatprep.mubr.f32.mxu0 0.0
        %3560 = vmatmul.mubr.f32.gmra.mxu0 %v3365
        %v3561 = vpop.f32.mrf.mxu0
        %v3562 = vadd.f32 0.0, %v3561
        %v3563 = vpop.f32.mrf.mxu0
        %3564 = vmatprep.mubr.f32.mxu0 0.0
        %3565 = vmatmul.mubr.f32.gmra.mxu0 %v3368
        %v3566 = vpop.f32.mrf.mxu0
        %v3567 = vadd.f32 0.0, %v3566
        %v3568 = vpop.f32.mrf.mxu0
        %3569 = vmatprep.mubr.f32.mxu0 0.0
        %3570 = vmatmul.mubr.f32.gmra.mxu0 %v3371
        %v3571 = vpop.f32.mrf.mxu0
        %v3572 = vadd.f32 0.0, %v3571
        %v3573 = vpop.f32.mrf.mxu0
        %3574 = vmatprep.mubr.f32.mxu0 0.0
        %3575 = vmatmul.mubr.f32.gmra.mxu0 %v3374
        %v3576 = vpop.f32.mrf.mxu0
        %v3577 = vadd.f32 0.0, %v3576
        %v3578 = vpop.f32.mrf.mxu0
        %3579 = vmatprep.mubr.f32.mxu0 0.0
        %3580 = vmatmul.mubr.f32.gmra.mxu0 %v3377
        %v3581 = vpop.f32.mrf.mxu0
        %v3582 = vadd.f32 0.0, %v3581
        %v3583 = vpop.f32.mrf.mxu0
        %3584 = vmatprep.mubr.f32.mxu0 0.0
        %3585 = vmatmul.mubr.f32.gmra.mxu0 %v3380
        %v3586 = vpop.f32.mrf.mxu0
        %v3587 = vadd.f32 0.0, %v3586
        %v3588 = vpop.f32.mrf.mxu0
        %3589 = vmatprep.mubr.f32.mxu0 0.0
        %3590 = vmatmul.mubr.f32.gmra.mxu0 %v3383
        %v3591 = vpop.f32.mrf.mxu0
        %v3592 = vadd.f32 0.0, %v3591
        %v3593 = vpop.f32.mrf.mxu0
        %3594 = vmatprep.mubr.f32.mxu0 0.0
        %3595 = vmatmul.mubr.f32.gmra.mxu0 %v3386
        %v3596 = vpop.f32.mrf.mxu0
        %v3597 = vadd.f32 0.0, %v3596
        %v3598 = vpop.f32.mrf.mxu0
        %3599 = vmatprep.mubr.f32.mxu0 0.0
        %3600 = vmatmul.mubr.f32.gmra.mxu0 %v3389
        %v3601 = vpop.f32.mrf.mxu0
        %v3602 = vadd.f32 0.0, %v3601
        %v3603 = vpop.f32.mrf.mxu0
        %3604 = vmatprep.mubr.f32.mxu0 0.0
        %3605 = vmatmul.mubr.f32.gmra.mxu0 %v3392
        %v3606 = vpop.f32.mrf.mxu0
        %v3607 = vadd.f32 0.0, %v3606
        %v3608 = vpop.f32.mrf.mxu0
        %3609 = vmatprep.mubr.f32.mxu0 0.0
        %3610 = vmatmul.mubr.f32.gmra.mxu0 %v3395
        %v3611 = vpop.f32.mrf.mxu0
        %v3612 = vadd.f32 0.0, %v3611
        %v3613 = vpop.f32.mrf.mxu0
        %3614 = vmatprep.mubr.f32.mxu0 0.0
        %3615 = vmatmul.mubr.f32.gmra.mxu0 %v3398
        %v3616 = vpop.f32.mrf.mxu0
        %v3617 = vadd.f32 0.0, %v3616
        %v3618 = vpop.f32.mrf.mxu0
        %3619 = vmatprep.mubr.f32.mxu0 0.0
        %3620 = vmatmul.mubr.f32.gmra.mxu0 %v3401
        %v3621 = vpop.f32.mrf.mxu0
        %v3622 = vadd.f32 0.0, %v3621
        %v3623 = vpop.f32.mrf.mxu0
        %3624 = vmatprep.mubr.f32.mxu0 0.0
        %3625 = vmatmul.mubr.f32.gmra.mxu0 %v3404
        %v3626 = vpop.f32.mrf.mxu0
        %v3627 = vadd.f32 0.0, %v3626
        %v3628 = vpop.f32.mrf.mxu0
        %3629 = vmatprep.mubr.f32.mxu0 0.0
        %3630 = vmatmul.mubr.f32.gmra.mxu0 %v3407
        %v3631 = vpop.f32.mrf.mxu0
        %v3632 = vadd.f32 0.0, %v3631
        %v3633 = vpop.f32.mrf.mxu0
        %3634 = vmatprep.mubr.f32.mxu0 0.0
        %3635 = vmatmul.mubr.f32.gmra.mxu0 %v3410
        %v3636 = vpop.f32.mrf.mxu0
        %v3637 = vadd.f32 0.0, %v3636
        %v3638 = vpop.f32.mrf.mxu0
        %3639 = vdwg.mxu0
        %v3640 = vadd.f32 %v3250, %v3482
        %v3641 = vadd.f32 %v3251, %v3487
        %v3642 = vadd.f32 %v3252, %v3492
        %v3643 = vadd.f32 %v3253, %v3497
        %v3644 = vadd.f32 %v3254, %v3502
        %v3645 = vadd.f32 %v3255, %v3507
        %v3646 = vadd.f32 %v3256, %v3512
        %v3647 = vadd.f32 %v3257, %v3517
        %v3648 = vadd.f32 %v3258, %v3522
        %v3649 = vadd.f32 %v3259, %v3527
        %v3650 = vadd.f32 %v3260, %v3532
        %v3651 = vadd.f32 %v3261, %v3537
        %v3652 = vadd.f32 %v3262, %v3542
        %v3653 = vadd.f32 %v3263, %v3547
        %v3654 = vadd.f32 %v3264, %v3552
        %v3655 = vadd.f32 %v3265, %v3557
        %v3656 = vadd.f32 %v3266, %v3562
        %v3657 = vadd.f32 %v3267, %v3567
        %v3658 = vadd.f32 %v3268, %v3572
        %v3659 = vadd.f32 %v3269, %v3577
        %v3660 = vadd.f32 %v3270, %v3582
        %v3661 = vadd.f32 %v3271, %v3587
        %v3662 = vadd.f32 %v3272, %v3592
        %v3663 = vadd.f32 %v3273, %v3597
        %v3664 = vadd.f32 %v3274, %v3602
        %v3665 = vadd.f32 %v3275, %v3607
        %v3666 = vadd.f32 %v3276, %v3612
        %v3667 = vadd.f32 %v3277, %v3617
        %v3668 = vadd.f32 %v3278, %v3622
        %v3669 = vadd.f32 %v3279, %v3627
        %v3670 = vadd.f32 %v3280, %v3632
        %v3671 = vadd.f32 %v3281, %v3637
        %v3672 = vld [vmem:[%s2] sm:$0x1]
        %v3674 = vlaneseq
        %v3675 = vshrl.u32 %v3674, 7
        %v3676 = vsub.s32 0, %v3675
        %v3677 = vrot.slane %v3672, %v3676
        %v3679 = vadd.f32 %v3640, %v3677
        %v3680 = vadd.f32 %v3641, %v3677
        %v3681 = vadd.f32 %v3642, %v3677
        %v3682 = vadd.f32 %v3643, %v3677
        %v3683 = vadd.f32 %v3644, %v3677
        %v3684 = vadd.f32 %v3645, %v3677
        %v3685 = vadd.f32 %v3646, %v3677
        %v3686 = vadd.f32 %v3647, %v3677
        %v3687 = vadd.f32 %v3648, %v3677
        %v3688 = vadd.f32 %v3649, %v3677
        %v3689 = vadd.f32 %v3650, %v3677
        %v3690 = vadd.f32 %v3651, %v3677
        %v3691 = vadd.f32 %v3652, %v3677
        %v3692 = vadd.f32 %v3653, %v3677
        %v3693 = vadd.f32 %v3654, %v3677
        %v3694 = vadd.f32 %v3655, %v3677
        %v3695 = vadd.f32 %v3656, %v3677
        %v3696 = vadd.f32 %v3657, %v3677
        %v3697 = vadd.f32 %v3658, %v3677
        %v3698 = vadd.f32 %v3659, %v3677
        %v3699 = vadd.f32 %v3660, %v3677
        %v3700 = vadd.f32 %v3661, %v3677
        %v3701 = vadd.f32 %v3662, %v3677
        %v3702 = vadd.f32 %v3663, %v3677
        %v3703 = vadd.f32 %v3664, %v3677
        %v3704 = vadd.f32 %v3665, %v3677
        %v3705 = vadd.f32 %v3666, %v3677
        %v3706 = vadd.f32 %v3667, %v3677
        %v3707 = vadd.f32 %v3668, %v3677
        %v3708 = vadd.f32 %v3669, %v3677
        %v3709 = vadd.f32 %v3670, %v3677
        %v3710 = vadd.f32 %v3671, %v3677
        %v3711 = vlaneseq
        %v3712 = vand.u32 %v3711, 127
        %v3713 = vadd.f32 %v3679, %v3680
        %v3714 = vadd.f32 %v3713, %v3681
        %v3715 = vadd.f32 %v3714, %v3682
        %v3716 = vadd.f32 %v3715, %v3683
        %v3717 = vadd.f32 %v3716, %v3684
        %v3718 = vadd.f32 %v3717, %v3685
        %v3719 = vadd.f32 %v3718, %v3686
        %v3720 = vadd.f32 %v3719, %v3687
        %v3721 = vadd.f32 %v3720, %v3688
        %v3722 = vadd.f32 %v3721, %v3689
        %v3723 = vadd.f32 %v3722, %v3690
        %v3724 = vadd.f32 %v3723, %v3691
        %v3725 = vadd.f32 %v3724, %v3692
        %v3726 = vadd.f32 %v3725, %v3693
        %v3727 = vadd.f32 %v3726, %v3694
        %v3728 = vadd.f32 %v3727, %v3695
        %v3729 = vadd.f32 %v3728, %v3696
        %v3730 = vadd.f32 %v3729, %v3697
        %v3731 = vadd.f32 %v3730, %v3698
        %v3732 = vadd.f32 %v3731, %v3699
        %v3733 = vadd.f32 %v3732, %v3700
        %v3734 = vadd.f32 %v3733, %v3701
        %v3735 = vadd.f32 %v3734, %v3702
        %v3736 = vadd.f32 %v3735, %v3703
        %v3737 = vadd.f32 %v3736, %v3704
        %v3738 = vadd.f32 %v3737, %v3705
        %v3739 = vadd.f32 %v3738, %v3706
        %v3740 = vadd.f32 %v3739, %v3707
        %v3741 = vadd.f32 %v3740, %v3708
        %v3742 = vadd.f32 %v3741, %v3709
        %v3743 = vadd.f32 %v3742, %v3710
        %v3744 = vrot.slane %v3743, 4
        %v3745 = vadd.f32 %v3743, %v3744
        %v3746 = vrot.slane %v3745, 2
        %v3747 = vadd.f32 %v3745, %v3746
        %v3748 = vrot.slane %v3747, 1
        %v3749 = vadd.f32 %v3747, %v3748
        %vm3750 = vcmp.ge.s32.totalorder %v3712, 0
        %vm3751 = vcmp.lt.s32.totalorder %v3712, 2
        %vm3752 = vmand %vm3750, %vm3751
        %v3753 = vsel %vm3752, %v3749, 0.0
        %vm3754 = vcmask 1040384
        %v3755 = vsel %vm3754, %v3753, 0.0
        %3756 = vadd.xlane.f32.xlu0 %v3755
        %v3757 = vpop.xlane.xlu0 %3756
        %v3758 = vrot.slane %v3757, 4
        %v3759 = vadd.f32 %v3757, %v3758
        %v3760 = vrot.slane %v3759, 2
        %v3761 = vadd.f32 %v3759, %v3760
        %v3762 = vrot.slane %v3761, 1
        %v3763 = vadd.f32 %v3761, %v3762
        %s3764 = vtos %v3763
        %v3765 = vrcp.pop 512.0
        %s3766 = vtos %v3765
        %s3767 = smul.f32 %s3764, %s3766
        %v3768 = vstv %s3767
        %v3769 = vsel %vm3752, %v3768, 0.0
        %v3770 = vadd.f32 %v3769, 0.0
        %vm3771 = vcmp.ge.s32.totalorder %v3712, 2
        %vm3772 = vcmp.lt.s32.totalorder %v3712, 4
        %vm3773 = vmand %vm3771, %vm3772
        %v3774 = vsel %vm3773, %v3749, 0.0
        %v3775 = vsel %vm3754, %v3774, 0.0
        %3776 = vadd.xlane.f32.xlu0 %v3775
        %v3777 = vpop.xlane.xlu0 %3776
        %v3778 = vrot.slane %v3777, 4
        %v3779 = vadd.f32 %v3777, %v3778
        %v3780 = vrot.slane %v3779, 2
        %v3781 = vadd.f32 %v3779, %v3780
        %v3782 = vrot.slane %v3781, 1
        %v3783 = vadd.f32 %v3781, %v3782
        %s3784 = vtos %v3783
        %v3785 = vrcp.pop 512.0
        %s3786 = vtos %v3785
        %s3787 = smul.f32 %s3784, %s3786
        %v3788 = vstv %s3787
        %v3789 = vsel %vm3773, %v3788, 0.0
        %v3790 = vadd.f32 %v3770, %v3789
        %vm3791 = vcmp.ge.s32.totalorder %v3712, 4
        %vm3792 = vcmp.lt.s32.totalorder %v3712, 6
        %vm3793 = vmand %vm3791, %vm3792
        %v3794 = vsel %vm3793, %v3749, 0.0
        %v3795 = vsel %vm3754, %v3794, 0.0
        %3796 = vadd.xlane.f32.xlu0 %v3795
        %v3797 = vpop.xlane.xlu0 %3796
        %v3798 = vrot.slane %v3797, 4
        %v3799 = vadd.f32 %v3797, %v3798
        %v3800 = vrot.slane %v3799, 2
        %v3801 = vadd.f32 %v3799, %v3800
        %v3802 = vrot.slane %v3801, 1
        %v3803 = vadd.f32 %v3801, %v3802
        %s3804 = vtos %v3803
        %v3805 = vrcp.pop 512.0
        %s3806 = vtos %v3805
        %s3807 = smul.f32 %s3804, %s3806
        %v3808 = vstv %s3807
        %v3809 = vsel %vm3793, %v3808, 0.0
        %v3810 = vadd.f32 %v3790, %v3809
        %vm3811 = vcmp.ge.s32.totalorder %v3712, 6
        %vm3812 = vcmp.lt.s32.totalorder %v3712, 8
        %vm3813 = vmand %vm3811, %vm3812
        %v3814 = vsel %vm3813, %v3749, 0.0
        %v3815 = vsel %vm3754, %v3814, 0.0
        %3816 = vadd.xlane.f32.xlu0 %v3815
        %v3817 = vpop.xlane.xlu0 %3816
        %v3818 = vrot.slane %v3817, 4
        %v3819 = vadd.f32 %v3817, %v3818
        %v3820 = vrot.slane %v3819, 2
        %v3821 = vadd.f32 %v3819, %v3820
        %v3822 = vrot.slane %v3821, 1
        %v3823 = vadd.f32 %v3821, %v3822
        %s3824 = vtos %v3823
        %v3825 = vrcp.pop 512.0
        %s3826 = vtos %v3825
        %s3827 = smul.f32 %s3824, %s3826
        %v3828 = vstv %s3827
        %v3829 = vsel %vm3813, %v3828, 0.0
        %v3830 = vadd.f32 %v3810, %v3829
        %v3831 = vsub.f32 %v3679, %v3830
        %v3832 = vsub.f32 %v3680, %v3830
        %v3833 = vsub.f32 %v3681, %v3830
        %v3834 = vsub.f32 %v3682, %v3830
        %v3835 = vsub.f32 %v3683, %v3830
        %v3836 = vsub.f32 %v3684, %v3830
        %v3837 = vsub.f32 %v3685, %v3830
        %v3838 = vsub.f32 %v3686, %v3830
        %v3839 = vsub.f32 %v3687, %v3830
        %v3840 = vsub.f32 %v3688, %v3830
        %v3841 = vsub.f32 %v3689, %v3830
        %v3842 = vsub.f32 %v3690, %v3830
        %v3843 = vsub.f32 %v3691, %v3830
        %v3844 = vsub.f32 %v3692, %v3830
        %v3845 = vsub.f32 %v3693, %v3830
        %v3846 = vsub.f32 %v3694, %v3830
        %v3847 = vsub.f32 %v3695, %v3830
        %v3848 = vsub.f32 %v3696, %v3830
        %v3849 = vsub.f32 %v3697, %v3830
        %v3850 = vsub.f32 %v3698, %v3830
        %v3851 = vsub.f32 %v3699, %v3830
        %v3852 = vsub.f32 %v3700, %v3830
        %v3853 = vsub.f32 %v3701, %v3830
        %v3854 = vsub.f32 %v3702, %v3830
        %v3855 = vsub.f32 %v3703, %v3830
        %v3856 = vsub.f32 %v3704, %v3830
        %v3857 = vsub.f32 %v3705, %v3830
        %v3858 = vsub.f32 %v3706, %v3830
        %v3859 = vsub.f32 %v3707, %v3830
        %v3860 = vsub.f32 %v3708, %v3830
        %v3861 = vsub.f32 %v3709, %v3830
        %v3862 = vsub.f32 %v3710, %v3830
        %v3863 = vmul.f32 %v3831, %v3831
        %v3864 = vmul.f32 %v3832, %v3832
        %v3865 = vmul.f32 %v3833, %v3833
        %v3866 = vmul.f32 %v3834, %v3834
        %v3867 = vmul.f32 %v3835, %v3835
        %v3868 = vmul.f32 %v3836, %v3836
        %v3869 = vmul.f32 %v3837, %v3837
        %v3870 = vmul.f32 %v3838, %v3838
        %v3871 = vmul.f32 %v3839, %v3839
        %v3872 = vmul.f32 %v3840, %v3840
        %v3873 = vmul.f32 %v3841, %v3841
        %v3874 = vmul.f32 %v3842, %v3842
        %v3875 = vmul.f32 %v3843, %v3843
        %v3876 = vmul.f32 %v3844, %v3844
        %v3877 = vmul.f32 %v3845, %v3845
        %v3878 = vmul.f32 %v3846, %v3846
        %v3879 = vmul.f32 %v3847, %v3847
        %v3880 = vmul.f32 %v3848, %v3848
        %v3881 = vmul.f32 %v3849, %v3849
        %v3882 = vmul.f32 %v3850, %v3850
        %v3883 = vmul.f32 %v3851, %v3851
        %v3884 = vmul.f32 %v3852, %v3852
        %v3885 = vmul.f32 %v3853, %v3853
        %v3886 = vmul.f32 %v3854, %v3854
        %v3887 = vmul.f32 %v3855, %v3855
        %v3888 = vmul.f32 %v3856, %v3856
        %v3889 = vmul.f32 %v3857, %v3857
        %v3890 = vmul.f32 %v3858, %v3858
        %v3891 = vmul.f32 %v3859, %v3859
        %v3892 = vmul.f32 %v3860, %v3860
        %v3893 = vmul.f32 %v3861, %v3861
        %v3894 = vmul.f32 %v3862, %v3862
        %v3895 = vadd.f32 %v3863, %v3864
        %v3896 = vadd.f32 %v3895, %v3865
        %v3897 = vadd.f32 %v3896, %v3866
        %v3898 = vadd.f32 %v3897, %v3867
        %v3899 = vadd.f32 %v3898, %v3868
        %v3900 = vadd.f32 %v3899, %v3869
        %v3901 = vadd.f32 %v3900, %v3870
        %v3902 = vadd.f32 %v3901, %v3871
        %v3903 = vadd.f32 %v3902, %v3872
        %v3904 = vadd.f32 %v3903, %v3873
        %v3905 = vadd.f32 %v3904, %v3874
        %v3906 = vadd.f32 %v3905, %v3875
        %v3907 = vadd.f32 %v3906, %v3876
        %v3908 = vadd.f32 %v3907, %v3877
        %v3909 = vadd.f32 %v3908, %v3878
        %v3910 = vadd.f32 %v3909, %v3879
        %v3911 = vadd.f32 %v3910, %v3880
        %v3912 = vadd.f32 %v3911, %v3881
        %v3913 = vadd.f32 %v3912, %v3882
        %v3914 = vadd.f32 %v3913, %v3883
        %v3915 = vadd.f32 %v3914, %v3884
        %v3916 = vadd.f32 %v3915, %v3885
        %v3917 = vadd.f32 %v3916, %v3886
        %v3918 = vadd.f32 %v3917, %v3887
        %v3919 = vadd.f32 %v3918, %v3888
        %v3920 = vadd.f32 %v3919, %v3889
        %v3921 = vadd.f32 %v3920, %v3890
        %v3922 = vadd.f32 %v3921, %v3891
        %v3923 = vadd.f32 %v3922, %v3892
        %v3924 = vadd.f32 %v3923, %v3893
        %v3925 = vadd.f32 %v3924, %v3894
        %v3926 = vrot.slane %v3925, 4
        %v3927 = vadd.f32 %v3925, %v3926
        %v3928 = vrot.slane %v3927, 2
        %v3929 = vadd.f32 %v3927, %v3928
        %v3930 = vrot.slane %v3929, 1
        %v3931 = vadd.f32 %v3929, %v3930
        %v3932 = vsel %vm3752, %v3931, 0.0
        %v3933 = vsel %vm3754, %v3932, 0.0
        %3934 = vadd.xlane.f32.xlu0 %v3933
        %v3935 = vpop.xlane.xlu0 %3934
        %v3936 = vrot.slane %v3935, 4
        %v3937 = vadd.f32 %v3935, %v3936
        %v3938 = vrot.slane %v3937, 2
        %v3939 = vadd.f32 %v3937, %v3938
        %v3940 = vrot.slane %v3939, 1
        %v3941 = vadd.f32 %v3939, %v3940
        %s3942 = vtos %v3941
        %v3943 = vrcp.pop 512.0
        %s3944 = vtos %v3943
        %s3945 = smul.f32 %s3942, %s3944
        %v3946 = vstv %s3945
        %v3947 = vsel %vm3752, %v3946, 0.0
        %v3948 = vadd.f32 %v3947, 0.0
        %v3949 = vsel %vm3773, %v3931, 0.0
        %v3950 = vsel %vm3754, %v3949, 0.0
        %3951 = vadd.xlane.f32.xlu0 %v3950
        %v3952 = vpop.xlane.xlu0 %3951
        %v3953 = vrot.slane %v3952, 4
        %v3954 = vadd.f32 %v3952, %v3953
        %v3955 = vrot.slane %v3954, 2
        %v3956 = vadd.f32 %v3954, %v3955
        %v3957 = vrot.slane %v3956, 1
        %v3958 = vadd.f32 %v3956, %v3957
        %s3959 = vtos %v3958
        %v3960 = vrcp.pop 512.0
        %s3961 = vtos %v3960
        %s3962 = smul.f32 %s3959, %s3961
        %v3963 = vstv %s3962
        %v3964 = vsel %vm3773, %v3963, 0.0
        %v3965 = vadd.f32 %v3948, %v3964
        %v3966 = vsel %vm3793, %v3931, 0.0
        %v3967 = vsel %vm3754, %v3966, 0.0
        %3968 = vadd.xlane.f32.xlu0 %v3967
        %v3969 = vpop.xlane.xlu0 %3968
        %v3970 = vrot.slane %v3969, 4
        %v3971 = vadd.f32 %v3969, %v3970
        %v3972 = vrot.slane %v3971, 2
        %v3973 = vadd.f32 %v3971, %v3972
        %v3974 = vrot.slane %v3973, 1
        %v3975 = vadd.f32 %v3973, %v3974
        %s3976 = vtos %v3975
        %v3977 = vrcp.pop 512.0
        %s3978 = vtos %v3977
        %s3979 = smul.f32 %s3976, %s3978
        %v3980 = vstv %s3979
        %v3981 = vsel %vm3793, %v3980, 0.0
        %v3982 = vadd.f32 %v3965, %v3981
        %v3983 = vsel %vm3813, %v3931, 0.0
        %v3984 = vsel %vm3754, %v3983, 0.0
        %3985 = vadd.xlane.f32.xlu0 %v3984
        %v3986 = vpop.xlane.xlu0 %3985
        %v3987 = vrot.slane %v3986, 4
        %v3988 = vadd.f32 %v3986, %v3987
        %v3989 = vrot.slane %v3988, 2
        %v3990 = vadd.f32 %v3988, %v3989
        %v3991 = vrot.slane %v3990, 1
        %v3992 = vadd.f32 %v3990, %v3991
        %s3993 = vtos %v3992
        %v3994 = vrcp.pop 512.0
        %s3995 = vtos %v3994
        %s3996 = smul.f32 %s3993, %s3995
        %v3997 = vstv %s3996
        %v3998 = vsel %vm3813, %v3997, 0.0
        %v3999 = vadd.f32 %v3982, %v3998
        %v4000 = vadd.f32 %v3999, 1e-05
        %v4001 = vrsqrt.pop %v4000
        %v4002 = vld [vmem:[%s3] sm:$0x1]
        %v4003 = vmul.f32 %v4001, %v4002
        %v4004 = vld [vmem:[%s4] sm:$0x1]
        %v4005 = vlaneseq
        %v4006 = vshrl.u32 %v4005, 7
        %v4007 = vsub.s32 0, %v4006
        %v4008 = vrot.slane %v4003, %v4007
        %v4009 = vmul.f32 %v3831, %v4008
        %v4010 = vmul.f32 %v3832, %v4008
        %v4011 = vmul.f32 %v3833, %v4008
        %v4012 = vmul.f32 %v3834, %v4008
        %v4013 = vmul.f32 %v3835, %v4008
        %v4014 = vmul.f32 %v3836, %v4008
        %v4015 = vmul.f32 %v3837, %v4008
        %v4016 = vmul.f32 %v3838, %v4008
        %v4017 = vmul.f32 %v3839, %v4008
        %v4018 = vmul.f32 %v3840, %v4008
        %v4019 = vmul.f32 %v3841, %v4008
        %v4020 = vmul.f32 %v3842, %v4008
        %v4021 = vmul.f32 %v3843, %v4008
        %v4022 = vmul.f32 %v3844, %v4008
        %v4023 = vmul.f32 %v3845, %v4008
        %v4024 = vmul.f32 %v3846, %v4008
        %v4025 = vmul.f32 %v3847, %v4008
        %v4026 = vmul.f32 %v3848, %v4008
        %v4027 = vmul.f32 %v3849, %v4008
        %v4028 = vmul.f32 %v3850, %v4008
        %v4029 = vmul.f32 %v3851, %v4008
        %v4030 = vmul.f32 %v3852, %v4008
        %v4031 = vmul.f32 %v3853, %v4008
        %v4032 = vmul.f32 %v3854, %v4008
        %v4033 = vmul.f32 %v3855, %v4008
        %v4034 = vmul.f32 %v3856, %v4008
        %v4035 = vmul.f32 %v3857, %v4008
        %v4036 = vmul.f32 %v3858, %v4008
        %v4037 = vmul.f32 %v3859, %v4008
        %v4038 = vmul.f32 %v3860, %v4008
        %v4039 = vmul.f32 %v3861, %v4008
        %v4040 = vmul.f32 %v3862, %v4008
        %v4042 = vlaneseq
        %v4043 = vshrl.u32 %v4042, 7
        %v4044 = vsub.s32 0, %v4043
        %v4045 = vrot.slane %v4004, %v4044
        %v4047 = vadd.f32 %v4009, %v4045
        %v4048 = vadd.f32 %v4010, %v4045
        %v4049 = vadd.f32 %v4011, %v4045
        %v4050 = vadd.f32 %v4012, %v4045
        %v4051 = vadd.f32 %v4013, %v4045
        %v4052 = vadd.f32 %v4014, %v4045
        %v4053 = vadd.f32 %v4015, %v4045
        %v4054 = vadd.f32 %v4016, %v4045
        %v4055 = vadd.f32 %v4017, %v4045
        %v4056 = vadd.f32 %v4018, %v4045
        %v4057 = vadd.f32 %v4019, %v4045
        %v4058 = vadd.f32 %v4020, %v4045
        %v4059 = vadd.f32 %v4021, %v4045
        %v4060 = vadd.f32 %v4022, %v4045
        %v4061 = vadd.f32 %v4023, %v4045
        %v4062 = vadd.f32 %v4024, %v4045
        %v4063 = vadd.f32 %v4025, %v4045
        %v4064 = vadd.f32 %v4026, %v4045
        %v4065 = vadd.f32 %v4027, %v4045
        %v4066 = vadd.f32 %v4028, %v4045
        %v4067 = vadd.f32 %v4029, %v4045
        %v4068 = vadd.f32 %v4030, %v4045
        %v4069 = vadd.f32 %v4031, %v4045
        %v4070 = vadd.f32 %v4032, %v4045
        %v4071 = vadd.f32 %v4033, %v4045
        %v4072 = vadd.f32 %v4034, %v4045
        %v4073 = vadd.f32 %v4035, %v4045
        %v4074 = vadd.f32 %v4036, %v4045
        %v4075 = vadd.f32 %v4037, %v4045
        %v4076 = vadd.f32 %v4038, %v4045
        %v4077 = vadd.f32 %v4039, %v4045
        %v4078 = vadd.f32 %v4040, %v4045
        %v4079 = vxor.u32 %v4047, 2147483648
        %v4080 = vxor.u32 %v4048, 2147483648
        %v4081 = vxor.u32 %v4049, 2147483648
        %v4082 = vxor.u32 %v4050, 2147483648
        %v4083 = vxor.u32 %v4051, 2147483648
        %v4084 = vxor.u32 %v4052, 2147483648
        %v4085 = vxor.u32 %v4053, 2147483648
        %v4086 = vxor.u32 %v4054, 2147483648
        %v4087 = vxor.u32 %v4055, 2147483648
        %v4088 = vxor.u32 %v4056, 2147483648
        %v4089 = vxor.u32 %v4057, 2147483648
        %v4090 = vxor.u32 %v4058, 2147483648
        %v4091 = vxor.u32 %v4059, 2147483648
        %v4092 = vxor.u32 %v4060, 2147483648
        %v4093 = vxor.u32 %v4061, 2147483648
        %v4094 = vxor.u32 %v4062, 2147483648
        %v4095 = vxor.u32 %v4063, 2147483648
        %v4096 = vxor.u32 %v4064, 2147483648
        %v4097 = vxor.u32 %v4065, 2147483648
        %v4098 = vxor.u32 %v4066, 2147483648
        %v4099 = vxor.u32 %v4067, 2147483648
        %v4100 = vxor.u32 %v4068, 2147483648
        %v4101 = vxor.u32 %v4069, 2147483648
        %v4102 = vxor.u32 %v4070, 2147483648
        %v4103 = vxor.u32 %v4071, 2147483648
        %v4104 = vxor.u32 %v4072, 2147483648
        %v4105 = vxor.u32 %v4073, 2147483648
        %v4106 = vxor.u32 %v4074, 2147483648
        %v4107 = vxor.u32 %v4075, 2147483648
        %v4108 = vxor.u32 %v4076, 2147483648
        %v4109 = vxor.u32 %v4077, 2147483648
        %v4110 = vxor.u32 %v4078, 2147483648
        %v4111 = vmul.f32 %v4079, 1.442695
        %v4112 = vpow.pop %v4111
        %v4113 = vmul.f32 %v4080, 1.442695
        %v4114 = vpow.pop %v4113
        %v4115 = vmul.f32 %v4081, 1.442695
        %v4116 = vpow.pop %v4115
        %v4117 = vmul.f32 %v4082, 1.442695
        %v4118 = vpow.pop %v4117
        %v4119 = vmul.f32 %v4083, 1.442695
        %v4120 = vpow.pop %v4119
        %v4121 = vmul.f32 %v4084, 1.442695
        %v4122 = vpow.pop %v4121
        %v4123 = vmul.f32 %v4085, 1.442695
        %v4124 = vpow.pop %v4123
        %v4125 = vmul.f32 %v4086, 1.442695
        %v4126 = vpow.pop %v4125
        %v4127 = vmul.f32 %v4087, 1.442695
        %v4128 = vpow.pop %v4127
        %v4129 = vmul.f32 %v4088, 1.442695
        %v4130 = vpow.pop %v4129
        %v4131 = vmul.f32 %v4089, 1.442695
        %v4132 = vpow.pop %v4131
        %v4133 = vmul.f32 %v4090, 1.442695
        %v4134 = vpow.pop %v4133
        %v4135 = vmul.f32 %v4091, 1.442695
        %v4136 = vpow.pop %v4135
        %v4137 = vmul.f32 %v4092, 1.442695
        %v4138 = vpow.pop %v4137
        %v4139 = vmul.f32 %v4093, 1.442695
        %v4140 = vpow.pop %v4139
        %v4141 = vmul.f32 %v4094, 1.442695
        %v4142 = vpow.pop %v4141
        %v4143 = vmul.f32 %v4095, 1.442695
        %v4144 = vpow.pop %v4143
        %v4145 = vmul.f32 %v4096, 1.442695
        %v4146 = vpow.pop %v4145
        %v4147 = vmul.f32 %v4097, 1.442695
        %v4148 = vpow.pop %v4147
        %v4149 = vmul.f32 %v4098, 1.442695
        %v4150 = vpow.pop %v4149
        %v4151 = vmul.f32 %v4099, 1.442695
        %v4152 = vpow.pop %v4151
        %v4153 = vmul.f32 %v4100, 1.442695
        %v4154 = vpow.pop %v4153
        %v4155 = vmul.f32 %v4101, 1.442695
        %v4156 = vpow.pop %v4155
        %v4157 = vmul.f32 %v4102, 1.442695
        %v4158 = vpow.pop %v4157
        %v4159 = vmul.f32 %v4103, 1.442695
        %v4160 = vpow.pop %v4159
        %v4161 = vmul.f32 %v4104, 1.442695
        %v4162 = vpow.pop %v4161
        %v4163 = vmul.f32 %v4105, 1.442695
        %v4164 = vpow.pop %v4163
        %v4165 = vmul.f32 %v4106, 1.442695
        %v4166 = vpow.pop %v4165
        %v4167 = vmul.f32 %v4107, 1.442695
        %v4168 = vpow.pop %v4167
        %v4169 = vmul.f32 %v4108, 1.442695
        %v4170 = vpow.pop %v4169
        %v4171 = vmul.f32 %v4109, 1.442695
        %v4172 = vpow.pop %v4171
        %v4173 = vmul.f32 %v4110, 1.442695
        %v4174 = vpow.pop %v4173
        %v4175 = vadd.f32 %v4112, 1.0
        %v4176 = vadd.f32 %v4114, 1.0
        %v4177 = vadd.f32 %v4116, 1.0
        %v4178 = vadd.f32 %v4118, 1.0
        %v4179 = vadd.f32 %v4120, 1.0
        %v4180 = vadd.f32 %v4122, 1.0
        %v4181 = vadd.f32 %v4124, 1.0
        %v4182 = vadd.f32 %v4126, 1.0
        %v4183 = vadd.f32 %v4128, 1.0
        %v4184 = vadd.f32 %v4130, 1.0
        %v4185 = vadd.f32 %v4132, 1.0
        %v4186 = vadd.f32 %v4134, 1.0
        %v4187 = vadd.f32 %v4136, 1.0
        %v4188 = vadd.f32 %v4138, 1.0
        %v4189 = vadd.f32 %v4140, 1.0
        %v4190 = vadd.f32 %v4142, 1.0
        %v4191 = vadd.f32 %v4144, 1.0
        %v4192 = vadd.f32 %v4146, 1.0
        %v4193 = vadd.f32 %v4148, 1.0
        %v4194 = vadd.f32 %v4150, 1.0
        %v4195 = vadd.f32 %v4152, 1.0
        %v4196 = vadd.f32 %v4154, 1.0
        %v4197 = vadd.f32 %v4156, 1.0
        %v4198 = vadd.f32 %v4158, 1.0
        %v4199 = vadd.f32 %v4160, 1.0
        %v4200 = vadd.f32 %v4162, 1.0
        %v4201 = vadd.f32 %v4164, 1.0
        %v4202 = vadd.f32 %v4166, 1.0
        %v4203 = vadd.f32 %v4168, 1.0
        %v4204 = vadd.f32 %v4170, 1.0
        %v4205 = vadd.f32 %v4172, 1.0
        %v4206 = vadd.f32 %v4174, 1.0
        %v4207 = vrcp.pop %v4175
        %v4208 = vmul.f32 1.0, %v4207
        %v4209 = vrcp.pop %v4176
        %v4210 = vmul.f32 1.0, %v4209
        %v4211 = vrcp.pop %v4177
        %v4212 = vmul.f32 1.0, %v4211
        %v4213 = vrcp.pop %v4178
        %v4214 = vmul.f32 1.0, %v4213
        %v4215 = vrcp.pop %v4179
        %v4216 = vmul.f32 1.0, %v4215
        %v4217 = vrcp.pop %v4180
        %v4218 = vmul.f32 1.0, %v4217
        %v4219 = vrcp.pop %v4181
        %v4220 = vmul.f32 1.0, %v4219
        %v4221 = vrcp.pop %v4182
        %v4222 = vmul.f32 1.0, %v4221
        %v4223 = vrcp.pop %v4183
        %v4224 = vmul.f32 1.0, %v4223
        %v4225 = vrcp.pop %v4184
        %v4226 = vmul.f32 1.0, %v4225
        %v4227 = vrcp.pop %v4185
        %v4228 = vmul.f32 1.0, %v4227
        %v4229 = vrcp.pop %v4186
        %v4230 = vmul.f32 1.0, %v4229
        %v4231 = vrcp.pop %v4187
        %v4232 = vmul.f32 1.0, %v4231
        %v4233 = vrcp.pop %v4188
        %v4234 = vmul.f32 1.0, %v4233
        %v4235 = vrcp.pop %v4189
        %v4236 = vmul.f32 1.0, %v4235
        %v4237 = vrcp.pop %v4190
        %v4238 = vmul.f32 1.0, %v4237
        %v4239 = vrcp.pop %v4191
        %v4240 = vmul.f32 1.0, %v4239
        %v4241 = vrcp.pop %v4192
        %v4242 = vmul.f32 1.0, %v4241
        %v4243 = vrcp.pop %v4193
        %v4244 = vmul.f32 1.0, %v4243
        %v4245 = vrcp.pop %v4194
        %v4246 = vmul.f32 1.0, %v4245
        %v4247 = vrcp.pop %v4195
        %v4248 = vmul.f32 1.0, %v4247
        %v4249 = vrcp.pop %v4196
        %v4250 = vmul.f32 1.0, %v4249
        %v4251 = vrcp.pop %v4197
        %v4252 = vmul.f32 1.0, %v4251
        %v4253 = vrcp.pop %v4198
        %v4254 = vmul.f32 1.0, %v4253
        %v4255 = vrcp.pop %v4199
        %v4256 = vmul.f32 1.0, %v4255
        %v4257 = vrcp.pop %v4200
        %v4258 = vmul.f32 1.0, %v4257
        %v4259 = vrcp.pop %v4201
        %v4260 = vmul.f32 1.0, %v4259
        %v4261 = vrcp.pop %v4202
        %v4262 = vmul.f32 1.0, %v4261
        %v4263 = vrcp.pop %v4203
        %v4264 = vmul.f32 1.0, %v4263
        %v4265 = vrcp.pop %v4204
        %v4266 = vmul.f32 1.0, %v4265
        %v4267 = vrcp.pop %v4205
        %v4268 = vmul.f32 1.0, %v4267
        %v4269 = vrcp.pop %v4206
        %v4270 = vmul.f32 1.0, %v4269
        %v4271 = vmul.f32 %v4047, %v4208
        %v4272 = vmul.f32 %v4048, %v4210
        %v4273 = vmul.f32 %v4049, %v4212
        %v4274 = vmul.f32 %v4050, %v4214
        %v4275 = vmul.f32 %v4051, %v4216
        %v4276 = vmul.f32 %v4052, %v4218
        %v4277 = vmul.f32 %v4053, %v4220
        %v4278 = vmul.f32 %v4054, %v4222
        %v4279 = vmul.f32 %v4055, %v4224
        %v4280 = vmul.f32 %v4056, %v4226
        %v4281 = vmul.f32 %v4057, %v4228
        %v4282 = vmul.f32 %v4058, %v4230
        %v4283 = vmul.f32 %v4059, %v4232
        %v4284 = vmul.f32 %v4060, %v4234
        %v4285 = vmul.f32 %v4061, %v4236
        %v4286 = vmul.f32 %v4062, %v4238
        %v4287 = vmul.f32 %v4063, %v4240
        %v4288 = vmul.f32 %v4064, %v4242
        %v4289 = vmul.f32 %v4065, %v4244
        %v4290 = vmul.f32 %v4066, %v4246
        %v4291 = vmul.f32 %v4067, %v4248
        %v4292 = vmul.f32 %v4068, %v4250
        %v4293 = vmul.f32 %v4069, %v4252
        %v4294 = vmul.f32 %v4070, %v4254
        %v4295 = vmul.f32 %v4071, %v4256
        %v4296 = vmul.f32 %v4072, %v4258
        %v4297 = vmul.f32 %v4073, %v4260
        %v4298 = vmul.f32 %v4074, %v4262
        %v4299 = vmul.f32 %v4075, %v4264
        %v4300 = vmul.f32 %v4076, %v4266
        %v4301 = vmul.f32 %v4077, %v4268
        %v4302 = vmul.f32 %v4078, %v4270
        %4303 = vst [vmem:[%s217] sm:$0xff] %v4271
        %4304 = vst [vmem:[%s217 + $0x8] sm:$0xff] %v4272
        %4305 = vst [vmem:[%s217 + $0x10] sm:$0xff] %v4273
        %4306 = vst [vmem:[%s217 + $0x18] sm:$0xff] %v4274
        %4307 = vst [vmem:[%s217 + $0x20] sm:$0xff] %v4275
        %4308 = vst [vmem:[%s217 + $0x28] sm:$0xff] %v4276
        %4309 = vst [vmem:[%s217 + $0x30] sm:$0xff] %v4277
        %4310 = vst [vmem:[%s217 + $0x38] sm:$0xff] %v4278
        %4311 = vst [vmem:[%s217 + $0x40] sm:$0xff] %v4279
        %4312 = vst [vmem:[%s217 + $0x48] sm:$0xff] %v4280
        %4313 = vst [vmem:[%s217 + $0x50] sm:$0xff] %v4281
        %4314 = vst [vmem:[%s217 + $0x58] sm:$0xff] %v4282
        %4315 = vst [vmem:[%s217 + $0x60] sm:$0xff] %v4283
        %4316 = vst [vmem:[%s217 + $0x68] sm:$0xff] %v4284
        %4317 = vst [vmem:[%s217 + $0x70] sm:$0xff] %v4285
        %4318 = vst [vmem:[%s217 + $0x78] sm:$0xff] %v4286
        %4319 = vst [vmem:[%s217 + $0x80] sm:$0xff] %v4287
        %4320 = vst [vmem:[%s217 + $0x88] sm:$0xff] %v4288
        %4321 = vst [vmem:[%s217 + $0x90] sm:$0xff] %v4289
        %4322 = vst [vmem:[%s217 + $0x98] sm:$0xff] %v4290
        %4323 = vst [vmem:[%s217 + $0xa0] sm:$0xff] %v4291
        %4324 = vst [vmem:[%s217 + $0xa8] sm:$0xff] %v4292
        %4325 = vst [vmem:[%s217 + $0xb0] sm:$0xff] %v4293
        %4326 = vst [vmem:[%s217 + $0xb8] sm:$0xff] %v4294
        %4327 = vst [vmem:[%s217 + $0xc0] sm:$0xff] %v4295
        %4328 = vst [vmem:[%s217 + $0xc8] sm:$0xff] %v4296
        %4329 = vst [vmem:[%s217 + $0xd0] sm:$0xff] %v4297
        %4330 = vst [vmem:[%s217 + $0xd8] sm:$0xff] %v4298
        %4331 = vst [vmem:[%s217 + $0xe0] sm:$0xff] %v4299
        %4332 = vst [vmem:[%s217 + $0xe8] sm:$0xff] %v4300
        %4333 = vst [vmem:[%s217 + $0xf0] sm:$0xff] %v4301
        %4334 = vst [vmem:[%s217 + $0xf8] sm:$0xff] %v4302
        %s4335 = sand.u32 %s137, 1
        %s4336 = scalar_lea.sflag [#allocation3], %s4335
        %s4337 = sand.u32 %s137, 1
        %s4338 = smul.addr %s4337, 256
        %s4339 = scalar_lea.vmem [#allocation2], %s4338
        // Predicated region
        $region41: #{tpu_custom_call.1} parent=39 // pred_check
          %p4340 = pneg %p147
        $region42: #{tpu_custom_call.1} parent=39 // pred_check_branch
          %4342 = sbr.rel (%p4340) target = $region44
        $region43: #{tpu_custom_call.1} parent=39 // pred_region
          %s4344 = ssub.s32 4096, 4096
          %4345 = vsyncadd %s4336, %s4344
          %s4346 = smul.addr %s19, 32
          %s4347 = smul.addr %s4346, 128
          %s4348 = scalar_lea.hbm %s5, %s4347
          %s4349 = sshll.u32 %s4339, 4
          %s4350 = int_to_ptr.vmem [resolvable:$true] %s4349
          %4355 = dma.vmem_to_hbm [thread:$0]  %s4350, 4096, %s4348, %s4336, 128, 128, 8
        $region44: #{tpu_custom_call.1} parent=39 // pred_fallthru
          _
      $region40: #{tpu_custom_call.1} parent=5 // pred_fallthru
        _
      %p4356 = scmp.le.s32.totalorder 2, %s14
      // Predicated region
      $region45: #{tpu_custom_call.1} parent=5 // pred_check
        %p4357 = pneg %p4356
      $region46: #{tpu_custom_call.1} parent=5 // pred_check_branch
        %4359 = sbr.rel (%p4357) target = $region48
      $region47: #{tpu_custom_call.1} parent=5 // pred_region
        %s4360 = ssub.s32 %s14, 2
        // Predicated region
        $region49: #{tpu_custom_call.1} parent=47 // pred_check
          %p4361 = pneg %p153
        $region50: #{tpu_custom_call.1} parent=47 // pred_check_branch
          %4363 = sbr.rel (%p4361) target = $region52
        $region51: #{tpu_custom_call.1} parent=47 // pred_region
          %s4364 = sand.u32 %s138, 1
          %s4365 = scalar_lea.sflag [#allocation3], %s4364
          %s4366 = sand.u32 %s138, 1
          %s4367 = smul.addr %s4366, 256
          %s4368 = scalar_lea.vmem [#allocation2], %s4367
          %4369 = dma.done %s4365, 4096
        $region52: #{tpu_custom_call.1} parent=47 // pred_fallthru
          _
      $region48: #{tpu_custom_call.1} parent=5 // pred_fallthru
        _
    $region6: #{tpu_custom_call.1} parent=1 // loop_footer
      %s18 = sadd.s32 1, %s14
    $region7: #{tpu_custom_call.1} parent=1 // loop_footer_branch
      %13 = sbr.rel target = $region3
    $region8: #{tpu_custom_call.1} parent=1 // loop_exit
      _
    %4370 = vsyncpa [#allocation3], 1
    %s4371 = scalar_lea.sflag [#allocation3], 1
    %4372 = vsyncpa %s4371, 1

</llo_original>
